<compile_context>
chip_gen: v7x
topology: tpu7x:2x2x1
jax: 0.10.0
libtpu: 0.0.40
codegen_flags: <defaults>
</compile_context>

<pallas_src>
import jax
import jax.numpy as jnp
from jax import lax
from jax.experimental import pallas as pl
from jax.experimental.pallas import tpu as pltpu

f32 = jnp.float32

# MXU operand dtype: bf16 is native on v6e/v7x (f32 accumulation everywhere).
# TODO(synk): set to jnp.float32 on v5e (f32-only VPU, smaller MXU gain).
MXU_DTYPE = jnp.bfloat16

# ---------------- small config (consistent with module defaults) -------------
B = 2            # batch
N = 16           # sequence length
DIM = 32         # model dim
HEADS = 4
FF_MULT = 4
GROUP = 2        # grouped_attn_size
DIM_SIZE = DIM * GROUP           # attention dim (pre_scale=False)
DIM_HEAD = DIM // HEADS          # constant_dim=True
NUM_MEM = 16                     # num_mem_tokens
CONV_EXP = 1                     # conv_expansion_factor
INNER = DIM * CONV_EXP
KSIZE = 31                       # conv_kernel_size
PAD_L = KSIZE // 2
PAD_R = KSIZE // 2 - (KSIZE + 1) % 2
LN_EPS = 1e-5
BN_EPS = 1e-5
NEG_INF = -1e30

# rows of the packed (NUM_VEC_ROWS, 128) vector slab
(V_F1_LNG, V_F1_LNB, V_F1_B1, V_F1_B2,
 V_AT_LNG, V_AT_LNB, V_AT_BO,
 V_CV_LNG, V_CV_LNB, V_CV_BPW, V_CV_DWB, V_CV_BNG, V_CV_BNB, V_CV_B2,
 V_F2_LNG, V_F2_LNB, V_F2_B1, V_F2_B2,
 V_PO_LNG, V_PO_LNB, V_WPRE0) = range(21)
NUM_VEC_ROWS = V_WPRE0 + HEADS


def _layernorm(x, g, b):
    mu = jnp.mean(x, axis=-1, keepdims=True)
    var = jnp.mean((x - mu) ** 2, axis=-1, keepdims=True)
    return (x - mu) * lax.rsqrt(var + LN_EPS) * g + b


# --------------------------- fused full-block kernel --------------------------
def _make_kernel(bsz, seq, w32_offs, w128_offs, kv_offs):
    ng = seq // GROUP
    bng = bsz * ng
    dim = DIM
    gdim = GROUP * DIM
    ffdim = DIM * FF_MULT
    inner = INNER
    hde = HEADS * DIM_HEAD
    dh = DIM_HEAD
    cdt = MXU_DTYPE
    o_f1w1, o_f2w1, o_cpw, o_cw2, o_wo = w32_offs
    o_f1w2, o_f2w2 = w128_offs
    o_memk, o_memv = kv_offs

    def kernel(xg_ref, bias_ref, vecs_ref, w32_ref, w128_ref, wqkv_ref,
               kvmem_ref, dww_ref, post_ref, o_ref):
        vecs = vecs_ref[...]                          # (NUM_VEC_ROWS, 128) f32

        def vrow(i, w):                               # static row / lane slices
            return vecs[i:i + 1, :w]

        W32 = w32_ref[...]                            # bf16 weight slab, 32 rows
        f1w1 = W32[:, o_f1w1:o_f1w1 + ffdim]
        f2w1 = W32[:, o_f2w1:o_f2w1 + ffdim]
        cpw1 = W32[:, o_cpw:o_cpw + 2 * inner]
        cw2 = W32[:, o_cw2:o_cw2 + dim]
        wo = W32[:, o_wo:o_wo + gdim]
        W128 = w128_ref[...]                          # bf16 weight slab, 128 rows
        f1w2 = W128[:, o_f1w2:o_f1w2 + dim]
        f2w2 = W128[:, o_f2w2:o_f2w2 + dim]
        KV = kvmem_ref[...]                           # bf16 [memk | memv]
        memk = KV[:, o_memk:o_memk + hde]
        memv = KV[:, o_memv:o_memv + hde]

        # layout helpers: grouped (bng, GROUP*dim) <-> token (GROUP*bng, dim)
        def to_tok(xg):
            return jnp.concatenate(
                [xg[:, j * dim:(j + 1) * dim] for j in range(GROUP)], axis=0)

        def to_grouped(xt):
            return jnp.concatenate(
                [xt[j * bng:(j + 1) * bng, :] for j in range(GROUP)], axis=1)

        def ff_half(xt, ig, ib, w1, ib1, w2, ib2):
            xn = _layernorm(xt, vrow(ig, dim), vrow(ib, dim))
            h = (jnp.dot(xn.astype(cdt), w1, preferred_element_type=f32)
                 + vrow(ib1, ffdim))
            h = h * jax.nn.sigmoid(h)
            y = (jnp.dot(h.astype(cdt), w2, preferred_element_type=f32)
                 + vrow(ib2, dim))
            return 0.5 * y + xt

        # resident activation, grouped layout (free reinterpretation of (B,N,C))
        xg = xg_ref[...]

        # ----------------------- FF1: x = 0.5*FF(LN(x)) + x --------------------
        xt = to_tok(xg)
        xt = ff_half(xt, V_F1_LNG, V_F1_LNB, f1w1, V_F1_B1, f1w2, V_F1_B2)
        xg = to_grouped(xt)

        # ------------------ grouped attention (batch folded) -------------------
        xn = _layernorm(xg, vrow(V_AT_LNG, gdim), vrow(V_AT_LNB, gdim))
        qkv = jnp.dot(xn.astype(cdt), wqkv_ref[...], preferred_element_type=f32)
        q = qkv[:, 0:hde]
        k = qkv[:, hde:2 * hde].astype(cdt)
        v = qkv[:, 2 * hde:3 * hde].astype(cdt)
        kc = jnp.concatenate([memk, k], axis=0)       # (NUM_MEM + bng, hde)
        vc = jnp.concatenate([memv, v], axis=0)
        bias = bias_ref[...]                          # (bng, NUM_MEM + bng)

        probs = []
        for g in range(HEADS):
            # pre-softmax talking heads + 1/sqrt(dh) folded into q column scales
            qg = (q * vrow(V_WPRE0 + g, hde)).astype(cdt)
            logits = lax.dot_general(qg, kc, (((1,), (1,)), ((), ())),
                                     preferred_element_type=f32) + bias
            m = jnp.max(logits, axis=-1, keepdims=True)
            e = jnp.exp(logits - m)
            probs.append(e * pl.reciprocal(
                jnp.sum(e, axis=-1, keepdims=True), approx=True))

        outs = []
        for gp in range(HEADS):
            ap = probs[0] * post_ref[0, gp]           # post-softmax talking heads
            for g in range(1, HEADS):
                ap = ap + probs[g] * post_ref[g, gp]
            outs.append(jnp.dot(ap.astype(cdt), vc[:, gp * dh:(gp + 1) * dh],
                                preferred_element_type=f32))
        out_all = jnp.concatenate(outs, axis=1)       # (bng, hde)
        ao = (jnp.dot(out_all.astype(cdt), wo, preferred_element_type=f32)
              + vrow(V_AT_BO, gdim))
        xg = xg + ao                                  # ungroup == residual add here

        # ------------------- ConformerConvModule + residual --------------------
        xt = to_tok(xg)
        xn = _layernorm(xt, vrow(V_CV_LNG, dim), vrow(V_CV_LNB, dim))
        hpw = (jnp.dot(xn.astype(cdt), cpw1, preferred_element_type=f32)
               + vrow(V_CV_BPW, 2 * inner))
        glu = hpw[:, 0:inner] * jax.nn.sigmoid(hpw[:, inner:2 * inner])
        halves = [glu[j * bng:(j + 1) * bng, :] for j in range(GROUP)]

        # Depthwise conv via pltpu.roll sublane shifts + masked VPU FMAs.
        dww = dww_ref[...]                            # (KSIZE, inner) f32
        rpos = lax.broadcasted_iota(jnp.int32, (bng, inner), 0) % ng
        dw_halves = []
        for j in range(GROUP):
            acc = jnp.zeros((bng, inner), f32) + vrow(V_CV_DWB, inner)
            for kk in range(KSIZE):
                off = kk - PAD_L
                src = j + off
                qshift = src // GROUP                 # python floor division
                s = src - qshift * GROUP
                lo = max(0, -qshift)
                hi = min(ng, ng - qshift)
                if lo >= hi:                          # tap never inside the seq
                    continue
                if qshift == 0:
                    shifted = halves[s]
                else:
                    shifted = pltpu.roll(halves[s], shift=(-qshift) % bng, axis=0)
                valid = (rpos >= lo) & (rpos < hi)
                acc = acc + jnp.where(valid, shifted * dww[kk:kk + 1, :], 0.0)
            dw_halves.append(acc)
        dwt = jnp.concatenate(dw_halves, axis=0)      # (GROUP*bng, inner)

        # BatchNorm1d (training-mode batch statistics over all tokens), Swish.
        mean = jnp.mean(dwt, axis=0, keepdims=True)
        var = jnp.mean((dwt - mean) ** 2, axis=0, keepdims=True)
        yn = ((dwt - mean) * lax.rsqrt(var + BN_EPS) * vrow(V_CV_BNG, inner)
              + vrow(V_CV_BNB, inner))
        yn = yn * jax.nn.sigmoid(yn)
        yt = (jnp.dot(yn.astype(cdt), cw2, preferred_element_type=f32)
              + vrow(V_CV_B2, dim))
        xg = xg + to_grouped(yt)

        # ------------------------- FF2 + post LayerNorm ------------------------
        xt = to_tok(xg)
        xt = ff_half(xt, V_F2_LNG, V_F2_LNB, f2w1, V_F2_B1, f2w2, V_F2_B2)
        xt = _layernorm(xt, vrow(V_PO_LNG, dim), vrow(V_PO_LNB, dim))
        o_ref[...] = to_grouped(xt)

    return kernel


# ----------------------------- operand packing ---------------------------------
def _pad_row128(v):
    v = jnp.reshape(v, (-1,)).astype(f32)
    assert v.shape[0] <= 128
    return jnp.pad(v, (0, 128 - v.shape[0]))


def _pack_lanes(mats, dtype):
    """Concatenate matrices along lanes, each segment padded to a 128 multiple."""
    segs, offs, off = [], [], 0
    for m in mats:
        w = ((m.shape[1] + 127) // 128) * 128
        segs.append(jnp.pad(m, ((0, 0), (0, w - m.shape[1]))))
        offs.append(off)
        off += w
    return jnp.concatenate(segs, axis=1).astype(dtype), offs


# ------------------------------ full block wrapper ------------------------------
def grouped_conformer_block(x, lengths, params):
    bsz, seq, dim = x.shape
    assert dim == DIM
    assert seq % GROUP == 0  # TODO(synk): general path pads seq to a multiple of GROUP
    ng = seq // GROUP
    bng = bsz * ng
    hde = HEADS * DIM_HEAD

    a, c = params["attn"], params["conv"]
    f1, f2, pln = params["ff1"], params["ff2"], params["post_ln"]

    # grouped key-padding mask (module.pad_mask_fn) + fused additive attention
    # bias over [memory keys | all batches' grouped keys]; cross-batch pairs are
    # masked so the whole batch folds into a single score matmul per head.
    new_lengths = jnp.ceil(lengths.astype(f32) / GROUP).astype(jnp.int32)
    grouped_mask = jnp.arange(ng)[None, :] < new_lengths[:, None]        # (B, Ng)
    q_batch = jnp.arange(bng) // ng
    k_batch = jnp.arange(bng) // ng
    k_group = jnp.arange(bng) % ng
    same_batch = q_batch[:, None] == k_batch[None, :]
    in_len = k_group[None, :] < new_lengths[k_batch][None, :]
    bias_self = jnp.where(same_batch & in_len, 0.0, NEG_INF).astype(f32)
    bias_attn = jnp.concatenate(
        [jnp.zeros((bng, NUM_MEM), f32), bias_self], axis=1)             # (B*Ng, M+B*Ng)

    # merged projection weights + packed lane-aligned weight slabs (bf16)
    wqkv = jnp.concatenate(
        [a["wq"].transpose(1, 0, 2).reshape(DIM_SIZE, hde),
         a["wk"].transpose(1, 0, 2).reshape(DIM_SIZE, hde),
         a["wv"].transpose(1, 0, 2).reshape(DIM_SIZE, hde)],
        axis=1).astype(MXU_DTYPE)                                        # (64, 96)
    memk = a["mem_k"].transpose(1, 0, 2).reshape(NUM_MEM, hde)
    memv = a["mem_v"].transpose(1, 0, 2).reshape(NUM_MEM, hde)
    wo = a["wo"].reshape(hde, DIM_SIZE)
    w_pw1 = jnp.concatenate([c["w_out"], c["w_gate"]], axis=1)           # (dim, 2*inner)
    b_pw1 = jnp.concatenate([c["b_out"], c["b_gate"]], axis=1)

    w32, w32_offs = _pack_lanes([f1["w1"], f2["w1"], w_pw1, c["w2"], wo], MXU_DTYPE)
    w128, w128_offs = _pack_lanes([f1["w2"], f2["w2"]], MXU_DTYPE)
    kvmem, kv_offs = _pack_lanes([memk, memv], MXU_DTYPE)

    # pre-softmax talking heads + 1/sqrt(dh) folded into per-q-column scales
    wpre = (DIM_HEAD ** -0.5) * jnp.repeat(a["pre_talk"], DIM_HEAD, axis=0).T  # (H, hde)

    vec_rows = [f1["ln_g"], f1["ln_b"], f1["b1"], f1["b2"],
                a["ln_g"], a["ln_b"], a["bo"],
                c["ln_g"], c["ln_b"], b_pw1, c["dw_b"], c["bn_g"], c["bn_b"], c["b2"],
                f2["ln_g"], f2["ln_b"], f2["b1"], f2["b2"],
                pln["ln_g"], pln["ln_b"]] + [wpre[g] for g in range(HEADS)]
    assert len(vec_rows) == NUM_VEC_ROWS
    vecs = jnp.stack([_pad_row128(r) for r in vec_rows], axis=0)         # (24, 128)

    # grouped layout is a free, contiguous reinterpretation of (B, N, C)
    xg = x.reshape(bng, GROUP * dim).astype(f32)

    kernel = _make_kernel(bsz, seq, w32_offs, w128_offs, kv_offs)
    vm = pl.BlockSpec(memory_space=pltpu.MemorySpace.VMEM)
    sm = pl.BlockSpec(memory_space=pltpu.MemorySpace.SMEM)
    out_g = pl.pallas_call(
        kernel,
        out_shape=jax.ShapeDtypeStruct((bng, GROUP * dim), f32),
        in_specs=[vm, vm, vm, vm, vm, vm, vm, vm, sm],
        out_specs=vm,
        compiler_params=pltpu.CompilerParams(vmem_limit_bytes=32 * 1024 * 1024),
        # TODO(synk): at realistic sizes add a "parallel" row-tile grid axis
        # (v7x 2nd TensorCore) + BlockSpec double-buffering; blocked here by the
        # cross-batch BatchNorm statistics and the tiny resident shapes.
    )(xg, bias_attn, vecs, w32, w128, wqkv, kvmem, c["dw_w"], a["post_talk"])
    return out_g.reshape(bsz, seq, dim), grouped_mask


# ----------------------------- deterministic params ---------------------------
def init_params(key):
    ks = jax.random.split(key, 20)

    def nrm(k, shape, s=0.05):
        return s * jax.random.normal(k, shape, dtype=f32)

    def ff_params(k1, k2):
        return dict(ln_g=jnp.ones((1, DIM), f32), ln_b=jnp.zeros((1, DIM), f32),
                    w1=nrm(k1, (DIM, DIM * FF_MULT)),
                    b1=jnp.zeros((1, DIM * FF_MULT), f32),
                    w2=nrm(k2, (DIM * FF_MULT, DIM)),
                    b2=jnp.zeros((1, DIM), f32))

    return dict(
        ff1=ff_params(ks[0], ks[1]),
        ff2=ff_params(ks[2], ks[3]),
        attn=dict(
            ln_g=jnp.ones((1, DIM_SIZE), f32), ln_b=jnp.zeros((1, DIM_SIZE), f32),
            wq=nrm(ks[4], (HEADS, DIM_SIZE, DIM_HEAD)),
            wk=nrm(ks[5], (HEADS, DIM_SIZE, DIM_HEAD)),
            wv=nrm(ks[6], (HEADS, DIM_SIZE, DIM_HEAD)),
            mem_k=nrm(ks[7], (HEADS, NUM_MEM, DIM_HEAD), 1.0),
            mem_v=nrm(ks[8], (HEADS, NUM_MEM, DIM_HEAD), 1.0),
            pre_talk=nrm(ks[9], (HEADS, HEADS), 1.0),
            post_talk=nrm(ks[10], (HEADS, HEADS), 1.0),
            wo=nrm(ks[11], (HEADS, DIM_HEAD, DIM_SIZE)),
            bo=jnp.zeros((1, DIM_SIZE), f32)),
        conv=dict(
            ln_g=jnp.ones((1, DIM), f32), ln_b=jnp.zeros((1, DIM), f32),
            w_out=nrm(ks[12], (DIM, INNER)), b_out=jnp.zeros((1, INNER), f32),
            w_gate=nrm(ks[13], (DIM, INNER)), b_gate=jnp.zeros((1, INNER), f32),
            dw_w=nrm(ks[14], (KSIZE, INNER)), dw_b=jnp.zeros((1, INNER), f32),
            bn_g=jnp.ones((1, INNER), f32), bn_b=jnp.zeros((1, INNER), f32),
            w2=nrm(ks[15], (INNER, DIM)), b2=jnp.zeros((1, DIM), f32)),
        post_ln=dict(ln_g=jnp.ones((1, DIM), f32), ln_b=jnp.zeros((1, DIM), f32)),
    )


# --------------------------- pure-JAX reference check --------------------------
def reference_forward(x, lengths, p):
    def ln(t, g, b):
        mu = t.mean(-1, keepdims=True)
        v = ((t - mu) ** 2).mean(-1, keepdims=True)
        return (t - mu) / jnp.sqrt(v + LN_EPS) * g + b

    def ff(t, q):
        h = ln(t, q["ln_g"], q["ln_b"]) @ q["w1"] + q["b1"]
        h = h * jax.nn.sigmoid(h)
        return 0.5 * (h @ q["w2"] + q["b2"]) + t

    hp = jax.lax.Precision.HIGHEST
    x = ff(x, p["ff1"])
    Bb, Nn, Cc = x.shape
    gx = x.reshape(Bb, Nn // GROUP, GROUP * Cc)
    Ng = gx.shape[1]
    new_lengths = jnp.ceil(lengths.astype(f32) / GROUP).astype(jnp.int32)
    mask = jnp.arange(Ng)[None, :] < new_lengths[:, None]

    a = p["attn"]
    xn = ln(gx, a["ln_g"], a["ln_b"])
    q = jnp.einsum('bnd,hde->bhne', xn, a["wq"], precision=hp)
    k = jnp.einsum('bnd,hde->bhne', xn, a["wk"], precision=hp)
    v = jnp.einsum('bnd,hde->bhne', xn, a["wv"], precision=hp)
    memk = jnp.broadcast_to(a["mem_k"][None], (Bb,) + a["mem_k"].shape)
    memv = jnp.broadcast_to(a["mem_v"][None], (Bb,) + a["mem_v"].shape)
    k = jnp.concatenate([memk, k], axis=2)
    v = jnp.concatenate([memv, v], axis=2)
    dots = jnp.einsum('bhne,bhme->bhnm', q, k, precision=hp) * DIM_HEAD ** -0.5
    dots = jnp.einsum('bhnm,hg->bgnm', dots, a["pre_talk"], precision=hp)
    km = jnp.concatenate([jnp.ones((Bb, NUM_MEM), bool), mask], axis=1)
    dots = jnp.where(km[:, None, None, :], dots, NEG_INF)
    attn = jax.nn.softmax(dots, axis=-1)
    attn = jnp.einsum('bhnm,hg->bgnm', attn, a["post_talk"], precision=hp)
    out = jnp.einsum('bhnm,bhme->bhne', attn, v, precision=hp)
    out = out.transpose(0, 2, 1, 3).reshape(Bb, Ng, HEADS * DIM_HEAD)
    out = out @ a["wo"].reshape(HEADS * DIM_HEAD, DIM_SIZE) + a["bo"]
    x = out.reshape(Bb, Nn, Cc) + x

    c = p["conv"]
    xn = ln(x, c["ln_g"], c["ln_b"])
    g = (xn @ c["w_out"] + c["b_out"]) * jax.nn.sigmoid(xn @ c["w_gate"] + c["b_gate"])
    gpad = jnp.pad(g, ((0, 0), (PAD_L, PAD_R), (0, 0)))
    dw = jnp.zeros((Bb, Nn, INNER), f32) + c["dw_b"]
    for kk in range(KSIZE):
        dw = dw + gpad[:, kk:kk + Nn, :] * c["dw_w"][kk]
    mean = dw.mean(axis=(0, 1), keepdims=True)
    var = ((dw - mean) ** 2).mean(axis=(0, 1), keepdims=True)
    yn = (dw - mean) / jnp.sqrt(var + BN_EPS) * c["bn_g"] + c["bn_b"]
    yn = yn * jax.nn.sigmoid(yn)
    x = yn @ c["w2"] + c["b2"] + x

    x = ff(x, p["ff2"])
    x = ln(x, p["post_ln"]["ln_g"], p["post_ln"]["ln_b"])
    return x, mask


if __name__ == "__main__":
    key = jax.random.PRNGKey(0)
    kx, kp = jax.random.split(key)
    x = jax.random.normal(kx, (B, N, DIM), dtype=f32)
    lengths = jnp.array([16, 11], dtype=jnp.int32)
    params = init_params(kp)

    out, grouped_mask = jax.jit(grouped_conformer_block)(x, lengths, params)
    jax.block_until_ready(out)
    assert out.shape == (B, N, DIM)
    assert grouped_mask.shape == (B, N // GROUP)

    ref, ref_mask = reference_forward(x, lengths, params)
    max_diff = float(jnp.max(jnp.abs(out - ref)))
    assert bool(jnp.all(grouped_mask == ref_mask))
    # bf16 MXU operands vs. a Precision.HIGHEST f32 reference -> looser bound.
    tol = 5e-2 if MXU_DTYPE == jnp.float32 else 1e-1
    assert max_diff < tol, f"mismatch vs reference: {max_diff}"
    print("KERNEL_OK")
</pallas_src>

<mosaic_0001>
module attributes {stable_mosaic.version = 11 : i64} {
  func.func @kernel(%arg0: memref<16x64xf32, #tpu.memory_space<vmem>>, %arg1: memref<16x32xf32, #tpu.memory_space<vmem>>, %arg2: memref<24x128xf32, #tpu.memory_space<vmem>>, %arg3: memref<32x640xbf16, #tpu.memory_space<vmem>>, %arg4: memref<128x256xbf16, #tpu.memory_space<vmem>>, %arg5: memref<64x96xbf16, #tpu.memory_space<vmem>>, %arg6: memref<16x256xbf16, #tpu.memory_space<vmem>>, %arg7: memref<31x32xf32, #tpu.memory_space<vmem>>, %arg8: memref<4x4xf32, #tpu.memory_space<smem>>, %arg9: memref<16x64xf32, #tpu.memory_space<vmem>>) attributes {dimension_semantics = [], scalar_prefetch = 0 : i64, scratch_operands = 0 : i64, tpu.core_type = #tpu.core_type<tc>} {
    %c0 = arith.constant 0 : index
    %c0_0 = arith.constant 0 : index
    %0 = vector.load %arg2[%c0, %c0_0] : memref<24x128xf32, #tpu.memory_space<vmem>>, vector<24x128xf32>
    %c0_1 = arith.constant 0 : index
    %c0_2 = arith.constant 0 : index
    %1 = vector.load %arg3[%c0_1, %c0_2] : memref<32x640xbf16, #tpu.memory_space<vmem>>, vector<32x640xbf16>
    %2 = vector.extract_strided_slice %1 {offsets = [0, 0], sizes = [32, 128], strides = [1, 1]} : vector<32x640xbf16> to vector<32x128xbf16>
    %3 = vector.extract_strided_slice %1 {offsets = [0, 128], sizes = [32, 128], strides = [1, 1]} : vector<32x640xbf16> to vector<32x128xbf16>
    %4 = vector.extract_strided_slice %1 {offsets = [0, 256], sizes = [32, 64], strides = [1, 1]} : vector<32x640xbf16> to vector<32x64xbf16>
    %5 = vector.extract_strided_slice %1 {offsets = [0, 384], sizes = [32, 32], strides = [1, 1]} : vector<32x640xbf16> to vector<32x32xbf16>
    %6 = vector.extract_strided_slice %1 {offsets = [0, 512], sizes = [32, 64], strides = [1, 1]} : vector<32x640xbf16> to vector<32x64xbf16>
    %c0_3 = arith.constant 0 : index
    %c0_4 = arith.constant 0 : index
    %7 = vector.load %arg4[%c0_3, %c0_4] : memref<128x256xbf16, #tpu.memory_space<vmem>>, vector<128x256xbf16>
    %8 = vector.extract_strided_slice %7 {offsets = [0, 0], sizes = [128, 32], strides = [1, 1]} : vector<128x256xbf16> to vector<128x32xbf16>
    %9 = vector.extract_strided_slice %7 {offsets = [0, 128], sizes = [128, 32], strides = [1, 1]} : vector<128x256xbf16> to vector<128x32xbf16>
    %c0_5 = arith.constant 0 : index
    %c0_6 = arith.constant 0 : index
    %10 = vector.load %arg6[%c0_5, %c0_6] : memref<16x256xbf16, #tpu.memory_space<vmem>>, vector<16x256xbf16>
    %11 = vector.extract_strided_slice %10 {offsets = [0, 0], sizes = [16, 32], strides = [1, 1]} : vector<16x256xbf16> to vector<16x32xbf16>
    %12 = vector.extract_strided_slice %10 {offsets = [0, 128], sizes = [16, 32], strides = [1, 1]} : vector<16x256xbf16> to vector<16x32xbf16>
    %c0_7 = arith.constant 0 : index
    %c0_8 = arith.constant 0 : index
    %13 = vector.load %arg0[%c0_7, %c0_8] : memref<16x64xf32, #tpu.memory_space<vmem>>, vector<16x64xf32>
    %14 = vector.extract_strided_slice %13 {offsets = [0, 0], sizes = [16, 32], strides = [1, 1]} : vector<16x64xf32> to vector<16x32xf32>
    %15 = vector.extract_strided_slice %13 {offsets = [0, 32], sizes = [16, 32], strides = [1, 1]} : vector<16x64xf32> to vector<16x32xf32>
    %16 = tpu.concatenate %14, %15 in 0 : vector<16x32xf32>, vector<16x32xf32> -> vector<32x32xf32>
    %17 = vector.extract_strided_slice %0 {offsets = [0, 0], sizes = [1, 32], strides = [1, 1]} : vector<24x128xf32> to vector<1x32xf32>
    %18 = vector.extract_strided_slice %0 {offsets = [1, 0], sizes = [1, 32], strides = [1, 1]} : vector<24x128xf32> to vector<1x32xf32>
    %cst = arith.constant dense<0.000000e+00> : vector<32xf32>
    %19 = vector.multi_reduction <add>, %16, %cst [1] : vector<32x32xf32> to vector<32xf32>
    %20 = vector.shape_cast %19 : vector<32xf32> to vector<32x1xf32>
    %cst_9 = arith.constant 3.200000e+01 : f32
    %21 = vector.broadcast %cst_9 : f32 to vector<32x1xf32>
    %22 = arith.divf %20, %21 : vector<32x1xf32>
    %23 = vector.broadcast %22 : vector<32x1xf32> to vector<32x32xf32>
    %24 = arith.subf %16, %23 : vector<32x32xf32>
    %25 = arith.mulf %24, %24 : vector<32x32xf32>
    %cst_10 = arith.constant dense<0.000000e+00> : vector<32xf32>
    %26 = vector.multi_reduction <add>, %25, %cst_10 [1] : vector<32x32xf32> to vector<32xf32>
    %27 = vector.shape_cast %26 : vector<32xf32> to vector<32x1xf32>
    %cst_11 = arith.constant 3.200000e+01 : f32
    %28 = vector.broadcast %cst_11 : f32 to vector<32x1xf32>
    %29 = arith.divf %27, %28 : vector<32x1xf32>
    %30 = vector.broadcast %22 : vector<32x1xf32> to vector<32x32xf32>
    %31 = arith.subf %16, %30 : vector<32x32xf32>
    %cst_12 = arith.constant 9.99999974E-6 : f32
    %32 = vector.broadcast %cst_12 : f32 to vector<32x1xf32>
    %33 = arith.addf %29, %32 : vector<32x1xf32>
    %34 = math.rsqrt %33 : vector<32x1xf32>
    %35 = vector.broadcast %34 : vector<32x1xf32> to vector<32x32xf32>
    %36 = arith.mulf %31, %35 : vector<32x32xf32>
    %37 = vector.broadcast %17 : vector<1x32xf32> to vector<32x32xf32>
    %38 = arith.mulf %36, %37 : vector<32x32xf32>
    %39 = vector.broadcast %18 : vector<1x32xf32> to vector<32x32xf32>
    %40 = arith.addf %38, %39 : vector<32x32xf32>
    %41 = arith.truncf %40 : vector<32x32xf32> to vector<32x32xbf16>
    %cst_13 = arith.constant dense<0.000000e+00> : vector<32x128xf32>
    %42 = tpu.matmul %41, %2, %cst_13 {dimension_numbers = #tpu.dot_dimension_numbers<[1], [0], [0], [1], [0, 0, 1, 1], [], []>} : vector<32x32xbf16>, vector<32x128xbf16>, vector<32x128xf32> -> vector<32x128xf32>
    %43 = vector.extract_strided_slice %0 {offsets = [2, 0], sizes = [1, 128], strides = [1, 1]} : vector<24x128xf32> to vector<1x128xf32>
    %44 = vector.broadcast %43 : vector<1x128xf32> to vector<32x128xf32>
    %45 = arith.addf %42, %44 : vector<32x128xf32>
    %46 = arith.negf %45 : vector<32x128xf32>
    %47 = math.exp %46 : vector<32x128xf32>
    %cst_14 = arith.constant 1.000000e+00 : f32
    %48 = vector.broadcast %cst_14 : f32 to vector<32x128xf32>
    %49 = arith.addf %48, %47 : vector<32x128xf32>
    %50 = arith.divf %48, %49 : vector<32x128xf32>
    %51 = arith.mulf %45, %50 : vector<32x128xf32>
    %52 = arith.truncf %51 : vector<32x128xf32> to vector<32x128xbf16>
    %cst_15 = arith.constant dense<0.000000e+00> : vector<32x32xf32>
    %53 = tpu.matmul %52, %8, %cst_15 {dimension_numbers = #tpu.dot_dimension_numbers<[1], [0], [0], [1], [0, 0, 1, 1], [], []>} : vector<32x128xbf16>, vector<128x32xbf16>, vector<32x32xf32> -> vector<32x32xf32>
    %54 = vector.extract_strided_slice %0 {offsets = [3, 0], sizes = [1, 32], strides = [1, 1]} : vector<24x128xf32> to vector<1x32xf32>
    %55 = vector.broadcast %54 : vector<1x32xf32> to vector<32x32xf32>
    %56 = arith.addf %53, %55 : vector<32x32xf32>
    %cst_16 = arith.constant 5.000000e-01 : f32
    %57 = vector.broadcast %cst_16 : f32 to vector<32x32xf32>
    %58 = arith.mulf %57, %56 : vector<32x32xf32>
    %59 = arith.addf %58, %16 : vector<32x32xf32>
    %60 = vector.extract_strided_slice %59 {offsets = [0, 0], sizes = [16, 32], strides = [1, 1]} : vector<32x32xf32> to vector<16x32xf32>
    %61 = vector.extract_strided_slice %59 {offsets = [16, 0], sizes = [16, 32], strides = [1, 1]} : vector<32x32xf32> to vector<16x32xf32>
    %62 = tpu.concatenate %60, %61 in 1 : vector<16x32xf32>, vector<16x32xf32> -> vector<16x64xf32>
    %63 = vector.extract_strided_slice %0 {offsets = [4, 0], sizes = [1, 64], strides = [1, 1]} : vector<24x128xf32> to vector<1x64xf32>
    %64 = vector.extract_strided_slice %0 {offsets = [5, 0], sizes = [1, 64], strides = [1, 1]} : vector<24x128xf32> to vector<1x64xf32>
    %cst_17 = arith.constant dense<0.000000e+00> : vector<16xf32>
    %65 = vector.multi_reduction <add>, %62, %cst_17 [1] : vector<16x64xf32> to vector<16xf32>
    %66 = vector.shape_cast %65 : vector<16xf32> to vector<16x1xf32>
    %cst_18 = arith.constant 6.400000e+01 : f32
    %67 = vector.broadcast %cst_18 : f32 to vector<16x1xf32>
    %68 = arith.divf %66, %67 : vector<16x1xf32>
    %69 = vector.broadcast %68 : vector<16x1xf32> to vector<16x64xf32>
    %70 = arith.subf %62, %69 : vector<16x64xf32>
    %71 = arith.mulf %70, %70 : vector<16x64xf32>
    %cst_19 = arith.constant dense<0.000000e+00> : vector<16xf32>
    %72 = vector.multi_reduction <add>, %71, %cst_19 [1] : vector<16x64xf32> to vector<16xf32>
    %73 = vector.shape_cast %72 : vector<16xf32> to vector<16x1xf32>
    %cst_20 = arith.constant 6.400000e+01 : f32
    %74 = vector.broadcast %cst_20 : f32 to vector<16x1xf32>
    %75 = arith.divf %73, %74 : vector<16x1xf32>
    %76 = vector.broadcast %68 : vector<16x1xf32> to vector<16x64xf32>
    %77 = arith.subf %62, %76 : vector<16x64xf32>
    %cst_21 = arith.constant 9.99999974E-6 : f32
    %78 = vector.broadcast %cst_21 : f32 to vector<16x1xf32>
    %79 = arith.addf %75, %78 : vector<16x1xf32>
    %80 = math.rsqrt %79 : vector<16x1xf32>
    %81 = vector.broadcast %80 : vector<16x1xf32> to vector<16x64xf32>
    %82 = arith.mulf %77, %81 : vector<16x64xf32>
    %83 = vector.broadcast %63 : vector<1x64xf32> to vector<16x64xf32>
    %84 = arith.mulf %82, %83 : vector<16x64xf32>
    %85 = vector.broadcast %64 : vector<1x64xf32> to vector<16x64xf32>
    %86 = arith.addf %84, %85 : vector<16x64xf32>
    %87 = arith.truncf %86 : vector<16x64xf32> to vector<16x64xbf16>
    %c0_22 = arith.constant 0 : index
    %c0_23 = arith.constant 0 : index
    %88 = vector.load %arg5[%c0_22, %c0_23] : memref<64x96xbf16, #tpu.memory_space<vmem>>, vector<64x96xbf16>
    %cst_24 = arith.constant dense<0.000000e+00> : vector<16x96xf32>
    %89 = tpu.matmul %87, %88, %cst_24 {dimension_numbers = #tpu.dot_dimension_numbers<[1], [0], [0], [1], [0, 0, 1, 1], [], []>} : vector<16x64xbf16>, vector<64x96xbf16>, vector<16x96xf32> -> vector<16x96xf32>
    %90 = vector.extract_strided_slice %89 {offsets = [0, 0], sizes = [16, 32], strides = [1, 1]} : vector<16x96xf32> to vector<16x32xf32>
    %91 = vector.extract_strided_slice %89 {offsets = [0, 32], sizes = [16, 32], strides = [1, 1]} : vector<16x96xf32> to vector<16x32xf32>
    %92 = arith.truncf %91 : vector<16x32xf32> to vector<16x32xbf16>
    %93 = vector.extract_strided_slice %89 {offsets = [0, 64], sizes = [16, 32], strides = [1, 1]} : vector<16x96xf32> to vector<16x32xf32>
    %94 = arith.truncf %93 : vector<16x32xf32> to vector<16x32xbf16>
    %95 = tpu.concatenate %11, %92 in 0 : vector<16x32xbf16>, vector<16x32xbf16> -> vector<32x32xbf16>
    %96 = tpu.concatenate %12, %94 in 0 : vector<16x32xbf16>, vector<16x32xbf16> -> vector<32x32xbf16>
    %c0_25 = arith.constant 0 : index
    %c0_26 = arith.constant 0 : index
    %97 = vector.load %arg1[%c0_25, %c0_26] : memref<16x32xf32, #tpu.memory_space<vmem>>, vector<16x32xf32>
    %98 = vector.extract_strided_slice %0 {offsets = [20, 0], sizes = [1, 32], strides = [1, 1]} : vector<24x128xf32> to vector<1x32xf32>
    %99 = vector.broadcast %98 : vector<1x32xf32> to vector<16x32xf32>
    %100 = arith.mulf %90, %99 : vector<16x32xf32>
    %101 = arith.truncf %100 : vector<16x32xf32> to vector<16x32xbf16>
    %cst_27 = arith.constant dense<0.000000e+00> : vector<16x32xf32>
    %102 = tpu.matmul %101, %95, %cst_27 {dimension_numbers = #tpu.dot_dimension_numbers<[1], [1], [0], [0], [0, 0, 1, 0], [], []>} : vector<16x32xbf16>, vector<32x32xbf16>, vector<16x32xf32> -> vector<16x32xf32>
    %103 = arith.addf %102, %97 : vector<16x32xf32>
    %cst_28 = arith.constant dense<0xFF800000> : vector<16xf32>
    %104 = vector.multi_reduction <maximumf>, %103, %cst_28 [1] : vector<16x32xf32> to vector<16xf32>
    %105 = vector.shape_cast %104 : vector<16xf32> to vector<16x1xf32>
    %106 = vector.broadcast %105 : vector<16x1xf32> to vector<16x32xf32>
    %107 = arith.subf %103, %106 : vector<16x32xf32>
    %108 = math.exp %107 : vector<16x32xf32>
    %cst_29 = arith.constant dense<0.000000e+00> : vector<16xf32>
    %109 = vector.multi_reduction <add>, %108, %cst_29 [1] : vector<16x32xf32> to vector<16xf32>
    %110 = vector.shape_cast %109 : vector<16xf32> to vector<16x1xf32>
    %111 = tpu.reciprocal %110 {approx = true} : vector<16x1xf32> -> vector<16x1xf32>
    %112 = vector.broadcast %111 : vector<16x1xf32> to vector<16x32xf32>
    %113 = arith.mulf %108, %112 : vector<16x32xf32>
    %114 = vector.extract_strided_slice %0 {offsets = [21, 0], sizes = [1, 32], strides = [1, 1]} : vector<24x128xf32> to vector<1x32xf32>
    %115 = vector.broadcast %114 : vector<1x32xf32> to vector<16x32xf32>
    %116 = arith.mulf %90, %115 : vector<16x32xf32>
    %117 = arith.truncf %116 : vector<16x32xf32> to vector<16x32xbf16>
    %cst_30 = arith.constant dense<0.000000e+00> : vector<16x32xf32>
    %118 = tpu.matmul %117, %95, %cst_30 {dimension_numbers = #tpu.dot_dimension_numbers<[1], [1], [0], [0], [0, 0, 1, 0], [], []>} : vector<16x32xbf16>, vector<32x32xbf16>, vector<16x32xf32> -> vector<16x32xf32>
    %119 = arith.addf %118, %97 : vector<16x32xf32>
    %cst_31 = arith.constant dense<0xFF800000> : vector<16xf32>
    %120 = vector.multi_reduction <maximumf>, %119, %cst_31 [1] : vector<16x32xf32> to vector<16xf32>
    %121 = vector.shape_cast %120 : vector<16xf32> to vector<16x1xf32>
    %122 = vector.broadcast %121 : vector<16x1xf32> to vector<16x32xf32>
    %123 = arith.subf %119, %122 : vector<16x32xf32>
    %124 = math.exp %123 : vector<16x32xf32>
    %cst_32 = arith.constant dense<0.000000e+00> : vector<16xf32>
    %125 = vector.multi_reduction <add>, %124, %cst_32 [1] : vector<16x32xf32> to vector<16xf32>
    %126 = vector.shape_cast %125 : vector<16xf32> to vector<16x1xf32>
    %127 = tpu.reciprocal %126 {approx = true} : vector<16x1xf32> -> vector<16x1xf32>
    %128 = vector.broadcast %127 : vector<16x1xf32> to vector<16x32xf32>
    %129 = arith.mulf %124, %128 : vector<16x32xf32>
    %130 = vector.extract_strided_slice %0 {offsets = [22, 0], sizes = [1, 32], strides = [1, 1]} : vector<24x128xf32> to vector<1x32xf32>
    %131 = vector.broadcast %130 : vector<1x32xf32> to vector<16x32xf32>
    %132 = arith.mulf %90, %131 : vector<16x32xf32>
    %133 = arith.truncf %132 : vector<16x32xf32> to vector<16x32xbf16>
    %cst_33 = arith.constant dense<0.000000e+00> : vector<16x32xf32>
    %134 = tpu.matmul %133, %95, %cst_33 {dimension_numbers = #tpu.dot_dimension_numbers<[1], [1], [0], [0], [0, 0, 1, 0], [], []>} : vector<16x32xbf16>, vector<32x32xbf16>, vector<16x32xf32> -> vector<16x32xf32>
    %135 = arith.addf %134, %97 : vector<16x32xf32>
    %cst_34 = arith.constant dense<0xFF800000> : vector<16xf32>
    %136 = vector.multi_reduction <maximumf>, %135, %cst_34 [1] : vector<16x32xf32> to vector<16xf32>
    %137 = vector.shape_cast %136 : vector<16xf32> to vector<16x1xf32>
    %138 = vector.broadcast %137 : vector<16x1xf32> to vector<16x32xf32>
    %139 = arith.subf %135, %138 : vector<16x32xf32>
    %140 = math.exp %139 : vector<16x32xf32>
    %cst_35 = arith.constant dense<0.000000e+00> : vector<16xf32>
    %141 = vector.multi_reduction <add>, %140, %cst_35 [1] : vector<16x32xf32> to vector<16xf32>
    %142 = vector.shape_cast %141 : vector<16xf32> to vector<16x1xf32>
    %143 = tpu.reciprocal %142 {approx = true} : vector<16x1xf32> -> vector<16x1xf32>
    %144 = vector.broadcast %143 : vector<16x1xf32> to vector<16x32xf32>
    %145 = arith.mulf %140, %144 : vector<16x32xf32>
    %146 = vector.extract_strided_slice %0 {offsets = [23, 0], sizes = [1, 32], strides = [1, 1]} : vector<24x128xf32> to vector<1x32xf32>
    %147 = vector.broadcast %146 : vector<1x32xf32> to vector<16x32xf32>
    %148 = arith.mulf %90, %147 : vector<16x32xf32>
    %149 = arith.truncf %148 : vector<16x32xf32> to vector<16x32xbf16>
    %cst_36 = arith.constant dense<0.000000e+00> : vector<16x32xf32>
    %150 = tpu.matmul %149, %95, %cst_36 {dimension_numbers = #tpu.dot_dimension_numbers<[1], [1], [0], [0], [0, 0, 1, 0], [], []>} : vector<16x32xbf16>, vector<32x32xbf16>, vector<16x32xf32> -> vector<16x32xf32>
    %151 = arith.addf %150, %97 : vector<16x32xf32>
    %cst_37 = arith.constant dense<0xFF800000> : vector<16xf32>
    %152 = vector.multi_reduction <maximumf>, %151, %cst_37 [1] : vector<16x32xf32> to vector<16xf32>
    %153 = vector.shape_cast %152 : vector<16xf32> to vector<16x1xf32>
    %154 = vector.broadcast %153 : vector<16x1xf32> to vector<16x32xf32>
    %155 = arith.subf %151, %154 : vector<16x32xf32>
    %156 = math.exp %155 : vector<16x32xf32>
    %cst_38 = arith.constant dense<0.000000e+00> : vector<16xf32>
    %157 = vector.multi_reduction <add>, %156, %cst_38 [1] : vector<16x32xf32> to vector<16xf32>
    %158 = vector.shape_cast %157 : vector<16xf32> to vector<16x1xf32>
    %159 = tpu.reciprocal %158 {approx = true} : vector<16x1xf32> -> vector<16x1xf32>
    %160 = vector.broadcast %159 : vector<16x1xf32> to vector<16x32xf32>
    %161 = arith.mulf %156, %160 : vector<16x32xf32>
    %c0_39 = arith.constant 0 : index
    %c0_40 = arith.constant 0 : index
    %162 = memref.load %arg8[%c0_39, %c0_40] : memref<4x4xf32, #tpu.memory_space<smem>>
    %163 = vector.broadcast %162 : f32 to vector<16x32xf32>
    %164 = arith.mulf %113, %163 : vector<16x32xf32>
    %c1 = arith.constant 1 : index
    %c0_41 = arith.constant 0 : index
    %165 = memref.load %arg8[%c1, %c0_41] : memref<4x4xf32, #tpu.memory_space<smem>>
    %166 = vector.broadcast %165 : f32 to vector<16x32xf32>
    %167 = arith.mulf %129, %166 : vector<16x32xf32>
    %168 = arith.addf %164, %167 : vector<16x32xf32>
    %c2 = arith.constant 2 : index
    %c0_42 = arith.constant 0 : index
    %169 = memref.load %arg8[%c2, %c0_42] : memref<4x4xf32, #tpu.memory_space<smem>>
    %170 = vector.broadcast %169 : f32 to vector<16x32xf32>
    %171 = arith.mulf %145, %170 : vector<16x32xf32>
    %172 = arith.addf %168, %171 : vector<16x32xf32>
    %c3 = arith.constant 3 : index
    %c0_43 = arith.constant 0 : index
    %173 = memref.load %arg8[%c3, %c0_43] : memref<4x4xf32, #tpu.memory_space<smem>>
    %174 = vector.broadcast %173 : f32 to vector<16x32xf32>
    %175 = arith.mulf %161, %174 : vector<16x32xf32>
    %176 = arith.addf %172, %175 : vector<16x32xf32>
    %177 = arith.truncf %176 : vector<16x32xf32> to vector<16x32xbf16>
    %178 = vector.extract_strided_slice %96 {offsets = [0, 0], sizes = [32, 8], strides = [1, 1]} : vector<32x32xbf16> to vector<32x8xbf16>
    %cst_44 = arith.constant dense<0.000000e+00> : vector<16x8xf32>
    %179 = tpu.matmul %177, %178, %cst_44 {dimension_numbers = #tpu.dot_dimension_numbers<[1], [0], [0], [1], [0, 0, 1, 1], [], []>} : vector<16x32xbf16>, vector<32x8xbf16>, vector<16x8xf32> -> vector<16x8xf32>
    %c0_45 = arith.constant 0 : index
    %c1_46 = arith.constant 1 : index
    %180 = memref.load %arg8[%c0_45, %c1_46] : memref<4x4xf32, #tpu.memory_space<smem>>
    %181 = vector.broadcast %180 : f32 to vector<16x32xf32>
    %182 = arith.mulf %113, %181 : vector<16x32xf32>
    %c1_47 = arith.constant 1 : index
    %c1_48 = arith.constant 1 : index
    %183 = memref.load %arg8[%c1_47, %c1_48] : memref<4x4xf32, #tpu.memory_space<smem>>
    %184 = vector.broadcast %183 : f32 to vector<16x32xf32>
    %185 = arith.mulf %129, %184 : vector<16x32xf32>
    %186 = arith.addf %182, %185 : vector<16x32xf32>
    %c2_49 = arith.constant 2 : index
    %c1_50 = arith.constant 1 : index
    %187 = memref.load %arg8[%c2_49, %c1_50] : memref<4x4xf32, #tpu.memory_space<smem>>
    %188 = vector.broadcast %187 : f32 to vector<16x32xf32>
    %189 = arith.mulf %145, %188 : vector<16x32xf32>
    %190 = arith.addf %186, %189 : vector<16x32xf32>
    %c3_51 = arith.constant 3 : index
    %c1_52 = arith.constant 1 : index
    %191 = memref.load %arg8[%c3_51, %c1_52] : memref<4x4xf32, #tpu.memory_space<smem>>
    %192 = vector.broadcast %191 : f32 to vector<16x32xf32>
    %193 = arith.mulf %161, %192 : vector<16x32xf32>
    %194 = arith.addf %190, %193 : vector<16x32xf32>
    %195 = arith.truncf %194 : vector<16x32xf32> to vector<16x32xbf16>
    %196 = vector.extract_strided_slice %96 {offsets = [0, 8], sizes = [32, 8], strides = [1, 1]} : vector<32x32xbf16> to vector<32x8xbf16>
    %cst_53 = arith.constant dense<0.000000e+00> : vector<16x8xf32>
    %197 = tpu.matmul %195, %196, %cst_53 {dimension_numbers = #tpu.dot_dimension_numbers<[1], [0], [0], [1], [0, 0, 1, 1], [], []>} : vector<16x32xbf16>, vector<32x8xbf16>, vector<16x8xf32> -> vector<16x8xf32>
    %c0_54 = arith.constant 0 : index
    %c2_55 = arith.constant 2 : index
    %198 = memref.load %arg8[%c0_54, %c2_55] : memref<4x4xf32, #tpu.memory_space<smem>>
    %199 = vector.broadcast %198 : f32 to vector<16x32xf32>
    %200 = arith.mulf %113, %199 : vector<16x32xf32>
    %c1_56 = arith.constant 1 : index
    %c2_57 = arith.constant 2 : index
    %201 = memref.load %arg8[%c1_56, %c2_57] : memref<4x4xf32, #tpu.memory_space<smem>>
    %202 = vector.broadcast %201 : f32 to vector<16x32xf32>
    %203 = arith.mulf %129, %202 : vector<16x32xf32>
    %204 = arith.addf %200, %203 : vector<16x32xf32>
    %c2_58 = arith.constant 2 : index
    %c2_59 = arith.constant 2 : index
    %205 = memref.load %arg8[%c2_58, %c2_59] : memref<4x4xf32, #tpu.memory_space<smem>>
    %206 = vector.broadcast %205 : f32 to vector<16x32xf32>
    %207 = arith.mulf %145, %206 : vector<16x32xf32>
    %208 = arith.addf %204, %207 : vector<16x32xf32>
    %c3_60 = arith.constant 3 : index
    %c2_61 = arith.constant 2 : index
    %209 = memref.load %arg8[%c3_60, %c2_61] : memref<4x4xf32, #tpu.memory_space<smem>>
    %210 = vector.broadcast %209 : f32 to vector<16x32xf32>
    %211 = arith.mulf %161, %210 : vector<16x32xf32>
    %212 = arith.addf %208, %211 : vector<16x32xf32>
    %213 = arith.truncf %212 : vector<16x32xf32> to vector<16x32xbf16>
    %214 = vector.extract_strided_slice %96 {offsets = [0, 16], sizes = [32, 8], strides = [1, 1]} : vector<32x32xbf16> to vector<32x8xbf16>
    %cst_62 = arith.constant dense<0.000000e+00> : vector<16x8xf32>
    %215 = tpu.matmul %213, %214, %cst_62 {dimension_numbers = #tpu.dot_dimension_numbers<[1], [0], [0], [1], [0, 0, 1, 1], [], []>} : vector<16x32xbf16>, vector<32x8xbf16>, vector<16x8xf32> -> vector<16x8xf32>
    %c0_63 = arith.constant 0 : index
    %c3_64 = arith.constant 3 : index
    %216 = memref.load %arg8[%c0_63, %c3_64] : memref<4x4xf32, #tpu.memory_space<smem>>
    %217 = vector.broadcast %216 : f32 to vector<16x32xf32>
    %218 = arith.mulf %113, %217 : vector<16x32xf32>
    %c1_65 = arith.constant 1 : index
    %c3_66 = arith.constant 3 : index
    %219 = memref.load %arg8[%c1_65, %c3_66] : memref<4x4xf32, #tpu.memory_space<smem>>
    %220 = vector.broadcast %219 : f32 to vector<16x32xf32>
    %221 = arith.mulf %129, %220 : vector<16x32xf32>
    %222 = arith.addf %218, %221 : vector<16x32xf32>
    %c2_67 = arith.constant 2 : index
    %c3_68 = arith.constant 3 : index
    %223 = memref.load %arg8[%c2_67, %c3_68] : memref<4x4xf32, #tpu.memory_space<smem>>
    %224 = vector.broadcast %223 : f32 to vector<16x32xf32>
    %225 = arith.mulf %145, %224 : vector<16x32xf32>
    %226 = arith.addf %222, %225 : vector<16x32xf32>
    %c3_69 = arith.constant 3 : index
    %c3_70 = arith.constant 3 : index
    %227 = memref.load %arg8[%c3_69, %c3_70] : memref<4x4xf32, #tpu.memory_space<smem>>
    %228 = vector.broadcast %227 : f32 to vector<16x32xf32>
    %229 = arith.mulf %161, %228 : vector<16x32xf32>
    %230 = arith.addf %226, %229 : vector<16x32xf32>
    %231 = arith.truncf %230 : vector<16x32xf32> to vector<16x32xbf16>
    %232 = vector.extract_strided_slice %96 {offsets = [0, 24], sizes = [32, 8], strides = [1, 1]} : vector<32x32xbf16> to vector<32x8xbf16>
    %cst_71 = arith.constant dense<0.000000e+00> : vector<16x8xf32>
    %233 = tpu.matmul %231, %232, %cst_71 {dimension_numbers = #tpu.dot_dimension_numbers<[1], [0], [0], [1], [0, 0, 1, 1], [], []>} : vector<16x32xbf16>, vector<32x8xbf16>, vector<16x8xf32> -> vector<16x8xf32>
    %234 = tpu.concatenate %179, %197, %215, %233 in 1 : vector<16x8xf32>, vector<16x8xf32>, vector<16x8xf32>, vector<16x8xf32> -> vector<16x32xf32>
    %235 = arith.truncf %234 : vector<16x32xf32> to vector<16x32xbf16>
    %cst_72 = arith.constant dense<0.000000e+00> : vector<16x64xf32>
    %236 = tpu.matmul %235, %6, %cst_72 {dimension_numbers = #tpu.dot_dimension_numbers<[1], [0], [0], [1], [0, 0, 1, 1], [], []>} : vector<16x32xbf16>, vector<32x64xbf16>, vector<16x64xf32> -> vector<16x64xf32>
    %237 = vector.extract_strided_slice %0 {offsets = [6, 0], sizes = [1, 64], strides = [1, 1]} : vector<24x128xf32> to vector<1x64xf32>
    %238 = vector.broadcast %237 : vector<1x64xf32> to vector<16x64xf32>
    %239 = arith.addf %236, %238 : vector<16x64xf32>
    %240 = arith.addf %62, %239 : vector<16x64xf32>
    %241 = vector.extract_strided_slice %240 {offsets = [0, 0], sizes = [16, 32], strides = [1, 1]} : vector<16x64xf32> to vector<16x32xf32>
    %242 = vector.extract_strided_slice %240 {offsets = [0, 32], sizes = [16, 32], strides = [1, 1]} : vector<16x64xf32> to vector<16x32xf32>
    %243 = tpu.concatenate %241, %242 in 0 : vector<16x32xf32>, vector<16x32xf32> -> vector<32x32xf32>
    %244 = vector.extract_strided_slice %0 {offsets = [7, 0], sizes = [1, 32], strides = [1, 1]} : vector<24x128xf32> to vector<1x32xf32>
    %245 = vector.extract_strided_slice %0 {offsets = [8, 0], sizes = [1, 32], strides = [1, 1]} : vector<24x128xf32> to vector<1x32xf32>
    %cst_73 = arith.constant dense<0.000000e+00> : vector<32xf32>
    %246 = vector.multi_reduction <add>, %243, %cst_73 [1] : vector<32x32xf32> to vector<32xf32>
    %247 = vector.shape_cast %246 : vector<32xf32> to vector<32x1xf32>
    %cst_74 = arith.constant 3.200000e+01 : f32
    %248 = vector.broadcast %cst_74 : f32 to vector<32x1xf32>
    %249 = arith.divf %247, %248 : vector<32x1xf32>
    %250 = vector.broadcast %249 : vector<32x1xf32> to vector<32x32xf32>
    %251 = arith.subf %243, %250 : vector<32x32xf32>
    %252 = arith.mulf %251, %251 : vector<32x32xf32>
    %cst_75 = arith.constant dense<0.000000e+00> : vector<32xf32>
    %253 = vector.multi_reduction <add>, %252, %cst_75 [1] : vector<32x32xf32> to vector<32xf32>
    %254 = vector.shape_cast %253 : vector<32xf32> to vector<32x1xf32>
    %cst_76 = arith.constant 3.200000e+01 : f32
    %255 = vector.broadcast %cst_76 : f32 to vector<32x1xf32>
    %256 = arith.divf %254, %255 : vector<32x1xf32>
    %257 = vector.broadcast %249 : vector<32x1xf32> to vector<32x32xf32>
    %258 = arith.subf %243, %257 : vector<32x32xf32>
    %cst_77 = arith.constant 9.99999974E-6 : f32
    %259 = vector.broadcast %cst_77 : f32 to vector<32x1xf32>
    %260 = arith.addf %256, %259 : vector<32x1xf32>
    %261 = math.rsqrt %260 : vector<32x1xf32>
    %262 = vector.broadcast %261 : vector<32x1xf32> to vector<32x32xf32>
    %263 = arith.mulf %258, %262 : vector<32x32xf32>
    %264 = vector.broadcast %244 : vector<1x32xf32> to vector<32x32xf32>
    %265 = arith.mulf %263, %264 : vector<32x32xf32>
    %266 = vector.broadcast %245 : vector<1x32xf32> to vector<32x32xf32>
    %267 = arith.addf %265, %266 : vector<32x32xf32>
    %268 = arith.truncf %267 : vector<32x32xf32> to vector<32x32xbf16>
    %cst_78 = arith.constant dense<0.000000e+00> : vector<32x64xf32>
    %269 = tpu.matmul %268, %4, %cst_78 {dimension_numbers = #tpu.dot_dimension_numbers<[1], [0], [0], [1], [0, 0, 1, 1], [], []>} : vector<32x32xbf16>, vector<32x64xbf16>, vector<32x64xf32> -> vector<32x64xf32>
    %270 = vector.extract_strided_slice %0 {offsets = [9, 0], sizes = [1, 64], strides = [1, 1]} : vector<24x128xf32> to vector<1x64xf32>
    %271 = vector.broadcast %270 : vector<1x64xf32> to vector<32x64xf32>
    %272 = arith.addf %269, %271 : vector<32x64xf32>
    %273 = vector.extract_strided_slice %272 {offsets = [0, 0], sizes = [32, 32], strides = [1, 1]} : vector<32x64xf32> to vector<32x32xf32>
    %274 = vector.extract_strided_slice %272 {offsets = [0, 32], sizes = [32, 32], strides = [1, 1]} : vector<32x64xf32> to vector<32x32xf32>
    %275 = arith.negf %274 : vector<32x32xf32>
    %276 = math.exp %275 : vector<32x32xf32>
    %cst_79 = arith.constant 1.000000e+00 : f32
    %277 = vector.broadcast %cst_79 : f32 to vector<32x32xf32>
    %278 = arith.addf %277, %276 : vector<32x32xf32>
    %279 = arith.divf %277, %278 : vector<32x32xf32>
    %280 = arith.mulf %273, %279 : vector<32x32xf32>
    %281 = vector.extract_strided_slice %280 {offsets = [0, 0], sizes = [16, 32], strides = [1, 1]} : vector<32x32xf32> to vector<16x32xf32>
    %282 = vector.extract_strided_slice %280 {offsets = [16, 0], sizes = [16, 32], strides = [1, 1]} : vector<32x32xf32> to vector<16x32xf32>
    %c0_80 = arith.constant 0 : index
    %c0_81 = arith.constant 0 : index
    %283 = vector.load %arg7[%c0_80, %c0_81] : memref<31x32xf32, #tpu.memory_space<vmem>>, vector<31x32xf32>
    %284 = tpu.iota {dimensions = array<i32: 0>} : vector<16x32xi32>
    %c8_i32 = arith.constant 8 : i32
    %c0_i32 = arith.constant 0 : i32
    %285 = arith.cmpi eq, %c8_i32, %c0_i32 : i32
    %c1_i32 = arith.constant 1 : i32
    %286 = arith.select %285, %c1_i32, %c8_i32 : i32
    %287 = vector.broadcast %286 : i32 to vector<16x32xi32>
    %288 = arith.remsi %284, %287 : vector<16x32xi32>
    %c0_i32_82 = arith.constant 0 : i32
    %289 = vector.broadcast %c0_i32_82 : i32 to vector<16x32xi32>
    %290 = arith.cmpi ne, %288, %289 : vector<16x32xi32>
    %c0_i32_83 = arith.constant 0 : i32
    %291 = vector.broadcast %c0_i32_83 : i32 to vector<16x32xi32>
    %292 = arith.cmpi slt, %288, %291 : vector<16x32xi32>
    %c0_i32_84 = arith.constant 0 : i32
    %293 = arith.cmpi slt, %286, %c0_i32_84 : i32
    %294 = vector.broadcast %293 : i1 to vector<16x32xi1>
    %295 = vector.broadcast %294 : vector<16x32xi1> to vector<16x32xi1>
    %296 = arith.xori %292, %295 : vector<16x32xi1>
    %297 = arith.andi %296, %290 : vector<16x32xi1>
    %298 = vector.broadcast %286 : i32 to vector<16x32xi32>
    %299 = arith.addi %288, %298 : vector<16x32xi32>
    %300 = arith.select %297, %299, %288 : vector<16x32xi1>, vector<16x32xi32>
    %cst_85 = arith.constant 0.000000e+00 : f32
    %301 = vector.broadcast %cst_85 : f32 to vector<16x32xf32>
    %302 = vector.extract_strided_slice %0 {offsets = [10, 0], sizes = [1, 32], strides = [1, 1]} : vector<24x128xf32> to vector<1x32xf32>
    %303 = vector.broadcast %302 : vector<1x32xf32> to vector<16x32xf32>
    %304 = arith.addf %301, %303 : vector<16x32xf32>
    %c7_i32 = arith.constant 7 : i32
    %305 = tpu.dynamic_rotate %281 by %c7_i32 dim 0 : vector<16x32xf32>, i32 -> vector<16x32xf32>
    %c7_i32_86 = arith.constant 7 : i32
    %306 = vector.broadcast %c7_i32_86 : i32 to vector<16x32xi32>
    %307 = arith.cmpi sge, %300, %306 : vector<16x32xi32>
    %c8_i32_87 = arith.constant 8 : i32
    %308 = vector.broadcast %c8_i32_87 : i32 to vector<16x32xi32>
    %309 = arith.cmpi slt, %300, %308 : vector<16x32xi32>
    %310 = arith.andi %307, %309 : vector<16x32xi1>
    %311 = vector.extract_strided_slice %283 {offsets = [1, 0], sizes = [1, 32], strides = [1, 1]} : vector<31x32xf32> to vector<1x32xf32>
    %312 = vector.broadcast %311 : vector<1x32xf32> to vector<16x32xf32>
    %313 = arith.mulf %305, %312 : vector<16x32xf32>
    %cst_88 = arith.constant 0.000000e+00 : f32
    %314 = vector.broadcast %cst_88 : f32 to vector<16x32xf32>
    %315 = arith.select %310, %313, %314 : vector<16x32xi1>, vector<16x32xf32>
    %316 = arith.addf %304, %315 : vector<16x32xf32>
    %c7_i32_89 = arith.constant 7 : i32
    %317 = tpu.dynamic_rotate %282 by %c7_i32_89 dim 0 : vector<16x32xf32>, i32 -> vector<16x32xf32>
    %c7_i32_90 = arith.constant 7 : i32
    %318 = vector.broadcast %c7_i32_90 : i32 to vector<16x32xi32>
    %319 = arith.cmpi sge, %300, %318 : vector<16x32xi32>
    %c8_i32_91 = arith.constant 8 : i32
    %320 = vector.broadcast %c8_i32_91 : i32 to vector<16x32xi32>
    %321 = arith.cmpi slt, %300, %320 : vector<16x32xi32>
    %322 = arith.andi %319, %321 : vector<16x32xi1>
    %323 = vector.extract_strided_slice %283 {offsets = [2, 0], sizes = [1, 32], strides = [1, 1]} : vector<31x32xf32> to vector<1x32xf32>
    %324 = vector.broadcast %323 : vector<1x32xf32> to vector<16x32xf32>
    %325 = arith.mulf %317, %324 : vector<16x32xf32>
    %cst_92 = arith.constant 0.000000e+00 : f32
    %326 = vector.broadcast %cst_92 : f32 to vector<16x32xf32>
    %327 = arith.select %322, %325, %326 : vector<16x32xi1>, vector<16x32xf32>
    %328 = arith.addf %316, %327 : vector<16x32xf32>
    %c6_i32 = arith.constant 6 : i32
    %329 = tpu.dynamic_rotate %281 by %c6_i32 dim 0 : vector<16x32xf32>, i32 -> vector<16x32xf32>
    %c6_i32_93 = arith.constant 6 : i32
    %330 = vector.broadcast %c6_i32_93 : i32 to vector<16x32xi32>
    %331 = arith.cmpi sge, %300, %330 : vector<16x32xi32>
    %c8_i32_94 = arith.constant 8 : i32
    %332 = vector.broadcast %c8_i32_94 : i32 to vector<16x32xi32>
    %333 = arith.cmpi slt, %300, %332 : vector<16x32xi32>
    %334 = arith.andi %331, %333 : vector<16x32xi1>
    %335 = vector.extract_strided_slice %283 {offsets = [3, 0], sizes = [1, 32], strides = [1, 1]} : vector<31x32xf32> to vector<1x32xf32>
    %336 = vector.broadcast %335 : vector<1x32xf32> to vector<16x32xf32>
    %337 = arith.mulf %329, %336 : vector<16x32xf32>
    %cst_95 = arith.constant 0.000000e+00 : f32
    %338 = vector.broadcast %cst_95 : f32 to vector<16x32xf32>
    %339 = arith.select %334, %337, %338 : vector<16x32xi1>, vector<16x32xf32>
    %340 = arith.addf %328, %339 : vector<16x32xf32>
    %c6_i32_96 = arith.constant 6 : i32
    %341 = tpu.dynamic_rotate %282 by %c6_i32_96 dim 0 : vector<16x32xf32>, i32 -> vector<16x32xf32>
    %c6_i32_97 = arith.constant 6 : i32
    %342 = vector.broadcast %c6_i32_97 : i32 to vector<16x32xi32>
    %343 = arith.cmpi sge, %300, %342 : vector<16x32xi32>
    %c8_i32_98 = arith.constant 8 : i32
    %344 = vector.broadcast %c8_i32_98 : i32 to vector<16x32xi32>
    %345 = arith.cmpi slt, %300, %344 : vector<16x32xi32>
    %346 = arith.andi %343, %345 : vector<16x32xi1>
    %347 = vector.extract_strided_slice %283 {offsets = [4, 0], sizes = [1, 32], strides = [1, 1]} : vector<31x32xf32> to vector<1x32xf32>
    %348 = vector.broadcast %347 : vector<1x32xf32> to vector<16x32xf32>
    %349 = arith.mulf %341, %348 : vector<16x32xf32>
    %cst_99 = arith.constant 0.000000e+00 : f32
    %350 = vector.broadcast %cst_99 : f32 to vector<16x32xf32>
    %351 = arith.select %346, %349, %350 : vector<16x32xi1>, vector<16x32xf32>
    %352 = arith.addf %340, %351 : vector<16x32xf32>
    %c5_i32 = arith.constant 5 : i32
    %353 = tpu.dynamic_rotate %281 by %c5_i32 dim 0 : vector<16x32xf32>, i32 -> vector<16x32xf32>
    %c5_i32_100 = arith.constant 5 : i32
    %354 = vector.broadcast %c5_i32_100 : i32 to vector<16x32xi32>
    %355 = arith.cmpi sge, %300, %354 : vector<16x32xi32>
    %c8_i32_101 = arith.constant 8 : i32
    %356 = vector.broadcast %c8_i32_101 : i32 to vector<16x32xi32>
    %357 = arith.cmpi slt, %300, %356 : vector<16x32xi32>
    %358 = arith.andi %355, %357 : vector<16x32xi1>
    %359 = vector.extract_strided_slice %283 {offsets = [5, 0], sizes = [1, 32], strides = [1, 1]} : vector<31x32xf32> to vector<1x32xf32>
    %360 = vector.broadcast %359 : vector<1x32xf32> to vector<16x32xf32>
    %361 = arith.mulf %353, %360 : vector<16x32xf32>
    %cst_102 = arith.constant 0.000000e+00 : f32
    %362 = vector.broadcast %cst_102 : f32 to vector<16x32xf32>
    %363 = arith.select %358, %361, %362 : vector<16x32xi1>, vector<16x32xf32>
    %364 = arith.addf %352, %363 : vector<16x32xf32>
    %c5_i32_103 = arith.constant 5 : i32
    %365 = tpu.dynamic_rotate %282 by %c5_i32_103 dim 0 : vector<16x32xf32>, i32 -> vector<16x32xf32>
    %c5_i32_104 = arith.constant 5 : i32
    %366 = vector.broadcast %c5_i32_104 : i32 to vector<16x32xi32>
    %367 = arith.cmpi sge, %300, %366 : vector<16x32xi32>
    %c8_i32_105 = arith.constant 8 : i32
    %368 = vector.broadcast %c8_i32_105 : i32 to vector<16x32xi32>
    %369 = arith.cmpi slt, %300, %368 : vector<16x32xi32>
    %370 = arith.andi %367, %369 : vector<16x32xi1>
    %371 = vector.extract_strided_slice %283 {offsets = [6, 0], sizes = [1, 32], strides = [1, 1]} : vector<31x32xf32> to vector<1x32xf32>
    %372 = vector.broadcast %371 : vector<1x32xf32> to vector<16x32xf32>
    %373 = arith.mulf %365, %372 : vector<16x32xf32>
    %cst_106 = arith.constant 0.000000e+00 : f32
    %374 = vector.broadcast %cst_106 : f32 to vector<16x32xf32>
    %375 = arith.select %370, %373, %374 : vector<16x32xi1>, vector<16x32xf32>
    %376 = arith.addf %364, %375 : vector<16x32xf32>
    %c4_i32 = arith.constant 4 : i32
    %377 = tpu.dynamic_rotate %281 by %c4_i32 dim 0 : vector<16x32xf32>, i32 -> vector<16x32xf32>
    %c4_i32_107 = arith.constant 4 : i32
    %378 = vector.broadcast %c4_i32_107 : i32 to vector<16x32xi32>
    %379 = arith.cmpi sge, %300, %378 : vector<16x32xi32>
    %c8_i32_108 = arith.constant 8 : i32
    %380 = vector.broadcast %c8_i32_108 : i32 to vector<16x32xi32>
    %381 = arith.cmpi slt, %300, %380 : vector<16x32xi32>
    %382 = arith.andi %379, %381 : vector<16x32xi1>
    %383 = vector.extract_strided_slice %283 {offsets = [7, 0], sizes = [1, 32], strides = [1, 1]} : vector<31x32xf32> to vector<1x32xf32>
    %384 = vector.broadcast %383 : vector<1x32xf32> to vector<16x32xf32>
    %385 = arith.mulf %377, %384 : vector<16x32xf32>
    %cst_109 = arith.constant 0.000000e+00 : f32
    %386 = vector.broadcast %cst_109 : f32 to vector<16x32xf32>
    %387 = arith.select %382, %385, %386 : vector<16x32xi1>, vector<16x32xf32>
    %388 = arith.addf %376, %387 : vector<16x32xf32>
    %c4_i32_110 = arith.constant 4 : i32
    %389 = tpu.dynamic_rotate %282 by %c4_i32_110 dim 0 : vector<16x32xf32>, i32 -> vector<16x32xf32>
    %c4_i32_111 = arith.constant 4 : i32
    %390 = vector.broadcast %c4_i32_111 : i32 to vector<16x32xi32>
    %391 = arith.cmpi sge, %300, %390 : vector<16x32xi32>
    %c8_i32_112 = arith.constant 8 : i32
    %392 = vector.broadcast %c8_i32_112 : i32 to vector<16x32xi32>
    %393 = arith.cmpi slt, %300, %392 : vector<16x32xi32>
    %394 = arith.andi %391, %393 : vector<16x32xi1>
    %395 = vector.extract_strided_slice %283 {offsets = [8, 0], sizes = [1, 32], strides = [1, 1]} : vector<31x32xf32> to vector<1x32xf32>
    %396 = vector.broadcast %395 : vector<1x32xf32> to vector<16x32xf32>
    %397 = arith.mulf %389, %396 : vector<16x32xf32>
    %cst_113 = arith.constant 0.000000e+00 : f32
    %398 = vector.broadcast %cst_113 : f32 to vector<16x32xf32>
    %399 = arith.select %394, %397, %398 : vector<16x32xi1>, vector<16x32xf32>
    %400 = arith.addf %388, %399 : vector<16x32xf32>
    %c3_i32 = arith.constant 3 : i32
    %401 = tpu.dynamic_rotate %281 by %c3_i32 dim 0 : vector<16x32xf32>, i32 -> vector<16x32xf32>
    %c3_i32_114 = arith.constant 3 : i32
    %402 = vector.broadcast %c3_i32_114 : i32 to vector<16x32xi32>
    %403 = arith.cmpi sge, %300, %402 : vector<16x32xi32>
    %c8_i32_115 = arith.constant 8 : i32
    %404 = vector.broadcast %c8_i32_115 : i32 to vector<16x32xi32>
    %405 = arith.cmpi slt, %300, %404 : vector<16x32xi32>
    %406 = arith.andi %403, %405 : vector<16x32xi1>
    %407 = vector.extract_strided_slice %283 {offsets = [9, 0], sizes = [1, 32], strides = [1, 1]} : vector<31x32xf32> to vector<1x32xf32>
    %408 = vector.broadcast %407 : vector<1x32xf32> to vector<16x32xf32>
    %409 = arith.mulf %401, %408 : vector<16x32xf32>
    %cst_116 = arith.constant 0.000000e+00 : f32
    %410 = vector.broadcast %cst_116 : f32 to vector<16x32xf32>
    %411 = arith.select %406, %409, %410 : vector<16x32xi1>, vector<16x32xf32>
    %412 = arith.addf %400, %411 : vector<16x32xf32>
    %c3_i32_117 = arith.constant 3 : i32
    %413 = tpu.dynamic_rotate %282 by %c3_i32_117 dim 0 : vector<16x32xf32>, i32 -> vector<16x32xf32>
    %c3_i32_118 = arith.constant 3 : i32
    %414 = vector.broadcast %c3_i32_118 : i32 to vector<16x32xi32>
    %415 = arith.cmpi sge, %300, %414 : vector<16x32xi32>
    %c8_i32_119 = arith.constant 8 : i32
    %416 = vector.broadcast %c8_i32_119 : i32 to vector<16x32xi32>
    %417 = arith.cmpi slt, %300, %416 : vector<16x32xi32>
    %418 = arith.andi %415, %417 : vector<16x32xi1>
    %419 = vector.extract_strided_slice %283 {offsets = [10, 0], sizes = [1, 32], strides = [1, 1]} : vector<31x32xf32> to vector<1x32xf32>
    %420 = vector.broadcast %419 : vector<1x32xf32> to vector<16x32xf32>
    %421 = arith.mulf %413, %420 : vector<16x32xf32>
    %cst_120 = arith.constant 0.000000e+00 : f32
    %422 = vector.broadcast %cst_120 : f32 to vector<16x32xf32>
    %423 = arith.select %418, %421, %422 : vector<16x32xi1>, vector<16x32xf32>
    %424 = arith.addf %412, %423 : vector<16x32xf32>
    %c2_i32 = arith.constant 2 : i32
    %425 = tpu.dynamic_rotate %281 by %c2_i32 dim 0 : vector<16x32xf32>, i32 -> vector<16x32xf32>
    %c2_i32_121 = arith.constant 2 : i32
    %426 = vector.broadcast %c2_i32_121 : i32 to vector<16x32xi32>
    %427 = arith.cmpi sge, %300, %426 : vector<16x32xi32>
    %c8_i32_122 = arith.constant 8 : i32
    %428 = vector.broadcast %c8_i32_122 : i32 to vector<16x32xi32>
    %429 = arith.cmpi slt, %300, %428 : vector<16x32xi32>
    %430 = arith.andi %427, %429 : vector<16x32xi1>
    %431 = vector.extract_strided_slice %283 {offsets = [11, 0], sizes = [1, 32], strides = [1, 1]} : vector<31x32xf32> to vector<1x32xf32>
    %432 = vector.broadcast %431 : vector<1x32xf32> to vector<16x32xf32>
    %433 = arith.mulf %425, %432 : vector<16x32xf32>
    %cst_123 = arith.constant 0.000000e+00 : f32
    %434 = vector.broadcast %cst_123 : f32 to vector<16x32xf32>
    %435 = arith.select %430, %433, %434 : vector<16x32xi1>, vector<16x32xf32>
    %436 = arith.addf %424, %435 : vector<16x32xf32>
    %c2_i32_124 = arith.constant 2 : i32
    %437 = tpu.dynamic_rotate %282 by %c2_i32_124 dim 0 : vector<16x32xf32>, i32 -> vector<16x32xf32>
    %c2_i32_125 = arith.constant 2 : i32
    %438 = vector.broadcast %c2_i32_125 : i32 to vector<16x32xi32>
    %439 = arith.cmpi sge, %300, %438 : vector<16x32xi32>
    %c8_i32_126 = arith.constant 8 : i32
    %440 = vector.broadcast %c8_i32_126 : i32 to vector<16x32xi32>
    %441 = arith.cmpi slt, %300, %440 : vector<16x32xi32>
    %442 = arith.andi %439, %441 : vector<16x32xi1>
    %443 = vector.extract_strided_slice %283 {offsets = [12, 0], sizes = [1, 32], strides = [1, 1]} : vector<31x32xf32> to vector<1x32xf32>
    %444 = vector.broadcast %443 : vector<1x32xf32> to vector<16x32xf32>
    %445 = arith.mulf %437, %444 : vector<16x32xf32>
    %cst_127 = arith.constant 0.000000e+00 : f32
    %446 = vector.broadcast %cst_127 : f32 to vector<16x32xf32>
    %447 = arith.select %442, %445, %446 : vector<16x32xi1>, vector<16x32xf32>
    %448 = arith.addf %436, %447 : vector<16x32xf32>
    %c1_i32_128 = arith.constant 1 : i32
    %449 = tpu.dynamic_rotate %281 by %c1_i32_128 dim 0 : vector<16x32xf32>, i32 -> vector<16x32xf32>
    %c1_i32_129 = arith.constant 1 : i32
    %450 = vector.broadcast %c1_i32_129 : i32 to vector<16x32xi32>
    %451 = arith.cmpi sge, %300, %450 : vector<16x32xi32>
    %c8_i32_130 = arith.constant 8 : i32
    %452 = vector.broadcast %c8_i32_130 : i32 to vector<16x32xi32>
    %453 = arith.cmpi slt, %300, %452 : vector<16x32xi32>
    %454 = arith.andi %451, %453 : vector<16x32xi1>
    %455 = vector.extract_strided_slice %283 {offsets = [13, 0], sizes = [1, 32], strides = [1, 1]} : vector<31x32xf32> to vector<1x32xf32>
    %456 = vector.broadcast %455 : vector<1x32xf32> to vector<16x32xf32>
    %457 = arith.mulf %449, %456 : vector<16x32xf32>
    %cst_131 = arith.constant 0.000000e+00 : f32
    %458 = vector.broadcast %cst_131 : f32 to vector<16x32xf32>
    %459 = arith.select %454, %457, %458 : vector<16x32xi1>, vector<16x32xf32>
    %460 = arith.addf %448, %459 : vector<16x32xf32>
    %c1_i32_132 = arith.constant 1 : i32
    %461 = tpu.dynamic_rotate %282 by %c1_i32_132 dim 0 : vector<16x32xf32>, i32 -> vector<16x32xf32>
    %c1_i32_133 = arith.constant 1 : i32
    %462 = vector.broadcast %c1_i32_133 : i32 to vector<16x32xi32>
    %463 = arith.cmpi sge, %300, %462 : vector<16x32xi32>
    %c8_i32_134 = arith.constant 8 : i32
    %464 = vector.broadcast %c8_i32_134 : i32 to vector<16x32xi32>
    %465 = arith.cmpi slt, %300, %464 : vector<16x32xi32>
    %466 = arith.andi %463, %465 : vector<16x32xi1>
    %467 = vector.extract_strided_slice %283 {offsets = [14, 0], sizes = [1, 32], strides = [1, 1]} : vector<31x32xf32> to vector<1x32xf32>
    %468 = vector.broadcast %467 : vector<1x32xf32> to vector<16x32xf32>
    %469 = arith.mulf %461, %468 : vector<16x32xf32>
    %cst_135 = arith.constant 0.000000e+00 : f32
    %470 = vector.broadcast %cst_135 : f32 to vector<16x32xf32>
    %471 = arith.select %466, %469, %470 : vector<16x32xi1>, vector<16x32xf32>
    %472 = arith.addf %460, %471 : vector<16x32xf32>
    %c0_i32_136 = arith.constant 0 : i32
    %473 = vector.broadcast %c0_i32_136 : i32 to vector<16x32xi32>
    %474 = arith.cmpi sge, %300, %473 : vector<16x32xi32>
    %c8_i32_137 = arith.constant 8 : i32
    %475 = vector.broadcast %c8_i32_137 : i32 to vector<16x32xi32>
    %476 = arith.cmpi slt, %300, %475 : vector<16x32xi32>
    %477 = arith.andi %474, %476 : vector<16x32xi1>
    %478 = vector.extract_strided_slice %283 {offsets = [15, 0], sizes = [1, 32], strides = [1, 1]} : vector<31x32xf32> to vector<1x32xf32>
    %479 = vector.broadcast %478 : vector<1x32xf32> to vector<16x32xf32>
    %480 = arith.mulf %281, %479 : vector<16x32xf32>
    %cst_138 = arith.constant 0.000000e+00 : f32
    %481 = vector.broadcast %cst_138 : f32 to vector<16x32xf32>
    %482 = arith.select %477, %480, %481 : vector<16x32xi1>, vector<16x32xf32>
    %483 = arith.addf %472, %482 : vector<16x32xf32>
    %c0_i32_139 = arith.constant 0 : i32
    %484 = vector.broadcast %c0_i32_139 : i32 to vector<16x32xi32>
    %485 = arith.cmpi sge, %300, %484 : vector<16x32xi32>
    %c8_i32_140 = arith.constant 8 : i32
    %486 = vector.broadcast %c8_i32_140 : i32 to vector<16x32xi32>
    %487 = arith.cmpi slt, %300, %486 : vector<16x32xi32>
    %488 = arith.andi %485, %487 : vector<16x32xi1>
    %489 = vector.extract_strided_slice %283 {offsets = [16, 0], sizes = [1, 32], strides = [1, 1]} : vector<31x32xf32> to vector<1x32xf32>
    %490 = vector.broadcast %489 : vector<1x32xf32> to vector<16x32xf32>
    %491 = arith.mulf %282, %490 : vector<16x32xf32>
    %cst_141 = arith.constant 0.000000e+00 : f32
    %492 = vector.broadcast %cst_141 : f32 to vector<16x32xf32>
    %493 = arith.select %488, %491, %492 : vector<16x32xi1>, vector<16x32xf32>
    %494 = arith.addf %483, %493 : vector<16x32xf32>
    %c15_i32 = arith.constant 15 : i32
    %495 = tpu.dynamic_rotate %281 by %c15_i32 dim 0 : vector<16x32xf32>, i32 -> vector<16x32xf32>
    %c0_i32_142 = arith.constant 0 : i32
    %496 = vector.broadcast %c0_i32_142 : i32 to vector<16x32xi32>
    %497 = arith.cmpi sge, %300, %496 : vector<16x32xi32>
    %c7_i32_143 = arith.constant 7 : i32
    %498 = vector.broadcast %c7_i32_143 : i32 to vector<16x32xi32>
    %499 = arith.cmpi slt, %300, %498 : vector<16x32xi32>
    %500 = arith.andi %497, %499 : vector<16x32xi1>
    %501 = vector.extract_strided_slice %283 {offsets = [17, 0], sizes = [1, 32], strides = [1, 1]} : vector<31x32xf32> to vector<1x32xf32>
    %502 = vector.broadcast %501 : vector<1x32xf32> to vector<16x32xf32>
    %503 = arith.mulf %495, %502 : vector<16x32xf32>
    %cst_144 = arith.constant 0.000000e+00 : f32
    %504 = vector.broadcast %cst_144 : f32 to vector<16x32xf32>
    %505 = arith.select %500, %503, %504 : vector<16x32xi1>, vector<16x32xf32>
    %506 = arith.addf %494, %505 : vector<16x32xf32>
    %c15_i32_145 = arith.constant 15 : i32
    %507 = tpu.dynamic_rotate %282 by %c15_i32_145 dim 0 : vector<16x32xf32>, i32 -> vector<16x32xf32>
    %c0_i32_146 = arith.constant 0 : i32
    %508 = vector.broadcast %c0_i32_146 : i32 to vector<16x32xi32>
    %509 = arith.cmpi sge, %300, %508 : vector<16x32xi32>
    %c7_i32_147 = arith.constant 7 : i32
    %510 = vector.broadcast %c7_i32_147 : i32 to vector<16x32xi32>
    %511 = arith.cmpi slt, %300, %510 : vector<16x32xi32>
    %512 = arith.andi %509, %511 : vector<16x32xi1>
    %513 = vector.extract_strided_slice %283 {offsets = [18, 0], sizes = [1, 32], strides = [1, 1]} : vector<31x32xf32> to vector<1x32xf32>
    %514 = vector.broadcast %513 : vector<1x32xf32> to vector<16x32xf32>
    %515 = arith.mulf %507, %514 : vector<16x32xf32>
    %cst_148 = arith.constant 0.000000e+00 : f32
    %516 = vector.broadcast %cst_148 : f32 to vector<16x32xf32>
    %517 = arith.select %512, %515, %516 : vector<16x32xi1>, vector<16x32xf32>
    %518 = arith.addf %506, %517 : vector<16x32xf32>
    %c14_i32 = arith.constant 14 : i32
    %519 = tpu.dynamic_rotate %281 by %c14_i32 dim 0 : vector<16x32xf32>, i32 -> vector<16x32xf32>
    %c0_i32_149 = arith.constant 0 : i32
    %520 = vector.broadcast %c0_i32_149 : i32 to vector<16x32xi32>
    %521 = arith.cmpi sge, %300, %520 : vector<16x32xi32>
    %c6_i32_150 = arith.constant 6 : i32
    %522 = vector.broadcast %c6_i32_150 : i32 to vector<16x32xi32>
    %523 = arith.cmpi slt, %300, %522 : vector<16x32xi32>
    %524 = arith.andi %521, %523 : vector<16x32xi1>
    %525 = vector.extract_strided_slice %283 {offsets = [19, 0], sizes = [1, 32], strides = [1, 1]} : vector<31x32xf32> to vector<1x32xf32>
    %526 = vector.broadcast %525 : vector<1x32xf32> to vector<16x32xf32>
    %527 = arith.mulf %519, %526 : vector<16x32xf32>
    %cst_151 = arith.constant 0.000000e+00 : f32
    %528 = vector.broadcast %cst_151 : f32 to vector<16x32xf32>
    %529 = arith.select %524, %527, %528 : vector<16x32xi1>, vector<16x32xf32>
    %530 = arith.addf %518, %529 : vector<16x32xf32>
    %c14_i32_152 = arith.constant 14 : i32
    %531 = tpu.dynamic_rotate %282 by %c14_i32_152 dim 0 : vector<16x32xf32>, i32 -> vector<16x32xf32>
    %c0_i32_153 = arith.constant 0 : i32
    %532 = vector.broadcast %c0_i32_153 : i32 to vector<16x32xi32>
    %533 = arith.cmpi sge, %300, %532 : vector<16x32xi32>
    %c6_i32_154 = arith.constant 6 : i32
    %534 = vector.broadcast %c6_i32_154 : i32 to vector<16x32xi32>
    %535 = arith.cmpi slt, %300, %534 : vector<16x32xi32>
    %536 = arith.andi %533, %535 : vector<16x32xi1>
    %537 = vector.extract_strided_slice %283 {offsets = [20, 0], sizes = [1, 32], strides = [1, 1]} : vector<31x32xf32> to vector<1x32xf32>
    %538 = vector.broadcast %537 : vector<1x32xf32> to vector<16x32xf32>
    %539 = arith.mulf %531, %538 : vector<16x32xf32>
    %cst_155 = arith.constant 0.000000e+00 : f32
    %540 = vector.broadcast %cst_155 : f32 to vector<16x32xf32>
    %541 = arith.select %536, %539, %540 : vector<16x32xi1>, vector<16x32xf32>
    %542 = arith.addf %530, %541 : vector<16x32xf32>
    %c13_i32 = arith.constant 13 : i32
    %543 = tpu.dynamic_rotate %281 by %c13_i32 dim 0 : vector<16x32xf32>, i32 -> vector<16x32xf32>
    %c0_i32_156 = arith.constant 0 : i32
    %544 = vector.broadcast %c0_i32_156 : i32 to vector<16x32xi32>
    %545 = arith.cmpi sge, %300, %544 : vector<16x32xi32>
    %c5_i32_157 = arith.constant 5 : i32
    %546 = vector.broadcast %c5_i32_157 : i32 to vector<16x32xi32>
    %547 = arith.cmpi slt, %300, %546 : vector<16x32xi32>
    %548 = arith.andi %545, %547 : vector<16x32xi1>
    %549 = vector.extract_strided_slice %283 {offsets = [21, 0], sizes = [1, 32], strides = [1, 1]} : vector<31x32xf32> to vector<1x32xf32>
    %550 = vector.broadcast %549 : vector<1x32xf32> to vector<16x32xf32>
    %551 = arith.mulf %543, %550 : vector<16x32xf32>
    %cst_158 = arith.constant 0.000000e+00 : f32
    %552 = vector.broadcast %cst_158 : f32 to vector<16x32xf32>
    %553 = arith.select %548, %551, %552 : vector<16x32xi1>, vector<16x32xf32>
    %554 = arith.addf %542, %553 : vector<16x32xf32>
    %c13_i32_159 = arith.constant 13 : i32
    %555 = tpu.dynamic_rotate %282 by %c13_i32_159 dim 0 : vector<16x32xf32>, i32 -> vector<16x32xf32>
    %c0_i32_160 = arith.constant 0 : i32
    %556 = vector.broadcast %c0_i32_160 : i32 to vector<16x32xi32>
    %557 = arith.cmpi sge, %300, %556 : vector<16x32xi32>
    %c5_i32_161 = arith.constant 5 : i32
    %558 = vector.broadcast %c5_i32_161 : i32 to vector<16x32xi32>
    %559 = arith.cmpi slt, %300, %558 : vector<16x32xi32>
    %560 = arith.andi %557, %559 : vector<16x32xi1>
    %561 = vector.extract_strided_slice %283 {offsets = [22, 0], sizes = [1, 32], strides = [1, 1]} : vector<31x32xf32> to vector<1x32xf32>
    %562 = vector.broadcast %561 : vector<1x32xf32> to vector<16x32xf32>
    %563 = arith.mulf %555, %562 : vector<16x32xf32>
    %cst_162 = arith.constant 0.000000e+00 : f32
    %564 = vector.broadcast %cst_162 : f32 to vector<16x32xf32>
    %565 = arith.select %560, %563, %564 : vector<16x32xi1>, vector<16x32xf32>
    %566 = arith.addf %554, %565 : vector<16x32xf32>
    %c12_i32 = arith.constant 12 : i32
    %567 = tpu.dynamic_rotate %281 by %c12_i32 dim 0 : vector<16x32xf32>, i32 -> vector<16x32xf32>
    %c0_i32_163 = arith.constant 0 : i32
    %568 = vector.broadcast %c0_i32_163 : i32 to vector<16x32xi32>
    %569 = arith.cmpi sge, %300, %568 : vector<16x32xi32>
    %c4_i32_164 = arith.constant 4 : i32
    %570 = vector.broadcast %c4_i32_164 : i32 to vector<16x32xi32>
    %571 = arith.cmpi slt, %300, %570 : vector<16x32xi32>
    %572 = arith.andi %569, %571 : vector<16x32xi1>
    %573 = vector.extract_strided_slice %283 {offsets = [23, 0], sizes = [1, 32], strides = [1, 1]} : vector<31x32xf32> to vector<1x32xf32>
    %574 = vector.broadcast %573 : vector<1x32xf32> to vector<16x32xf32>
    %575 = arith.mulf %567, %574 : vector<16x32xf32>
    %cst_165 = arith.constant 0.000000e+00 : f32
    %576 = vector.broadcast %cst_165 : f32 to vector<16x32xf32>
    %577 = arith.select %572, %575, %576 : vector<16x32xi1>, vector<16x32xf32>
    %578 = arith.addf %566, %577 : vector<16x32xf32>
    %c12_i32_166 = arith.constant 12 : i32
    %579 = tpu.dynamic_rotate %282 by %c12_i32_166 dim 0 : vector<16x32xf32>, i32 -> vector<16x32xf32>
    %c0_i32_167 = arith.constant 0 : i32
    %580 = vector.broadcast %c0_i32_167 : i32 to vector<16x32xi32>
    %581 = arith.cmpi sge, %300, %580 : vector<16x32xi32>
    %c4_i32_168 = arith.constant 4 : i32
    %582 = vector.broadcast %c4_i32_168 : i32 to vector<16x32xi32>
    %583 = arith.cmpi slt, %300, %582 : vector<16x32xi32>
    %584 = arith.andi %581, %583 : vector<16x32xi1>
    %585 = vector.extract_strided_slice %283 {offsets = [24, 0], sizes = [1, 32], strides = [1, 1]} : vector<31x32xf32> to vector<1x32xf32>
    %586 = vector.broadcast %585 : vector<1x32xf32> to vector<16x32xf32>
    %587 = arith.mulf %579, %586 : vector<16x32xf32>
    %cst_169 = arith.constant 0.000000e+00 : f32
    %588 = vector.broadcast %cst_169 : f32 to vector<16x32xf32>
    %589 = arith.select %584, %587, %588 : vector<16x32xi1>, vector<16x32xf32>
    %590 = arith.addf %578, %589 : vector<16x32xf32>
    %c11_i32 = arith.constant 11 : i32
    %591 = tpu.dynamic_rotate %281 by %c11_i32 dim 0 : vector<16x32xf32>, i32 -> vector<16x32xf32>
    %c0_i32_170 = arith.constant 0 : i32
    %592 = vector.broadcast %c0_i32_170 : i32 to vector<16x32xi32>
    %593 = arith.cmpi sge, %300, %592 : vector<16x32xi32>
    %c3_i32_171 = arith.constant 3 : i32
    %594 = vector.broadcast %c3_i32_171 : i32 to vector<16x32xi32>
    %595 = arith.cmpi slt, %300, %594 : vector<16x32xi32>
    %596 = arith.andi %593, %595 : vector<16x32xi1>
    %597 = vector.extract_strided_slice %283 {offsets = [25, 0], sizes = [1, 32], strides = [1, 1]} : vector<31x32xf32> to vector<1x32xf32>
    %598 = vector.broadcast %597 : vector<1x32xf32> to vector<16x32xf32>
    %599 = arith.mulf %591, %598 : vector<16x32xf32>
    %cst_172 = arith.constant 0.000000e+00 : f32
    %600 = vector.broadcast %cst_172 : f32 to vector<16x32xf32>
    %601 = arith.select %596, %599, %600 : vector<16x32xi1>, vector<16x32xf32>
    %602 = arith.addf %590, %601 : vector<16x32xf32>
    %c11_i32_173 = arith.constant 11 : i32
    %603 = tpu.dynamic_rotate %282 by %c11_i32_173 dim 0 : vector<16x32xf32>, i32 -> vector<16x32xf32>
    %c0_i32_174 = arith.constant 0 : i32
    %604 = vector.broadcast %c0_i32_174 : i32 to vector<16x32xi32>
    %605 = arith.cmpi sge, %300, %604 : vector<16x32xi32>
    %c3_i32_175 = arith.constant 3 : i32
    %606 = vector.broadcast %c3_i32_175 : i32 to vector<16x32xi32>
    %607 = arith.cmpi slt, %300, %606 : vector<16x32xi32>
    %608 = arith.andi %605, %607 : vector<16x32xi1>
    %609 = vector.extract_strided_slice %283 {offsets = [26, 0], sizes = [1, 32], strides = [1, 1]} : vector<31x32xf32> to vector<1x32xf32>
    %610 = vector.broadcast %609 : vector<1x32xf32> to vector<16x32xf32>
    %611 = arith.mulf %603, %610 : vector<16x32xf32>
    %cst_176 = arith.constant 0.000000e+00 : f32
    %612 = vector.broadcast %cst_176 : f32 to vector<16x32xf32>
    %613 = arith.select %608, %611, %612 : vector<16x32xi1>, vector<16x32xf32>
    %614 = arith.addf %602, %613 : vector<16x32xf32>
    %c10_i32 = arith.constant 10 : i32
    %615 = tpu.dynamic_rotate %281 by %c10_i32 dim 0 : vector<16x32xf32>, i32 -> vector<16x32xf32>
    %c0_i32_177 = arith.constant 0 : i32
    %616 = vector.broadcast %c0_i32_177 : i32 to vector<16x32xi32>
    %617 = arith.cmpi sge, %300, %616 : vector<16x32xi32>
    %c2_i32_178 = arith.constant 2 : i32
    %618 = vector.broadcast %c2_i32_178 : i32 to vector<16x32xi32>
    %619 = arith.cmpi slt, %300, %618 : vector<16x32xi32>
    %620 = arith.andi %617, %619 : vector<16x32xi1>
    %621 = vector.extract_strided_slice %283 {offsets = [27, 0], sizes = [1, 32], strides = [1, 1]} : vector<31x32xf32> to vector<1x32xf32>
    %622 = vector.broadcast %621 : vector<1x32xf32> to vector<16x32xf32>
    %623 = arith.mulf %615, %622 : vector<16x32xf32>
    %cst_179 = arith.constant 0.000000e+00 : f32
    %624 = vector.broadcast %cst_179 : f32 to vector<16x32xf32>
    %625 = arith.select %620, %623, %624 : vector<16x32xi1>, vector<16x32xf32>
    %626 = arith.addf %614, %625 : vector<16x32xf32>
    %c10_i32_180 = arith.constant 10 : i32
    %627 = tpu.dynamic_rotate %282 by %c10_i32_180 dim 0 : vector<16x32xf32>, i32 -> vector<16x32xf32>
    %c0_i32_181 = arith.constant 0 : i32
    %628 = vector.broadcast %c0_i32_181 : i32 to vector<16x32xi32>
    %629 = arith.cmpi sge, %300, %628 : vector<16x32xi32>
    %c2_i32_182 = arith.constant 2 : i32
    %630 = vector.broadcast %c2_i32_182 : i32 to vector<16x32xi32>
    %631 = arith.cmpi slt, %300, %630 : vector<16x32xi32>
    %632 = arith.andi %629, %631 : vector<16x32xi1>
    %633 = vector.extract_strided_slice %283 {offsets = [28, 0], sizes = [1, 32], strides = [1, 1]} : vector<31x32xf32> to vector<1x32xf32>
    %634 = vector.broadcast %633 : vector<1x32xf32> to vector<16x32xf32>
    %635 = arith.mulf %627, %634 : vector<16x32xf32>
    %cst_183 = arith.constant 0.000000e+00 : f32
    %636 = vector.broadcast %cst_183 : f32 to vector<16x32xf32>
    %637 = arith.select %632, %635, %636 : vector<16x32xi1>, vector<16x32xf32>
    %638 = arith.addf %626, %637 : vector<16x32xf32>
    %c9_i32 = arith.constant 9 : i32
    %639 = tpu.dynamic_rotate %281 by %c9_i32 dim 0 : vector<16x32xf32>, i32 -> vector<16x32xf32>
    %c0_i32_184 = arith.constant 0 : i32
    %640 = vector.broadcast %c0_i32_184 : i32 to vector<16x32xi32>
    %641 = arith.cmpi sge, %300, %640 : vector<16x32xi32>
    %c1_i32_185 = arith.constant 1 : i32
    %642 = vector.broadcast %c1_i32_185 : i32 to vector<16x32xi32>
    %643 = arith.cmpi slt, %300, %642 : vector<16x32xi32>
    %644 = arith.andi %641, %643 : vector<16x32xi1>
    %645 = vector.extract_strided_slice %283 {offsets = [29, 0], sizes = [1, 32], strides = [1, 1]} : vector<31x32xf32> to vector<1x32xf32>
    %646 = vector.broadcast %645 : vector<1x32xf32> to vector<16x32xf32>
    %647 = arith.mulf %639, %646 : vector<16x32xf32>
    %cst_186 = arith.constant 0.000000e+00 : f32
    %648 = vector.broadcast %cst_186 : f32 to vector<16x32xf32>
    %649 = arith.select %644, %647, %648 : vector<16x32xi1>, vector<16x32xf32>
    %650 = arith.addf %638, %649 : vector<16x32xf32>
    %c9_i32_187 = arith.constant 9 : i32
    %651 = tpu.dynamic_rotate %282 by %c9_i32_187 dim 0 : vector<16x32xf32>, i32 -> vector<16x32xf32>
    %c0_i32_188 = arith.constant 0 : i32
    %652 = vector.broadcast %c0_i32_188 : i32 to vector<16x32xi32>
    %653 = arith.cmpi sge, %300, %652 : vector<16x32xi32>
    %c1_i32_189 = arith.constant 1 : i32
    %654 = vector.broadcast %c1_i32_189 : i32 to vector<16x32xi32>
    %655 = arith.cmpi slt, %300, %654 : vector<16x32xi32>
    %656 = arith.andi %653, %655 : vector<16x32xi1>
    %657 = vector.extract_strided_slice %283 {offsets = [30, 0], sizes = [1, 32], strides = [1, 1]} : vector<31x32xf32> to vector<1x32xf32>
    %658 = vector.broadcast %657 : vector<1x32xf32> to vector<16x32xf32>
    %659 = arith.mulf %651, %658 : vector<16x32xf32>
    %cst_190 = arith.constant 0.000000e+00 : f32
    %660 = vector.broadcast %cst_190 : f32 to vector<16x32xf32>
    %661 = arith.select %656, %659, %660 : vector<16x32xi1>, vector<16x32xf32>
    %662 = arith.addf %650, %661 : vector<16x32xf32>
    %cst_191 = arith.constant 0.000000e+00 : f32
    %663 = vector.broadcast %cst_191 : f32 to vector<16x32xf32>
    %664 = vector.extract_strided_slice %0 {offsets = [10, 0], sizes = [1, 32], strides = [1, 1]} : vector<24x128xf32> to vector<1x32xf32>
    %665 = vector.broadcast %664 : vector<1x32xf32> to vector<16x32xf32>
    %666 = arith.addf %663, %665 : vector<16x32xf32>
    %c7_i32_192 = arith.constant 7 : i32
    %667 = tpu.dynamic_rotate %281 by %c7_i32_192 dim 0 : vector<16x32xf32>, i32 -> vector<16x32xf32>
    %c7_i32_193 = arith.constant 7 : i32
    %668 = vector.broadcast %c7_i32_193 : i32 to vector<16x32xi32>
    %669 = arith.cmpi sge, %300, %668 : vector<16x32xi32>
    %c8_i32_194 = arith.constant 8 : i32
    %670 = vector.broadcast %c8_i32_194 : i32 to vector<16x32xi32>
    %671 = arith.cmpi slt, %300, %670 : vector<16x32xi32>
    %672 = arith.andi %669, %671 : vector<16x32xi1>
    %673 = vector.extract_strided_slice %283 {offsets = [0, 0], sizes = [1, 32], strides = [1, 1]} : vector<31x32xf32> to vector<1x32xf32>
    %674 = vector.broadcast %673 : vector<1x32xf32> to vector<16x32xf32>
    %675 = arith.mulf %667, %674 : vector<16x32xf32>
    %cst_195 = arith.constant 0.000000e+00 : f32
    %676 = vector.broadcast %cst_195 : f32 to vector<16x32xf32>
    %677 = arith.select %672, %675, %676 : vector<16x32xi1>, vector<16x32xf32>
    %678 = arith.addf %666, %677 : vector<16x32xf32>
    %c7_i32_196 = arith.constant 7 : i32
    %679 = tpu.dynamic_rotate %282 by %c7_i32_196 dim 0 : vector<16x32xf32>, i32 -> vector<16x32xf32>
    %c7_i32_197 = arith.constant 7 : i32
    %680 = vector.broadcast %c7_i32_197 : i32 to vector<16x32xi32>
    %681 = arith.cmpi sge, %300, %680 : vector<16x32xi32>
    %c8_i32_198 = arith.constant 8 : i32
    %682 = vector.broadcast %c8_i32_198 : i32 to vector<16x32xi32>
    %683 = arith.cmpi slt, %300, %682 : vector<16x32xi32>
    %684 = arith.andi %681, %683 : vector<16x32xi1>
    %685 = vector.extract_strided_slice %283 {offsets = [1, 0], sizes = [1, 32], strides = [1, 1]} : vector<31x32xf32> to vector<1x32xf32>
    %686 = vector.broadcast %685 : vector<1x32xf32> to vector<16x32xf32>
    %687 = arith.mulf %679, %686 : vector<16x32xf32>
    %cst_199 = arith.constant 0.000000e+00 : f32
    %688 = vector.broadcast %cst_199 : f32 to vector<16x32xf32>
    %689 = arith.select %684, %687, %688 : vector<16x32xi1>, vector<16x32xf32>
    %690 = arith.addf %678, %689 : vector<16x32xf32>
    %c6_i32_200 = arith.constant 6 : i32
    %691 = tpu.dynamic_rotate %281 by %c6_i32_200 dim 0 : vector<16x32xf32>, i32 -> vector<16x32xf32>
    %c6_i32_201 = arith.constant 6 : i32
    %692 = vector.broadcast %c6_i32_201 : i32 to vector<16x32xi32>
    %693 = arith.cmpi sge, %300, %692 : vector<16x32xi32>
    %c8_i32_202 = arith.constant 8 : i32
    %694 = vector.broadcast %c8_i32_202 : i32 to vector<16x32xi32>
    %695 = arith.cmpi slt, %300, %694 : vector<16x32xi32>
    %696 = arith.andi %693, %695 : vector<16x32xi1>
    %697 = vector.extract_strided_slice %283 {offsets = [2, 0], sizes = [1, 32], strides = [1, 1]} : vector<31x32xf32> to vector<1x32xf32>
    %698 = vector.broadcast %697 : vector<1x32xf32> to vector<16x32xf32>
    %699 = arith.mulf %691, %698 : vector<16x32xf32>
    %cst_203 = arith.constant 0.000000e+00 : f32
    %700 = vector.broadcast %cst_203 : f32 to vector<16x32xf32>
    %701 = arith.select %696, %699, %700 : vector<16x32xi1>, vector<16x32xf32>
    %702 = arith.addf %690, %701 : vector<16x32xf32>
    %c6_i32_204 = arith.constant 6 : i32
    %703 = tpu.dynamic_rotate %282 by %c6_i32_204 dim 0 : vector<16x32xf32>, i32 -> vector<16x32xf32>
    %c6_i32_205 = arith.constant 6 : i32
    %704 = vector.broadcast %c6_i32_205 : i32 to vector<16x32xi32>
    %705 = arith.cmpi sge, %300, %704 : vector<16x32xi32>
    %c8_i32_206 = arith.constant 8 : i32
    %706 = vector.broadcast %c8_i32_206 : i32 to vector<16x32xi32>
    %707 = arith.cmpi slt, %300, %706 : vector<16x32xi32>
    %708 = arith.andi %705, %707 : vector<16x32xi1>
    %709 = vector.extract_strided_slice %283 {offsets = [3, 0], sizes = [1, 32], strides = [1, 1]} : vector<31x32xf32> to vector<1x32xf32>
    %710 = vector.broadcast %709 : vector<1x32xf32> to vector<16x32xf32>
    %711 = arith.mulf %703, %710 : vector<16x32xf32>
    %cst_207 = arith.constant 0.000000e+00 : f32
    %712 = vector.broadcast %cst_207 : f32 to vector<16x32xf32>
    %713 = arith.select %708, %711, %712 : vector<16x32xi1>, vector<16x32xf32>
    %714 = arith.addf %702, %713 : vector<16x32xf32>
    %c5_i32_208 = arith.constant 5 : i32
    %715 = tpu.dynamic_rotate %281 by %c5_i32_208 dim 0 : vector<16x32xf32>, i32 -> vector<16x32xf32>
    %c5_i32_209 = arith.constant 5 : i32
    %716 = vector.broadcast %c5_i32_209 : i32 to vector<16x32xi32>
    %717 = arith.cmpi sge, %300, %716 : vector<16x32xi32>
    %c8_i32_210 = arith.constant 8 : i32
    %718 = vector.broadcast %c8_i32_210 : i32 to vector<16x32xi32>
    %719 = arith.cmpi slt, %300, %718 : vector<16x32xi32>
    %720 = arith.andi %717, %719 : vector<16x32xi1>
    %721 = vector.extract_strided_slice %283 {offsets = [4, 0], sizes = [1, 32], strides = [1, 1]} : vector<31x32xf32> to vector<1x32xf32>
    %722 = vector.broadcast %721 : vector<1x32xf32> to vector<16x32xf32>
    %723 = arith.mulf %715, %722 : vector<16x32xf32>
    %cst_211 = arith.constant 0.000000e+00 : f32
    %724 = vector.broadcast %cst_211 : f32 to vector<16x32xf32>
    %725 = arith.select %720, %723, %724 : vector<16x32xi1>, vector<16x32xf32>
    %726 = arith.addf %714, %725 : vector<16x32xf32>
    %c5_i32_212 = arith.constant 5 : i32
    %727 = tpu.dynamic_rotate %282 by %c5_i32_212 dim 0 : vector<16x32xf32>, i32 -> vector<16x32xf32>
    %c5_i32_213 = arith.constant 5 : i32
    %728 = vector.broadcast %c5_i32_213 : i32 to vector<16x32xi32>
    %729 = arith.cmpi sge, %300, %728 : vector<16x32xi32>
    %c8_i32_214 = arith.constant 8 : i32
    %730 = vector.broadcast %c8_i32_214 : i32 to vector<16x32xi32>
    %731 = arith.cmpi slt, %300, %730 : vector<16x32xi32>
    %732 = arith.andi %729, %731 : vector<16x32xi1>
    %733 = vector.extract_strided_slice %283 {offsets = [5, 0], sizes = [1, 32], strides = [1, 1]} : vector<31x32xf32> to vector<1x32xf32>
    %734 = vector.broadcast %733 : vector<1x32xf32> to vector<16x32xf32>
    %735 = arith.mulf %727, %734 : vector<16x32xf32>
    %cst_215 = arith.constant 0.000000e+00 : f32
    %736 = vector.broadcast %cst_215 : f32 to vector<16x32xf32>
    %737 = arith.select %732, %735, %736 : vector<16x32xi1>, vector<16x32xf32>
    %738 = arith.addf %726, %737 : vector<16x32xf32>
    %c4_i32_216 = arith.constant 4 : i32
    %739 = tpu.dynamic_rotate %281 by %c4_i32_216 dim 0 : vector<16x32xf32>, i32 -> vector<16x32xf32>
    %c4_i32_217 = arith.constant 4 : i32
    %740 = vector.broadcast %c4_i32_217 : i32 to vector<16x32xi32>
    %741 = arith.cmpi sge, %300, %740 : vector<16x32xi32>
    %c8_i32_218 = arith.constant 8 : i32
    %742 = vector.broadcast %c8_i32_218 : i32 to vector<16x32xi32>
    %743 = arith.cmpi slt, %300, %742 : vector<16x32xi32>
    %744 = arith.andi %741, %743 : vector<16x32xi1>
    %745 = vector.extract_strided_slice %283 {offsets = [6, 0], sizes = [1, 32], strides = [1, 1]} : vector<31x32xf32> to vector<1x32xf32>
    %746 = vector.broadcast %745 : vector<1x32xf32> to vector<16x32xf32>
    %747 = arith.mulf %739, %746 : vector<16x32xf32>
    %cst_219 = arith.constant 0.000000e+00 : f32
    %748 = vector.broadcast %cst_219 : f32 to vector<16x32xf32>
    %749 = arith.select %744, %747, %748 : vector<16x32xi1>, vector<16x32xf32>
    %750 = arith.addf %738, %749 : vector<16x32xf32>
    %c4_i32_220 = arith.constant 4 : i32
    %751 = tpu.dynamic_rotate %282 by %c4_i32_220 dim 0 : vector<16x32xf32>, i32 -> vector<16x32xf32>
    %c4_i32_221 = arith.constant 4 : i32
    %752 = vector.broadcast %c4_i32_221 : i32 to vector<16x32xi32>
    %753 = arith.cmpi sge, %300, %752 : vector<16x32xi32>
    %c8_i32_222 = arith.constant 8 : i32
    %754 = vector.broadcast %c8_i32_222 : i32 to vector<16x32xi32>
    %755 = arith.cmpi slt, %300, %754 : vector<16x32xi32>
    %756 = arith.andi %753, %755 : vector<16x32xi1>
    %757 = vector.extract_strided_slice %283 {offsets = [7, 0], sizes = [1, 32], strides = [1, 1]} : vector<31x32xf32> to vector<1x32xf32>
    %758 = vector.broadcast %757 : vector<1x32xf32> to vector<16x32xf32>
    %759 = arith.mulf %751, %758 : vector<16x32xf32>
    %cst_223 = arith.constant 0.000000e+00 : f32
    %760 = vector.broadcast %cst_223 : f32 to vector<16x32xf32>
    %761 = arith.select %756, %759, %760 : vector<16x32xi1>, vector<16x32xf32>
    %762 = arith.addf %750, %761 : vector<16x32xf32>
    %c3_i32_224 = arith.constant 3 : i32
    %763 = tpu.dynamic_rotate %281 by %c3_i32_224 dim 0 : vector<16x32xf32>, i32 -> vector<16x32xf32>
    %c3_i32_225 = arith.constant 3 : i32
    %764 = vector.broadcast %c3_i32_225 : i32 to vector<16x32xi32>
    %765 = arith.cmpi sge, %300, %764 : vector<16x32xi32>
    %c8_i32_226 = arith.constant 8 : i32
    %766 = vector.broadcast %c8_i32_226 : i32 to vector<16x32xi32>
    %767 = arith.cmpi slt, %300, %766 : vector<16x32xi32>
    %768 = arith.andi %765, %767 : vector<16x32xi1>
    %769 = vector.extract_strided_slice %283 {offsets = [8, 0], sizes = [1, 32], strides = [1, 1]} : vector<31x32xf32> to vector<1x32xf32>
    %770 = vector.broadcast %769 : vector<1x32xf32> to vector<16x32xf32>
    %771 = arith.mulf %763, %770 : vector<16x32xf32>
    %cst_227 = arith.constant 0.000000e+00 : f32
    %772 = vector.broadcast %cst_227 : f32 to vector<16x32xf32>
    %773 = arith.select %768, %771, %772 : vector<16x32xi1>, vector<16x32xf32>
    %774 = arith.addf %762, %773 : vector<16x32xf32>
    %c3_i32_228 = arith.constant 3 : i32
    %775 = tpu.dynamic_rotate %282 by %c3_i32_228 dim 0 : vector<16x32xf32>, i32 -> vector<16x32xf32>
    %c3_i32_229 = arith.constant 3 : i32
    %776 = vector.broadcast %c3_i32_229 : i32 to vector<16x32xi32>
    %777 = arith.cmpi sge, %300, %776 : vector<16x32xi32>
    %c8_i32_230 = arith.constant 8 : i32
    %778 = vector.broadcast %c8_i32_230 : i32 to vector<16x32xi32>
    %779 = arith.cmpi slt, %300, %778 : vector<16x32xi32>
    %780 = arith.andi %777, %779 : vector<16x32xi1>
    %781 = vector.extract_strided_slice %283 {offsets = [9, 0], sizes = [1, 32], strides = [1, 1]} : vector<31x32xf32> to vector<1x32xf32>
    %782 = vector.broadcast %781 : vector<1x32xf32> to vector<16x32xf32>
    %783 = arith.mulf %775, %782 : vector<16x32xf32>
    %cst_231 = arith.constant 0.000000e+00 : f32
    %784 = vector.broadcast %cst_231 : f32 to vector<16x32xf32>
    %785 = arith.select %780, %783, %784 : vector<16x32xi1>, vector<16x32xf32>
    %786 = arith.addf %774, %785 : vector<16x32xf32>
    %c2_i32_232 = arith.constant 2 : i32
    %787 = tpu.dynamic_rotate %281 by %c2_i32_232 dim 0 : vector<16x32xf32>, i32 -> vector<16x32xf32>
    %c2_i32_233 = arith.constant 2 : i32
    %788 = vector.broadcast %c2_i32_233 : i32 to vector<16x32xi32>
    %789 = arith.cmpi sge, %300, %788 : vector<16x32xi32>
    %c8_i32_234 = arith.constant 8 : i32
    %790 = vector.broadcast %c8_i32_234 : i32 to vector<16x32xi32>
    %791 = arith.cmpi slt, %300, %790 : vector<16x32xi32>
    %792 = arith.andi %789, %791 : vector<16x32xi1>
    %793 = vector.extract_strided_slice %283 {offsets = [10, 0], sizes = [1, 32], strides = [1, 1]} : vector<31x32xf32> to vector<1x32xf32>
    %794 = vector.broadcast %793 : vector<1x32xf32> to vector<16x32xf32>
    %795 = arith.mulf %787, %794 : vector<16x32xf32>
    %cst_235 = arith.constant 0.000000e+00 : f32
    %796 = vector.broadcast %cst_235 : f32 to vector<16x32xf32>
    %797 = arith.select %792, %795, %796 : vector<16x32xi1>, vector<16x32xf32>
    %798 = arith.addf %786, %797 : vector<16x32xf32>
    %c2_i32_236 = arith.constant 2 : i32
    %799 = tpu.dynamic_rotate %282 by %c2_i32_236 dim 0 : vector<16x32xf32>, i32 -> vector<16x32xf32>
    %c2_i32_237 = arith.constant 2 : i32
    %800 = vector.broadcast %c2_i32_237 : i32 to vector<16x32xi32>
    %801 = arith.cmpi sge, %300, %800 : vector<16x32xi32>
    %c8_i32_238 = arith.constant 8 : i32
    %802 = vector.broadcast %c8_i32_238 : i32 to vector<16x32xi32>
    %803 = arith.cmpi slt, %300, %802 : vector<16x32xi32>
    %804 = arith.andi %801, %803 : vector<16x32xi1>
    %805 = vector.extract_strided_slice %283 {offsets = [11, 0], sizes = [1, 32], strides = [1, 1]} : vector<31x32xf32> to vector<1x32xf32>
    %806 = vector.broadcast %805 : vector<1x32xf32> to vector<16x32xf32>
    %807 = arith.mulf %799, %806 : vector<16x32xf32>
    %cst_239 = arith.constant 0.000000e+00 : f32
    %808 = vector.broadcast %cst_239 : f32 to vector<16x32xf32>
    %809 = arith.select %804, %807, %808 : vector<16x32xi1>, vector<16x32xf32>
    %810 = arith.addf %798, %809 : vector<16x32xf32>
    %c1_i32_240 = arith.constant 1 : i32
    %811 = tpu.dynamic_rotate %281 by %c1_i32_240 dim 0 : vector<16x32xf32>, i32 -> vector<16x32xf32>
    %c1_i32_241 = arith.constant 1 : i32
    %812 = vector.broadcast %c1_i32_241 : i32 to vector<16x32xi32>
    %813 = arith.cmpi sge, %300, %812 : vector<16x32xi32>
    %c8_i32_242 = arith.constant 8 : i32
    %814 = vector.broadcast %c8_i32_242 : i32 to vector<16x32xi32>
    %815 = arith.cmpi slt, %300, %814 : vector<16x32xi32>
    %816 = arith.andi %813, %815 : vector<16x32xi1>
    %817 = vector.extract_strided_slice %283 {offsets = [12, 0], sizes = [1, 32], strides = [1, 1]} : vector<31x32xf32> to vector<1x32xf32>
    %818 = vector.broadcast %817 : vector<1x32xf32> to vector<16x32xf32>
    %819 = arith.mulf %811, %818 : vector<16x32xf32>
    %cst_243 = arith.constant 0.000000e+00 : f32
    %820 = vector.broadcast %cst_243 : f32 to vector<16x32xf32>
    %821 = arith.select %816, %819, %820 : vector<16x32xi1>, vector<16x32xf32>
    %822 = arith.addf %810, %821 : vector<16x32xf32>
    %c1_i32_244 = arith.constant 1 : i32
    %823 = tpu.dynamic_rotate %282 by %c1_i32_244 dim 0 : vector<16x32xf32>, i32 -> vector<16x32xf32>
    %c1_i32_245 = arith.constant 1 : i32
    %824 = vector.broadcast %c1_i32_245 : i32 to vector<16x32xi32>
    %825 = arith.cmpi sge, %300, %824 : vector<16x32xi32>
    %c8_i32_246 = arith.constant 8 : i32
    %826 = vector.broadcast %c8_i32_246 : i32 to vector<16x32xi32>
    %827 = arith.cmpi slt, %300, %826 : vector<16x32xi32>
    %828 = arith.andi %825, %827 : vector<16x32xi1>
    %829 = vector.extract_strided_slice %283 {offsets = [13, 0], sizes = [1, 32], strides = [1, 1]} : vector<31x32xf32> to vector<1x32xf32>
    %830 = vector.broadcast %829 : vector<1x32xf32> to vector<16x32xf32>
    %831 = arith.mulf %823, %830 : vector<16x32xf32>
    %cst_247 = arith.constant 0.000000e+00 : f32
    %832 = vector.broadcast %cst_247 : f32 to vector<16x32xf32>
    %833 = arith.select %828, %831, %832 : vector<16x32xi1>, vector<16x32xf32>
    %834 = arith.addf %822, %833 : vector<16x32xf32>
    %c0_i32_248 = arith.constant 0 : i32
    %835 = vector.broadcast %c0_i32_248 : i32 to vector<16x32xi32>
    %836 = arith.cmpi sge, %300, %835 : vector<16x32xi32>
    %c8_i32_249 = arith.constant 8 : i32
    %837 = vector.broadcast %c8_i32_249 : i32 to vector<16x32xi32>
    %838 = arith.cmpi slt, %300, %837 : vector<16x32xi32>
    %839 = arith.andi %836, %838 : vector<16x32xi1>
    %840 = vector.extract_strided_slice %283 {offsets = [14, 0], sizes = [1, 32], strides = [1, 1]} : vector<31x32xf32> to vector<1x32xf32>
    %841 = vector.broadcast %840 : vector<1x32xf32> to vector<16x32xf32>
    %842 = arith.mulf %281, %841 : vector<16x32xf32>
    %cst_250 = arith.constant 0.000000e+00 : f32
    %843 = vector.broadcast %cst_250 : f32 to vector<16x32xf32>
    %844 = arith.select %839, %842, %843 : vector<16x32xi1>, vector<16x32xf32>
    %845 = arith.addf %834, %844 : vector<16x32xf32>
    %c0_i32_251 = arith.constant 0 : i32
    %846 = vector.broadcast %c0_i32_251 : i32 to vector<16x32xi32>
    %847 = arith.cmpi sge, %300, %846 : vector<16x32xi32>
    %c8_i32_252 = arith.constant 8 : i32
    %848 = vector.broadcast %c8_i32_252 : i32 to vector<16x32xi32>
    %849 = arith.cmpi slt, %300, %848 : vector<16x32xi32>
    %850 = arith.andi %847, %849 : vector<16x32xi1>
    %851 = vector.extract_strided_slice %283 {offsets = [15, 0], sizes = [1, 32], strides = [1, 1]} : vector<31x32xf32> to vector<1x32xf32>
    %852 = vector.broadcast %851 : vector<1x32xf32> to vector<16x32xf32>
    %853 = arith.mulf %282, %852 : vector<16x32xf32>
    %cst_253 = arith.constant 0.000000e+00 : f32
    %854 = vector.broadcast %cst_253 : f32 to vector<16x32xf32>
    %855 = arith.select %850, %853, %854 : vector<16x32xi1>, vector<16x32xf32>
    %856 = arith.addf %845, %855 : vector<16x32xf32>
    %c15_i32_254 = arith.constant 15 : i32
    %857 = tpu.dynamic_rotate %281 by %c15_i32_254 dim 0 : vector<16x32xf32>, i32 -> vector<16x32xf32>
    %c0_i32_255 = arith.constant 0 : i32
    %858 = vector.broadcast %c0_i32_255 : i32 to vector<16x32xi32>
    %859 = arith.cmpi sge, %300, %858 : vector<16x32xi32>
    %c7_i32_256 = arith.constant 7 : i32
    %860 = vector.broadcast %c7_i32_256 : i32 to vector<16x32xi32>
    %861 = arith.cmpi slt, %300, %860 : vector<16x32xi32>
    %862 = arith.andi %859, %861 : vector<16x32xi1>
    %863 = vector.extract_strided_slice %283 {offsets = [16, 0], sizes = [1, 32], strides = [1, 1]} : vector<31x32xf32> to vector<1x32xf32>
    %864 = vector.broadcast %863 : vector<1x32xf32> to vector<16x32xf32>
    %865 = arith.mulf %857, %864 : vector<16x32xf32>
    %cst_257 = arith.constant 0.000000e+00 : f32
    %866 = vector.broadcast %cst_257 : f32 to vector<16x32xf32>
    %867 = arith.select %862, %865, %866 : vector<16x32xi1>, vector<16x32xf32>
    %868 = arith.addf %856, %867 : vector<16x32xf32>
    %c15_i32_258 = arith.constant 15 : i32
    %869 = tpu.dynamic_rotate %282 by %c15_i32_258 dim 0 : vector<16x32xf32>, i32 -> vector<16x32xf32>
    %c0_i32_259 = arith.constant 0 : i32
    %870 = vector.broadcast %c0_i32_259 : i32 to vector<16x32xi32>
    %871 = arith.cmpi sge, %300, %870 : vector<16x32xi32>
    %c7_i32_260 = arith.constant 7 : i32
    %872 = vector.broadcast %c7_i32_260 : i32 to vector<16x32xi32>
    %873 = arith.cmpi slt, %300, %872 : vector<16x32xi32>
    %874 = arith.andi %871, %873 : vector<16x32xi1>
    %875 = vector.extract_strided_slice %283 {offsets = [17, 0], sizes = [1, 32], strides = [1, 1]} : vector<31x32xf32> to vector<1x32xf32>
    %876 = vector.broadcast %875 : vector<1x32xf32> to vector<16x32xf32>
    %877 = arith.mulf %869, %876 : vector<16x32xf32>
    %cst_261 = arith.constant 0.000000e+00 : f32
    %878 = vector.broadcast %cst_261 : f32 to vector<16x32xf32>
    %879 = arith.select %874, %877, %878 : vector<16x32xi1>, vector<16x32xf32>
    %880 = arith.addf %868, %879 : vector<16x32xf32>
    %c14_i32_262 = arith.constant 14 : i32
    %881 = tpu.dynamic_rotate %281 by %c14_i32_262 dim 0 : vector<16x32xf32>, i32 -> vector<16x32xf32>
    %c0_i32_263 = arith.constant 0 : i32
    %882 = vector.broadcast %c0_i32_263 : i32 to vector<16x32xi32>
    %883 = arith.cmpi sge, %300, %882 : vector<16x32xi32>
    %c6_i32_264 = arith.constant 6 : i32
    %884 = vector.broadcast %c6_i32_264 : i32 to vector<16x32xi32>
    %885 = arith.cmpi slt, %300, %884 : vector<16x32xi32>
    %886 = arith.andi %883, %885 : vector<16x32xi1>
    %887 = vector.extract_strided_slice %283 {offsets = [18, 0], sizes = [1, 32], strides = [1, 1]} : vector<31x32xf32> to vector<1x32xf32>
    %888 = vector.broadcast %887 : vector<1x32xf32> to vector<16x32xf32>
    %889 = arith.mulf %881, %888 : vector<16x32xf32>
    %cst_265 = arith.constant 0.000000e+00 : f32
    %890 = vector.broadcast %cst_265 : f32 to vector<16x32xf32>
    %891 = arith.select %886, %889, %890 : vector<16x32xi1>, vector<16x32xf32>
    %892 = arith.addf %880, %891 : vector<16x32xf32>
    %c14_i32_266 = arith.constant 14 : i32
    %893 = tpu.dynamic_rotate %282 by %c14_i32_266 dim 0 : vector<16x32xf32>, i32 -> vector<16x32xf32>
    %c0_i32_267 = arith.constant 0 : i32
    %894 = vector.broadcast %c0_i32_267 : i32 to vector<16x32xi32>
    %895 = arith.cmpi sge, %300, %894 : vector<16x32xi32>
    %c6_i32_268 = arith.constant 6 : i32
    %896 = vector.broadcast %c6_i32_268 : i32 to vector<16x32xi32>
    %897 = arith.cmpi slt, %300, %896 : vector<16x32xi32>
    %898 = arith.andi %895, %897 : vector<16x32xi1>
    %899 = vector.extract_strided_slice %283 {offsets = [19, 0], sizes = [1, 32], strides = [1, 1]} : vector<31x32xf32> to vector<1x32xf32>
    %900 = vector.broadcast %899 : vector<1x32xf32> to vector<16x32xf32>
    %901 = arith.mulf %893, %900 : vector<16x32xf32>
    %cst_269 = arith.constant 0.000000e+00 : f32
    %902 = vector.broadcast %cst_269 : f32 to vector<16x32xf32>
    %903 = arith.select %898, %901, %902 : vector<16x32xi1>, vector<16x32xf32>
    %904 = arith.addf %892, %903 : vector<16x32xf32>
    %c13_i32_270 = arith.constant 13 : i32
    %905 = tpu.dynamic_rotate %281 by %c13_i32_270 dim 0 : vector<16x32xf32>, i32 -> vector<16x32xf32>
    %c0_i32_271 = arith.constant 0 : i32
    %906 = vector.broadcast %c0_i32_271 : i32 to vector<16x32xi32>
    %907 = arith.cmpi sge, %300, %906 : vector<16x32xi32>
    %c5_i32_272 = arith.constant 5 : i32
    %908 = vector.broadcast %c5_i32_272 : i32 to vector<16x32xi32>
    %909 = arith.cmpi slt, %300, %908 : vector<16x32xi32>
    %910 = arith.andi %907, %909 : vector<16x32xi1>
    %911 = vector.extract_strided_slice %283 {offsets = [20, 0], sizes = [1, 32], strides = [1, 1]} : vector<31x32xf32> to vector<1x32xf32>
    %912 = vector.broadcast %911 : vector<1x32xf32> to vector<16x32xf32>
    %913 = arith.mulf %905, %912 : vector<16x32xf32>
    %cst_273 = arith.constant 0.000000e+00 : f32
    %914 = vector.broadcast %cst_273 : f32 to vector<16x32xf32>
    %915 = arith.select %910, %913, %914 : vector<16x32xi1>, vector<16x32xf32>
    %916 = arith.addf %904, %915 : vector<16x32xf32>
    %c13_i32_274 = arith.constant 13 : i32
    %917 = tpu.dynamic_rotate %282 by %c13_i32_274 dim 0 : vector<16x32xf32>, i32 -> vector<16x32xf32>
    %c0_i32_275 = arith.constant 0 : i32
    %918 = vector.broadcast %c0_i32_275 : i32 to vector<16x32xi32>
    %919 = arith.cmpi sge, %300, %918 : vector<16x32xi32>
    %c5_i32_276 = arith.constant 5 : i32
    %920 = vector.broadcast %c5_i32_276 : i32 to vector<16x32xi32>
    %921 = arith.cmpi slt, %300, %920 : vector<16x32xi32>
    %922 = arith.andi %919, %921 : vector<16x32xi1>
    %923 = vector.extract_strided_slice %283 {offsets = [21, 0], sizes = [1, 32], strides = [1, 1]} : vector<31x32xf32> to vector<1x32xf32>
    %924 = vector.broadcast %923 : vector<1x32xf32> to vector<16x32xf32>
    %925 = arith.mulf %917, %924 : vector<16x32xf32>
    %cst_277 = arith.constant 0.000000e+00 : f32
    %926 = vector.broadcast %cst_277 : f32 to vector<16x32xf32>
    %927 = arith.select %922, %925, %926 : vector<16x32xi1>, vector<16x32xf32>
    %928 = arith.addf %916, %927 : vector<16x32xf32>
    %c12_i32_278 = arith.constant 12 : i32
    %929 = tpu.dynamic_rotate %281 by %c12_i32_278 dim 0 : vector<16x32xf32>, i32 -> vector<16x32xf32>
    %c0_i32_279 = arith.constant 0 : i32
    %930 = vector.broadcast %c0_i32_279 : i32 to vector<16x32xi32>
    %931 = arith.cmpi sge, %300, %930 : vector<16x32xi32>
    %c4_i32_280 = arith.constant 4 : i32
    %932 = vector.broadcast %c4_i32_280 : i32 to vector<16x32xi32>
    %933 = arith.cmpi slt, %300, %932 : vector<16x32xi32>
    %934 = arith.andi %931, %933 : vector<16x32xi1>
    %935 = vector.extract_strided_slice %283 {offsets = [22, 0], sizes = [1, 32], strides = [1, 1]} : vector<31x32xf32> to vector<1x32xf32>
    %936 = vector.broadcast %935 : vector<1x32xf32> to vector<16x32xf32>
    %937 = arith.mulf %929, %936 : vector<16x32xf32>
    %cst_281 = arith.constant 0.000000e+00 : f32
    %938 = vector.broadcast %cst_281 : f32 to vector<16x32xf32>
    %939 = arith.select %934, %937, %938 : vector<16x32xi1>, vector<16x32xf32>
    %940 = arith.addf %928, %939 : vector<16x32xf32>
    %c12_i32_282 = arith.constant 12 : i32
    %941 = tpu.dynamic_rotate %282 by %c12_i32_282 dim 0 : vector<16x32xf32>, i32 -> vector<16x32xf32>
    %c0_i32_283 = arith.constant 0 : i32
    %942 = vector.broadcast %c0_i32_283 : i32 to vector<16x32xi32>
    %943 = arith.cmpi sge, %300, %942 : vector<16x32xi32>
    %c4_i32_284 = arith.constant 4 : i32
    %944 = vector.broadcast %c4_i32_284 : i32 to vector<16x32xi32>
    %945 = arith.cmpi slt, %300, %944 : vector<16x32xi32>
    %946 = arith.andi %943, %945 : vector<16x32xi1>
    %947 = vector.extract_strided_slice %283 {offsets = [23, 0], sizes = [1, 32], strides = [1, 1]} : vector<31x32xf32> to vector<1x32xf32>
    %948 = vector.broadcast %947 : vector<1x32xf32> to vector<16x32xf32>
    %949 = arith.mulf %941, %948 : vector<16x32xf32>
    %cst_285 = arith.constant 0.000000e+00 : f32
    %950 = vector.broadcast %cst_285 : f32 to vector<16x32xf32>
    %951 = arith.select %946, %949, %950 : vector<16x32xi1>, vector<16x32xf32>
    %952 = arith.addf %940, %951 : vector<16x32xf32>
    %c11_i32_286 = arith.constant 11 : i32
    %953 = tpu.dynamic_rotate %281 by %c11_i32_286 dim 0 : vector<16x32xf32>, i32 -> vector<16x32xf32>
    %c0_i32_287 = arith.constant 0 : i32
    %954 = vector.broadcast %c0_i32_287 : i32 to vector<16x32xi32>
    %955 = arith.cmpi sge, %300, %954 : vector<16x32xi32>
    %c3_i32_288 = arith.constant 3 : i32
    %956 = vector.broadcast %c3_i32_288 : i32 to vector<16x32xi32>
    %957 = arith.cmpi slt, %300, %956 : vector<16x32xi32>
    %958 = arith.andi %955, %957 : vector<16x32xi1>
    %959 = vector.extract_strided_slice %283 {offsets = [24, 0], sizes = [1, 32], strides = [1, 1]} : vector<31x32xf32> to vector<1x32xf32>
    %960 = vector.broadcast %959 : vector<1x32xf32> to vector<16x32xf32>
    %961 = arith.mulf %953, %960 : vector<16x32xf32>
    %cst_289 = arith.constant 0.000000e+00 : f32
    %962 = vector.broadcast %cst_289 : f32 to vector<16x32xf32>
    %963 = arith.select %958, %961, %962 : vector<16x32xi1>, vector<16x32xf32>
    %964 = arith.addf %952, %963 : vector<16x32xf32>
    %c11_i32_290 = arith.constant 11 : i32
    %965 = tpu.dynamic_rotate %282 by %c11_i32_290 dim 0 : vector<16x32xf32>, i32 -> vector<16x32xf32>
    %c0_i32_291 = arith.constant 0 : i32
    %966 = vector.broadcast %c0_i32_291 : i32 to vector<16x32xi32>
    %967 = arith.cmpi sge, %300, %966 : vector<16x32xi32>
    %c3_i32_292 = arith.constant 3 : i32
    %968 = vector.broadcast %c3_i32_292 : i32 to vector<16x32xi32>
    %969 = arith.cmpi slt, %300, %968 : vector<16x32xi32>
    %970 = arith.andi %967, %969 : vector<16x32xi1>
    %971 = vector.extract_strided_slice %283 {offsets = [25, 0], sizes = [1, 32], strides = [1, 1]} : vector<31x32xf32> to vector<1x32xf32>
    %972 = vector.broadcast %971 : vector<1x32xf32> to vector<16x32xf32>
    %973 = arith.mulf %965, %972 : vector<16x32xf32>
    %cst_293 = arith.constant 0.000000e+00 : f32
    %974 = vector.broadcast %cst_293 : f32 to vector<16x32xf32>
    %975 = arith.select %970, %973, %974 : vector<16x32xi1>, vector<16x32xf32>
    %976 = arith.addf %964, %975 : vector<16x32xf32>
    %c10_i32_294 = arith.constant 10 : i32
    %977 = tpu.dynamic_rotate %281 by %c10_i32_294 dim 0 : vector<16x32xf32>, i32 -> vector<16x32xf32>
    %c0_i32_295 = arith.constant 0 : i32
    %978 = vector.broadcast %c0_i32_295 : i32 to vector<16x32xi32>
    %979 = arith.cmpi sge, %300, %978 : vector<16x32xi32>
    %c2_i32_296 = arith.constant 2 : i32
    %980 = vector.broadcast %c2_i32_296 : i32 to vector<16x32xi32>
    %981 = arith.cmpi slt, %300, %980 : vector<16x32xi32>
    %982 = arith.andi %979, %981 : vector<16x32xi1>
    %983 = vector.extract_strided_slice %283 {offsets = [26, 0], sizes = [1, 32], strides = [1, 1]} : vector<31x32xf32> to vector<1x32xf32>
    %984 = vector.broadcast %983 : vector<1x32xf32> to vector<16x32xf32>
    %985 = arith.mulf %977, %984 : vector<16x32xf32>
    %cst_297 = arith.constant 0.000000e+00 : f32
    %986 = vector.broadcast %cst_297 : f32 to vector<16x32xf32>
    %987 = arith.select %982, %985, %986 : vector<16x32xi1>, vector<16x32xf32>
    %988 = arith.addf %976, %987 : vector<16x32xf32>
    %c10_i32_298 = arith.constant 10 : i32
    %989 = tpu.dynamic_rotate %282 by %c10_i32_298 dim 0 : vector<16x32xf32>, i32 -> vector<16x32xf32>
    %c0_i32_299 = arith.constant 0 : i32
    %990 = vector.broadcast %c0_i32_299 : i32 to vector<16x32xi32>
    %991 = arith.cmpi sge, %300, %990 : vector<16x32xi32>
    %c2_i32_300 = arith.constant 2 : i32
    %992 = vector.broadcast %c2_i32_300 : i32 to vector<16x32xi32>
    %993 = arith.cmpi slt, %300, %992 : vector<16x32xi32>
    %994 = arith.andi %991, %993 : vector<16x32xi1>
    %995 = vector.extract_strided_slice %283 {offsets = [27, 0], sizes = [1, 32], strides = [1, 1]} : vector<31x32xf32> to vector<1x32xf32>
    %996 = vector.broadcast %995 : vector<1x32xf32> to vector<16x32xf32>
    %997 = arith.mulf %989, %996 : vector<16x32xf32>
    %cst_301 = arith.constant 0.000000e+00 : f32
    %998 = vector.broadcast %cst_301 : f32 to vector<16x32xf32>
    %999 = arith.select %994, %997, %998 : vector<16x32xi1>, vector<16x32xf32>
    %1000 = arith.addf %988, %999 : vector<16x32xf32>
    %c9_i32_302 = arith.constant 9 : i32
    %1001 = tpu.dynamic_rotate %281 by %c9_i32_302 dim 0 : vector<16x32xf32>, i32 -> vector<16x32xf32>
    %c0_i32_303 = arith.constant 0 : i32
    %1002 = vector.broadcast %c0_i32_303 : i32 to vector<16x32xi32>
    %1003 = arith.cmpi sge, %300, %1002 : vector<16x32xi32>
    %c1_i32_304 = arith.constant 1 : i32
    %1004 = vector.broadcast %c1_i32_304 : i32 to vector<16x32xi32>
    %1005 = arith.cmpi slt, %300, %1004 : vector<16x32xi32>
    %1006 = arith.andi %1003, %1005 : vector<16x32xi1>
    %1007 = vector.extract_strided_slice %283 {offsets = [28, 0], sizes = [1, 32], strides = [1, 1]} : vector<31x32xf32> to vector<1x32xf32>
    %1008 = vector.broadcast %1007 : vector<1x32xf32> to vector<16x32xf32>
    %1009 = arith.mulf %1001, %1008 : vector<16x32xf32>
    %cst_305 = arith.constant 0.000000e+00 : f32
    %1010 = vector.broadcast %cst_305 : f32 to vector<16x32xf32>
    %1011 = arith.select %1006, %1009, %1010 : vector<16x32xi1>, vector<16x32xf32>
    %1012 = arith.addf %1000, %1011 : vector<16x32xf32>
    %c9_i32_306 = arith.constant 9 : i32
    %1013 = tpu.dynamic_rotate %282 by %c9_i32_306 dim 0 : vector<16x32xf32>, i32 -> vector<16x32xf32>
    %c0_i32_307 = arith.constant 0 : i32
    %1014 = vector.broadcast %c0_i32_307 : i32 to vector<16x32xi32>
    %1015 = arith.cmpi sge, %300, %1014 : vector<16x32xi32>
    %c1_i32_308 = arith.constant 1 : i32
    %1016 = vector.broadcast %c1_i32_308 : i32 to vector<16x32xi32>
    %1017 = arith.cmpi slt, %300, %1016 : vector<16x32xi32>
    %1018 = arith.andi %1015, %1017 : vector<16x32xi1>
    %1019 = vector.extract_strided_slice %283 {offsets = [29, 0], sizes = [1, 32], strides = [1, 1]} : vector<31x32xf32> to vector<1x32xf32>
    %1020 = vector.broadcast %1019 : vector<1x32xf32> to vector<16x32xf32>
    %1021 = arith.mulf %1013, %1020 : vector<16x32xf32>
    %cst_309 = arith.constant 0.000000e+00 : f32
    %1022 = vector.broadcast %cst_309 : f32 to vector<16x32xf32>
    %1023 = arith.select %1018, %1021, %1022 : vector<16x32xi1>, vector<16x32xf32>
    %1024 = arith.addf %1012, %1023 : vector<16x32xf32>
    %1025 = tpu.concatenate %662, %1024 in 0 : vector<16x32xf32>, vector<16x32xf32> -> vector<32x32xf32>
    %cst_310 = arith.constant dense<0.000000e+00> : vector<32xf32>
    %1026 = vector.multi_reduction <add>, %1025, %cst_310 [0] : vector<32x32xf32> to vector<32xf32>
    %1027 = vector.shape_cast %1026 : vector<32xf32> to vector<1x32xf32>
    %cst_311 = arith.constant 3.200000e+01 : f32
    %1028 = vector.broadcast %cst_311 : f32 to vector<1x32xf32>
    %1029 = arith.divf %1027, %1028 : vector<1x32xf32>
    %1030 = vector.broadcast %1029 : vector<1x32xf32> to vector<32x32xf32>
    %1031 = arith.subf %1025, %1030 : vector<32x32xf32>
    %1032 = arith.mulf %1031, %1031 : vector<32x32xf32>
    %cst_312 = arith.constant dense<0.000000e+00> : vector<32xf32>
    %1033 = vector.multi_reduction <add>, %1032, %cst_312 [0] : vector<32x32xf32> to vector<32xf32>
    %1034 = vector.shape_cast %1033 : vector<32xf32> to vector<1x32xf32>
    %cst_313 = arith.constant 3.200000e+01 : f32
    %1035 = vector.broadcast %cst_313 : f32 to vector<1x32xf32>
    %1036 = arith.divf %1034, %1035 : vector<1x32xf32>
    %1037 = vector.broadcast %1029 : vector<1x32xf32> to vector<32x32xf32>
    %1038 = arith.subf %1025, %1037 : vector<32x32xf32>
    %cst_314 = arith.constant 9.99999974E-6 : f32
    %1039 = vector.broadcast %cst_314 : f32 to vector<1x32xf32>
    %1040 = arith.addf %1036, %1039 : vector<1x32xf32>
    %1041 = math.rsqrt %1040 : vector<1x32xf32>
    %1042 = vector.broadcast %1041 : vector<1x32xf32> to vector<32x32xf32>
    %1043 = arith.mulf %1038, %1042 : vector<32x32xf32>
    %1044 = vector.extract_strided_slice %0 {offsets = [11, 0], sizes = [1, 32], strides = [1, 1]} : vector<24x128xf32> to vector<1x32xf32>
    %1045 = vector.broadcast %1044 : vector<1x32xf32> to vector<32x32xf32>
    %1046 = arith.mulf %1043, %1045 : vector<32x32xf32>
    %1047 = vector.extract_strided_slice %0 {offsets = [12, 0], sizes = [1, 32], strides = [1, 1]} : vector<24x128xf32> to vector<1x32xf32>
    %1048 = vector.broadcast %1047 : vector<1x32xf32> to vector<32x32xf32>
    %1049 = arith.addf %1046, %1048 : vector<32x32xf32>
    %1050 = arith.negf %1049 : vector<32x32xf32>
    %1051 = math.exp %1050 : vector<32x32xf32>
    %cst_315 = arith.constant 1.000000e+00 : f32
    %1052 = vector.broadcast %cst_315 : f32 to vector<32x32xf32>
    %1053 = arith.addf %1052, %1051 : vector<32x32xf32>
    %1054 = arith.divf %1052, %1053 : vector<32x32xf32>
    %1055 = arith.mulf %1049, %1054 : vector<32x32xf32>
    %1056 = arith.truncf %1055 : vector<32x32xf32> to vector<32x32xbf16>
    %cst_316 = arith.constant dense<0.000000e+00> : vector<32x32xf32>
    %1057 = tpu.matmul %1056, %5, %cst_316 {dimension_numbers = #tpu.dot_dimension_numbers<[1], [0], [0], [1], [0, 0, 1, 1], [], []>} : vector<32x32xbf16>, vector<32x32xbf16>, vector<32x32xf32> -> vector<32x32xf32>
    %1058 = vector.extract_strided_slice %0 {offsets = [13, 0], sizes = [1, 32], strides = [1, 1]} : vector<24x128xf32> to vector<1x32xf32>
    %1059 = vector.broadcast %1058 : vector<1x32xf32> to vector<32x32xf32>
    %1060 = arith.addf %1057, %1059 : vector<32x32xf32>
    %1061 = vector.extract_strided_slice %1060 {offsets = [0, 0], sizes = [16, 32], strides = [1, 1]} : vector<32x32xf32> to vector<16x32xf32>
    %1062 = vector.extract_strided_slice %1060 {offsets = [16, 0], sizes = [16, 32], strides = [1, 1]} : vector<32x32xf32> to vector<16x32xf32>
    %1063 = tpu.concatenate %1061, %1062 in 1 : vector<16x32xf32>, vector<16x32xf32> -> vector<16x64xf32>
    %1064 = arith.addf %240, %1063 : vector<16x64xf32>
    %1065 = vector.extract_strided_slice %1064 {offsets = [0, 0], sizes = [16, 32], strides = [1, 1]} : vector<16x64xf32> to vector<16x32xf32>
    %1066 = vector.extract_strided_slice %1064 {offsets = [0, 32], sizes = [16, 32], strides = [1, 1]} : vector<16x64xf32> to vector<16x32xf32>
    %1067 = tpu.concatenate %1065, %1066 in 0 : vector<16x32xf32>, vector<16x32xf32> -> vector<32x32xf32>
    %1068 = vector.extract_strided_slice %0 {offsets = [14, 0], sizes = [1, 32], strides = [1, 1]} : vector<24x128xf32> to vector<1x32xf32>
    %1069 = vector.extract_strided_slice %0 {offsets = [15, 0], sizes = [1, 32], strides = [1, 1]} : vector<24x128xf32> to vector<1x32xf32>
    %cst_317 = arith.constant dense<0.000000e+00> : vector<32xf32>
    %1070 = vector.multi_reduction <add>, %1067, %cst_317 [1] : vector<32x32xf32> to vector<32xf32>
    %1071 = vector.shape_cast %1070 : vector<32xf32> to vector<32x1xf32>
    %cst_318 = arith.constant 3.200000e+01 : f32
    %1072 = vector.broadcast %cst_318 : f32 to vector<32x1xf32>
    %1073 = arith.divf %1071, %1072 : vector<32x1xf32>
    %1074 = vector.broadcast %1073 : vector<32x1xf32> to vector<32x32xf32>
    %1075 = arith.subf %1067, %1074 : vector<32x32xf32>
    %1076 = arith.mulf %1075, %1075 : vector<32x32xf32>
    %cst_319 = arith.constant dense<0.000000e+00> : vector<32xf32>
    %1077 = vector.multi_reduction <add>, %1076, %cst_319 [1] : vector<32x32xf32> to vector<32xf32>
    %1078 = vector.shape_cast %1077 : vector<32xf32> to vector<32x1xf32>
    %cst_320 = arith.constant 3.200000e+01 : f32
    %1079 = vector.broadcast %cst_320 : f32 to vector<32x1xf32>
    %1080 = arith.divf %1078, %1079 : vector<32x1xf32>
    %1081 = vector.broadcast %1073 : vector<32x1xf32> to vector<32x32xf32>
    %1082 = arith.subf %1067, %1081 : vector<32x32xf32>
    %cst_321 = arith.constant 9.99999974E-6 : f32
    %1083 = vector.broadcast %cst_321 : f32 to vector<32x1xf32>
    %1084 = arith.addf %1080, %1083 : vector<32x1xf32>
    %1085 = math.rsqrt %1084 : vector<32x1xf32>
    %1086 = vector.broadcast %1085 : vector<32x1xf32> to vector<32x32xf32>
    %1087 = arith.mulf %1082, %1086 : vector<32x32xf32>
    %1088 = vector.broadcast %1068 : vector<1x32xf32> to vector<32x32xf32>
    %1089 = arith.mulf %1087, %1088 : vector<32x32xf32>
    %1090 = vector.broadcast %1069 : vector<1x32xf32> to vector<32x32xf32>
    %1091 = arith.addf %1089, %1090 : vector<32x32xf32>
    %1092 = arith.truncf %1091 : vector<32x32xf32> to vector<32x32xbf16>
    %cst_322 = arith.constant dense<0.000000e+00> : vector<32x128xf32>
    %1093 = tpu.matmul %1092, %3, %cst_322 {dimension_numbers = #tpu.dot_dimension_numbers<[1], [0], [0], [1], [0, 0, 1, 1], [], []>} : vector<32x32xbf16>, vector<32x128xbf16>, vector<32x128xf32> -> vector<32x128xf32>
    %1094 = vector.extract_strided_slice %0 {offsets = [16, 0], sizes = [1, 128], strides = [1, 1]} : vector<24x128xf32> to vector<1x128xf32>
    %1095 = vector.broadcast %1094 : vector<1x128xf32> to vector<32x128xf32>
    %1096 = arith.addf %1093, %1095 : vector<32x128xf32>
    %1097 = arith.negf %1096 : vector<32x128xf32>
    %1098 = math.exp %1097 : vector<32x128xf32>
    %cst_323 = arith.constant 1.000000e+00 : f32
    %1099 = vector.broadcast %cst_323 : f32 to vector<32x128xf32>
    %1100 = arith.addf %1099, %1098 : vector<32x128xf32>
    %1101 = arith.divf %1099, %1100 : vector<32x128xf32>
    %1102 = arith.mulf %1096, %1101 : vector<32x128xf32>
    %1103 = arith.truncf %1102 : vector<32x128xf32> to vector<32x128xbf16>
    %cst_324 = arith.constant dense<0.000000e+00> : vector<32x32xf32>
    %1104 = tpu.matmul %1103, %9, %cst_324 {dimension_numbers = #tpu.dot_dimension_numbers<[1], [0], [0], [1], [0, 0, 1, 1], [], []>} : vector<32x128xbf16>, vector<128x32xbf16>, vector<32x32xf32> -> vector<32x32xf32>
    %1105 = vector.extract_strided_slice %0 {offsets = [17, 0], sizes = [1, 32], strides = [1, 1]} : vector<24x128xf32> to vector<1x32xf32>
    %1106 = vector.broadcast %1105 : vector<1x32xf32> to vector<32x32xf32>
    %1107 = arith.addf %1104, %1106 : vector<32x32xf32>
    %cst_325 = arith.constant 5.000000e-01 : f32
    %1108 = vector.broadcast %cst_325 : f32 to vector<32x32xf32>
    %1109 = arith.mulf %1108, %1107 : vector<32x32xf32>
    %1110 = arith.addf %1109, %1067 : vector<32x32xf32>
    %1111 = vector.extract_strided_slice %0 {offsets = [18, 0], sizes = [1, 32], strides = [1, 1]} : vector<24x128xf32> to vector<1x32xf32>
    %1112 = vector.extract_strided_slice %0 {offsets = [19, 0], sizes = [1, 32], strides = [1, 1]} : vector<24x128xf32> to vector<1x32xf32>
    %cst_326 = arith.constant dense<0.000000e+00> : vector<32xf32>
    %1113 = vector.multi_reduction <add>, %1110, %cst_326 [1] : vector<32x32xf32> to vector<32xf32>
    %1114 = vector.shape_cast %1113 : vector<32xf32> to vector<32x1xf32>
    %cst_327 = arith.constant 3.200000e+01 : f32
    %1115 = vector.broadcast %cst_327 : f32 to vector<32x1xf32>
    %1116 = arith.divf %1114, %1115 : vector<32x1xf32>
    %1117 = vector.broadcast %1116 : vector<32x1xf32> to vector<32x32xf32>
    %1118 = arith.subf %1110, %1117 : vector<32x32xf32>
    %1119 = arith.mulf %1118, %1118 : vector<32x32xf32>
    %cst_328 = arith.constant dense<0.000000e+00> : vector<32xf32>
    %1120 = vector.multi_reduction <add>, %1119, %cst_328 [1] : vector<32x32xf32> to vector<32xf32>
    %1121 = vector.shape_cast %1120 : vector<32xf32> to vector<32x1xf32>
    %cst_329 = arith.constant 3.200000e+01 : f32
    %1122 = vector.broadcast %cst_329 : f32 to vector<32x1xf32>
    %1123 = arith.divf %1121, %1122 : vector<32x1xf32>
    %1124 = vector.broadcast %1116 : vector<32x1xf32> to vector<32x32xf32>
    %1125 = arith.subf %1110, %1124 : vector<32x32xf32>
    %cst_330 = arith.constant 9.99999974E-6 : f32
    %1126 = vector.broadcast %cst_330 : f32 to vector<32x1xf32>
    %1127 = arith.addf %1123, %1126 : vector<32x1xf32>
    %1128 = math.rsqrt %1127 : vector<32x1xf32>
    %1129 = vector.broadcast %1128 : vector<32x1xf32> to vector<32x32xf32>
    %1130 = arith.mulf %1125, %1129 : vector<32x32xf32>
    %1131 = vector.broadcast %1111 : vector<1x32xf32> to vector<32x32xf32>
    %1132 = arith.mulf %1130, %1131 : vector<32x32xf32>
    %1133 = vector.broadcast %1112 : vector<1x32xf32> to vector<32x32xf32>
    %1134 = arith.addf %1132, %1133 : vector<32x32xf32>
    %1135 = vector.extract_strided_slice %1134 {offsets = [0, 0], sizes = [16, 32], strides = [1, 1]} : vector<32x32xf32> to vector<16x32xf32>
    %1136 = vector.extract_strided_slice %1134 {offsets = [16, 0], sizes = [16, 32], strides = [1, 1]} : vector<32x32xf32> to vector<16x32xf32>
    %1137 = tpu.concatenate %1135, %1136 in 1 : vector<16x32xf32>, vector<16x32xf32> -> vector<16x64xf32>
    %c0_331 = arith.constant 0 : index
    %c0_332 = arith.constant 0 : index
    %1138 = vector.load %arg9[%c0_331, %c0_332] : memref<16x64xf32, #tpu.memory_space<vmem>>, vector<16x64xf32>
    tpu.vector_store %arg9[%c0_331, %c0_332], %1137 {strides = array<i32>} : memref<16x64xf32, #tpu.memory_space<vmem>>, vector<16x64xf32>,
    return
  }
}

</mosaic_0001>

<llo_original>
// kernel: grouped_conformer_block.1
$region0: #{grouped_conformer_block.1}
  #allocation0 [shape = 'u32[]', space=smem, size = 0x4, offset = 0x4, fixed_abs, tag = 'smem constant byte address 0x4 - core index']
  #allocation1 [shape = 'u32[144,128]{1,0:T(1,128)}', space=vmem, size = 0x12000, scoped, tag = 'internal scratch']
  %s0 = inlined_call_operand.vmem [shape: f32[16,64], index: 0, kind: input, shape index: {}]
  %s1 = inlined_call_operand.vmem [shape: f32[16,32], index: 1, kind: input, shape index: {}]
  %s2 = inlined_call_operand.vmem [shape: f32[24,128], index: 2, kind: input, shape index: {}]
  %s3 = inlined_call_operand.vmem [shape: bf16[32,640], index: 3, kind: input, shape index: {}]
  %s4 = inlined_call_operand.vmem [shape: bf16[128,256], index: 4, kind: input, shape index: {}]
  %s5 = inlined_call_operand.vmem [shape: bf16[64,96], index: 5, kind: input, shape index: {}]
  %s6 = inlined_call_operand.vmem [shape: bf16[16,256], index: 6, kind: input, shape index: {}]
  %s7 = inlined_call_operand.vmem [shape: f32[31,32], index: 7, kind: input, shape index: {}]
  %s8 = inlined_call_operand.vmem [shape: f32[4,4], index: 8, kind: input, shape index: {}]
  %s9 = inlined_call_operand.vmem [shape: f32[16,64], index: 9, kind: output, shape index: {}]
  %s10 = sld [smem:[#allocation0]]
  $region50: #{grouped_conformer_block.1} parent=0
    _
  %s12 = ssub.s32 1, %s10
  %s13 = scalar_select 0, %s12, %s10
  $region1: #{grouped_conformer_block.1} parent=0
    #allocation2 [shape = 'u8[2048]{0}', space=smem, size = 0x800, scoped, tag = 'input window, operand 8, single buffered']
    #allocation3 [shape = 's32[1]{0}', space=sflag, size = 0x4, scoped, tag = 'scoped memory for grouped_conformer_block.1']
    %14 = vsyncpa [#allocation3], 0
    // Predicated region
    $region2: #{grouped_conformer_block.1} parent=1 // pred_check
      _
    $region3: #{grouped_conformer_block.1} parent=1 // pred_check_branch
      %16 = sbr.rel (0) target = $region5
    $region4: #{grouped_conformer_block.1} parent=1 // pred_region
      _
    $region5: #{grouped_conformer_block.1} parent=1 // pred_fallthru
      _
    // Predicated region
    $region6: #{grouped_conformer_block.1} parent=1 // pred_check
      _
    $region7: #{grouped_conformer_block.1} parent=1 // pred_check_branch
      %18 = sbr.rel (0) target = $region9
    $region8: #{grouped_conformer_block.1} parent=1 // pred_region
      _
    $region9: #{grouped_conformer_block.1} parent=1 // pred_fallthru
      _
    // Predicated region
    $region10: #{grouped_conformer_block.1} parent=1 // pred_check
      _
    $region11: #{grouped_conformer_block.1} parent=1 // pred_check_branch
      %20 = sbr.rel (0) target = $region13
    $region12: #{grouped_conformer_block.1} parent=1 // pred_region
      _
    $region13: #{grouped_conformer_block.1} parent=1 // pred_fallthru
      _
    // Predicated region
    $region14: #{grouped_conformer_block.1} parent=1 // pred_check
      _
    $region15: #{grouped_conformer_block.1} parent=1 // pred_check_branch
      %22 = sbr.rel (0) target = $region17
    $region16: #{grouped_conformer_block.1} parent=1 // pred_region
      _
    $region17: #{grouped_conformer_block.1} parent=1 // pred_fallthru
      _
    // Predicated region
    $region18: #{grouped_conformer_block.1} parent=1 // pred_check
      _
    $region19: #{grouped_conformer_block.1} parent=1 // pred_check_branch
      %24 = sbr.rel (0) target = $region21
    $region20: #{grouped_conformer_block.1} parent=1 // pred_region
      _
    $region21: #{grouped_conformer_block.1} parent=1 // pred_fallthru
      _
    // Predicated region
    $region22: #{grouped_conformer_block.1} parent=1 // pred_check
      _
    $region23: #{grouped_conformer_block.1} parent=1 // pred_check_branch
      %26 = sbr.rel (0) target = $region25
    $region24: #{grouped_conformer_block.1} parent=1 // pred_region
      _
    $region25: #{grouped_conformer_block.1} parent=1 // pred_fallthru
      _
    // Predicated region
    $region26: #{grouped_conformer_block.1} parent=1 // pred_check
      _
    $region27: #{grouped_conformer_block.1} parent=1 // pred_check_branch
      %28 = sbr.rel (0) target = $region29
    $region28: #{grouped_conformer_block.1} parent=1 // pred_region
      _
    $region29: #{grouped_conformer_block.1} parent=1 // pred_fallthru
      _
    // Predicated region
    $region30: #{grouped_conformer_block.1} parent=1 // pred_check
      _
    $region31: #{grouped_conformer_block.1} parent=1 // pred_check_branch
      %30 = sbr.rel (0) target = $region33
    $region32: #{grouped_conformer_block.1} parent=1 // pred_region
      _
    $region33: #{grouped_conformer_block.1} parent=1 // pred_fallthru
      _
    // Predicated region
    $region34: #{grouped_conformer_block.1} parent=1 // pred_check
      _
    $region35: #{grouped_conformer_block.1} parent=1 // pred_check_branch
      %32 = sbr.rel (0) target = $region37
    $region36: #{grouped_conformer_block.1} parent=1 // pred_region
      %s34 = ssub.s32 64, 64
      %35 = vsyncadd [#allocation3], %s34
      %s37 = sshll.u32 %s8, 4
      %s38 = int_to_ptr.vmem [resolvable:$true] %s37
      %40 = dma.vmem_to_smem %s38, 64, [#allocation2], [#allocation3]
    $region37: #{grouped_conformer_block.1} parent=1 // pred_fallthru
      _
    // Predicated region
    $region38: #{grouped_conformer_block.1} parent=1 // pred_check
      _
    $region39: #{grouped_conformer_block.1} parent=1 // pred_check_branch
      %42 = sbr.rel (0) target = $region41
    $region40: #{grouped_conformer_block.1} parent=1 // pred_region
      %43 = dma.done [#allocation3], 64
    $region41: #{grouped_conformer_block.1} parent=1 // pred_fallthru
      _
    %44 = sfence
    %v46 = vld [vmem:[%s2] sm:$0xff]
    %v47 = vld [vmem:[%s2 + $0x8] sm:$0xff]
    %v48 = vld [vmem:[%s2 + $0x10] sm:$0xff]
    %v49 = vld [vmem:[%s3] sm:$0xff]
    %v50 = vld [vmem:[%s3 + $0x8] sm:$0xff]
    %v51 = vld [vmem:[%s3 + $0x10] sm:$0xf]
    %v52 = vld [vmem:[%s3 + $0x14] sm:$0xff]
    %v53 = vld [vmem:[%s3 + $0x1c] sm:$0xff]
    %v54 = vld [vmem:[%s3 + $0x24] sm:$0xf]
    %v55 = vld [vmem:[%s3 + $0x28] sm:$0xff]
    %v56 = vld [vmem:[%s3 + $0x30] sm:$0xff]
    %v57 = vld [vmem:[%s3 + $0x38] sm:$0xf]
    %v58 = vld [vmem:[%s3 + $0x3c] sm:$0xff]
    %v59 = vld [vmem:[%s3 + $0x44] sm:$0xff]
    %v60 = vld [vmem:[%s3 + $0x4c] sm:$0xf]
    %v61 = vld [vmem:[%s4] sm:$0xff]
    %v62 = vld [vmem:[%s4 + $0x8] sm:$0xff]
    %v63 = vld [vmem:[%s4 + $0x10] sm:$0xff]
    %v64 = vld [vmem:[%s4 + $0x18] sm:$0xff]
    %v65 = vld [vmem:[%s4 + $0x20] sm:$0xff]
    %v66 = vld [vmem:[%s4 + $0x28] sm:$0xff]
    %v67 = vld [vmem:[%s4 + $0x30] sm:$0xff]
    %v68 = vld [vmem:[%s4 + $0x38] sm:$0xff]
    %v69 = vld [vmem:[%s4 + $0x40] sm:$0xff]
    %v70 = vld [vmem:[%s4 + $0x48] sm:$0xff]
    %v71 = vld [vmem:[%s4 + $0x50] sm:$0xff]
    %v72 = vld [vmem:[%s4 + $0x58] sm:$0xff]
    %v73 = vld [vmem:[%s4 + $0x60] sm:$0xff]
    %v74 = vld [vmem:[%s4 + $0x68] sm:$0xff]
    %v75 = vld [vmem:[%s4 + $0x70] sm:$0xff]
    %v76 = vld [vmem:[%s4 + $0x78] sm:$0xff]
    %v77 = vld [vmem:[%s6] sm:$0xff]
    %v78 = vld [vmem:[%s6 + $0x8] sm:$0xff]
    %v79 = vld [vmem:[%s0] sm:$0xff]
    %v80 = vld [vmem:[%s0 + $0x8] sm:$0xff]
    %83 = vrot.lane.b32.xlu0 %v79, 96
    %v84 = vpop.permute.xlu0 %83
    %85 = vrot.lane.b32.xlu0 %v80, 96
    %v86 = vpop.permute.xlu0 %85
    %vm89 = vcmask 261120
    %v90 = vsel %vm89, %v79, 0.0
    %91 = vadd.xlane.f32.xlu0 %v90
    %v92 = vpop.xlane.xlu0 %91
    %v93 = vsel %vm89, %v80, 0.0
    %94 = vadd.xlane.f32.xlu0 %v93
    %v95 = vpop.xlane.xlu0 %94
    %v96 = vsel %vm89, %v84, 0.0
    %97 = vadd.xlane.f32.xlu0 %v96
    %v98 = vpop.xlane.xlu0 %97
    %v99 = vsel %vm89, %v86, 0.0
    %100 = vadd.xlane.f32.xlu0 %v99
    %v101 = vpop.xlane.xlu0 %100
    %v102 = vrcp.pop 32.0
    %v103 = vmul.f32 %v92, %v102
    %v104 = vmul.f32 %v95, %v102
    %v105 = vmul.f32 %v98, %v102
    %v106 = vmul.f32 %v101, %v102
    %v107 = vsub.f32 %v79, %v103
    %v108 = vsub.f32 %v80, %v104
    %v109 = vsub.f32 %v84, %v105
    %v110 = vsub.f32 %v86, %v106
    %v111 = vmul.f32 %v107, %v107
    %v112 = vmul.f32 %v108, %v108
    %v113 = vmul.f32 %v109, %v109
    %v114 = vmul.f32 %v110, %v110
    %v115 = vsel %vm89, %v111, 0.0
    %116 = vadd.xlane.f32.xlu0 %v115
    %v117 = vpop.xlane.xlu0 %116
    %v118 = vsel %vm89, %v112, 0.0
    %119 = vadd.xlane.f32.xlu0 %v118
    %v120 = vpop.xlane.xlu0 %119
    %v121 = vsel %vm89, %v113, 0.0
    %122 = vadd.xlane.f32.xlu0 %v121
    %v123 = vpop.xlane.xlu0 %122
    %v124 = vsel %vm89, %v114, 0.0
    %125 = vadd.xlane.f32.xlu0 %v124
    %v126 = vpop.xlane.xlu0 %125
    %v127 = vmul.f32 %v117, %v102
    %v128 = vmul.f32 %v120, %v102
    %v129 = vmul.f32 %v123, %v102
    %v130 = vmul.f32 %v126, %v102
    %v131 = vadd.f32 %v127, 1e-05
    %v132 = vadd.f32 %v128, 1e-05
    %v133 = vadd.f32 %v129, 1e-05
    %v134 = vadd.f32 %v130, 1e-05
    %v135 = vrsqrt.pop %v131
    %v136 = vrsqrt.pop %v132
    %v137 = vrsqrt.pop %v133
    %v138 = vrsqrt.pop %v134
    %v139 = vmul.f32 %v107, %v135
    %v140 = vmul.f32 %v108, %v136
    %v141 = vmul.f32 %v109, %v137
    %v142 = vmul.f32 %v110, %v138
    %v143 = vlaneseq
    %v144 = vshrl.u32 %v143, 7
    %v145 = vsub.s32 0, %v144
    %v146 = vrot.slane %v46, %v145
    %v147 = vmul.f32 %v139, %v146
    %v148 = vmul.f32 %v140, %v146
    %v149 = vmul.f32 %v141, %v146
    %v150 = vmul.f32 %v142, %v146
    %v151 = vlaneseq
    %v152 = vshrl.u32 %v151, 7
    %v153 = vsub.s32 1, %v152
    %v154 = vrot.slane %v46, %v153
    %v155 = vadd.f32 %v147, %v154
    %v156 = vadd.f32 %v148, %v154
    %v157 = vadd.f32 %v149, %v154
    %v158 = vadd.f32 %v150, %v154
    %v159 = vpack.c.bf16 %v156, %v155
    %v160 = vpack.c.bf16 %v158, %v157
    %v161 = vlaneseq
    %v162 = vshrl.u32 %v161, 7
    %v163 = vsub.s32 2, %v162
    %v164 = vrot.slane %v46, %v163
    %v169 = vunpack.c.l.b16 %v49
    %v170 = vunpack.c.l.b16 %v52
    %v171 = vunpack.c.l.b16 %v55
    %v172 = vunpack.c.l.b16 %v58
    %v173 = vpack.c.b16 %v170, %v169
    %v174 = vpack.c.b16 %v172, %v171
    %v178 = vsel %vm89, %v159, 0
    %v181 = vsel %vm89, %v160, 0
    %183 = vmatprep.subr.bf16.mxu0 0
    %184 = vmatpush1.bf16.msra.mxu0 %v173
    %185 = vmatprep.subr.bf16.mxu0 0
    %186 = vmatpush1.bf16.msra.mxu0 %v174
    %187 = vmatprep.subr.bf16.mxu0 0
    %188 = vmatpush1.bf16.msra.mxu0 0
    %189 = vmatprep.subr.bf16.mxu0 0
    %190 = vmatpush1.bf16.msra.mxu0 0
    %191 = vmatprep.subr.bf16.mxu0 0
    %192 = vmatpush1.bf16.msra.mxu0 0
    %193 = vmatprep.subr.bf16.mxu0 0
    %194 = vmatpush1.bf16.msra.mxu0 0
    %195 = vmatprep.subr.bf16.mxu0 0
    %196 = vmatpush1.bf16.msra.mxu0 0
    %197 = vmatprep.subr.bf16.mxu0 0
    %198 = vmatpush1.bf16.msra.mxu0 0
    %199 = vmatprep.subr.bf16.mxu0 0
    %200 = vmatpush1.bf16.msra.mxu0 0
    %201 = vmatprep.subr.bf16.mxu0 0
    %202 = vmatpush1.bf16.msra.mxu0 0
    %203 = vmatprep.subr.bf16.mxu0 0
    %204 = vmatpush1.bf16.msra.mxu0 0
    %205 = vmatprep.subr.bf16.mxu0 0
    %206 = vmatpush1.bf16.msra.mxu0 0
    %207 = vmatprep.subr.bf16.mxu0 0
    %208 = vmatpush1.bf16.msra.mxu0 0
    %209 = vmatprep.subr.bf16.mxu0 0
    %210 = vmatpush1.bf16.msra.mxu0 0
    %211 = vmatprep.subr.bf16.mxu0 0
    %212 = vmatpush1.bf16.msra.mxu0 0
    %213 = vmatprep.subr.bf16.mxu0 0
    %214 = vmatpush1.bf16.msra.mxu0 0
    %215 = vmatprep.mubr.bf16.mxu0 0
    %216 = vmatmul.mubr.bf16.gmra.mrb[0].mxu0 %v178
    %v217 = vpop.f32.mrb[0].mxu0
    %v218 = vadd.f32 %v164, %v217
    %v219 = vpop.f32.mrb[0].mxu0
    %v220 = vpop.f32.mrb[0].mxu0
    %v221 = vadd.f32 %v164, %v220
    %v222 = vpop.f32.mrb[0].mxu0
    %223 = vmatprep.mubr.bf16.mxu0 0
    %224 = vmatmul.mubr.bf16.gmra.mrb[0].mxu0 %v181
    %v225 = vpop.f32.mrb[0].mxu0
    %v226 = vadd.f32 %v164, %v225
    %v227 = vpop.f32.mrb[0].mxu0
    %v228 = vpop.f32.mrb[0].mxu0
    %v229 = vadd.f32 %v164, %v228
    %v230 = vpop.f32.mrb[0].mxu0
    %231 = vdwg.mxu0
    %v232 = vxor.u32 %v218, 2147483648
    %v233 = vxor.u32 %v221, 2147483648
    %v234 = vxor.u32 %v226, 2147483648
    %v235 = vxor.u32 %v229, 2147483648
    %v236 = vmul.f32 %v232, 1.442695
    %v237 = vpow.pop %v236
    %v238 = vmul.f32 %v233, 1.442695
    %v239 = vpow.pop %v238
    %v240 = vmul.f32 %v234, 1.442695
    %v241 = vpow.pop %v240
    %v242 = vmul.f32 %v235, 1.442695
    %v243 = vpow.pop %v242
    %v244 = vadd.f32 %v237, 1.0
    %v245 = vadd.f32 %v239, 1.0
    %v246 = vadd.f32 %v241, 1.0
    %v247 = vadd.f32 %v243, 1.0
    %v248 = vrcp.pop %v244
    %v249 = vmul.f32 1.0, %v248
    %v250 = vrcp.pop %v245
    %v251 = vmul.f32 1.0, %v250
    %v252 = vrcp.pop %v246
    %v253 = vmul.f32 1.0, %v252
    %v254 = vrcp.pop %v247
    %v255 = vmul.f32 1.0, %v254
    %v256 = vmul.f32 %v218, %v249
    %v257 = vmul.f32 %v221, %v251
    %v258 = vmul.f32 %v226, %v253
    %v259 = vmul.f32 %v229, %v255
    %v260 = vpack.c.bf16 %v257, %v256
    %v261 = vpack.c.bf16 %v259, %v258
    %v262 = vlaneseq
    %v263 = vshrl.u32 %v262, 7
    %v264 = vsub.s32 3, %v263
    %v265 = vrot.slane %v46, %v264
    %v282 = vunpack.c.l.b16 %v61
    %v283 = vunpack.c.l.b16 %v62
    %v284 = vunpack.c.l.b16 %v63
    %v285 = vunpack.c.l.b16 %v64
    %v286 = vunpack.c.l.b16 %v65
    %v287 = vunpack.c.l.b16 %v66
    %v288 = vunpack.c.l.b16 %v67
    %v289 = vunpack.c.l.b16 %v68
    %v290 = vunpack.c.l.b16 %v69
    %v291 = vunpack.c.l.b16 %v70
    %v292 = vunpack.c.l.b16 %v71
    %v293 = vunpack.c.l.b16 %v72
    %v294 = vunpack.c.l.b16 %v73
    %v295 = vunpack.c.l.b16 %v74
    %v296 = vunpack.c.l.b16 %v75
    %v297 = vunpack.c.l.b16 %v76
    %v298 = vpack.c.b16 %v283, %v282
    %v299 = vpack.c.b16 %v285, %v284
    %v300 = vpack.c.b16 %v287, %v286
    %v301 = vpack.c.b16 %v289, %v288
    %v302 = vpack.c.b16 %v291, %v290
    %v303 = vpack.c.b16 %v293, %v292
    %v304 = vpack.c.b16 %v295, %v294
    %v305 = vpack.c.b16 %v297, %v296
    %314 = vmatprep.subr.bf16.mxu0 0
    %315 = vmatpush1.bf16.msra.mxu0 %v298
    %316 = vmatprep.subr.bf16.mxu0 0
    %317 = vmatpush1.bf16.msra.mxu0 %v299
    %318 = vmatprep.subr.bf16.mxu0 0
    %319 = vmatpush1.bf16.msra.mxu0 %v300
    %320 = vmatprep.subr.bf16.mxu0 0
    %321 = vmatpush1.bf16.msra.mxu0 %v301
    %322 = vmatprep.subr.bf16.mxu0 0
    %323 = vmatpush1.bf16.msra.mxu0 %v302
    %324 = vmatprep.subr.bf16.mxu0 0
    %325 = vmatpush1.bf16.msra.mxu0 %v303
    %326 = vmatprep.subr.bf16.mxu0 0
    %327 = vmatpush1.bf16.msra.mxu0 %v304
    %328 = vmatprep.subr.bf16.mxu0 0
    %329 = vmatpush1.bf16.msra.mxu0 %v305
    %330 = vmatprep.subr.bf16.mxu0 0
    %331 = vmatpush1.bf16.msra.mxu0 0
    %332 = vmatprep.subr.bf16.mxu0 0
    %333 = vmatpush1.bf16.msra.mxu0 0
    %334 = vmatprep.subr.bf16.mxu0 0
    %335 = vmatpush1.bf16.msra.mxu0 0
    %336 = vmatprep.subr.bf16.mxu0 0
    %337 = vmatpush1.bf16.msra.mxu0 0
    %338 = vmatprep.subr.bf16.mxu0 0
    %339 = vmatpush1.bf16.msra.mxu0 0
    %340 = vmatprep.subr.bf16.mxu0 0
    %341 = vmatpush1.bf16.msra.mxu0 0
    %342 = vmatprep.subr.bf16.mxu0 0
    %343 = vmatpush1.bf16.msra.mxu0 0
    %344 = vmatprep.subr.bf16.mxu0 0
    %345 = vmatpush1.bf16.msra.mxu0 0
    %346 = vmatprep.mubr.bf16.mxu0 0
    %347 = vmatmul.mubr.bf16.gmra.mrb[0].mxu0 %v260
    %v348 = vpop.f32.mrb[0].mxu0
    %v349 = vadd.f32 %v265, %v348
    %v350 = vpop.f32.mrb[0].mxu0
    %v351 = vpop.f32.mrb[0].mxu0
    %v352 = vadd.f32 %v265, %v351
    %v353 = vpop.f32.mrb[0].mxu0
    %354 = vmatprep.mubr.bf16.mxu0 0
    %355 = vmatmul.mubr.bf16.gmra.mrb[0].mxu0 %v261
    %v356 = vpop.f32.mrb[0].mxu0
    %v357 = vadd.f32 %v265, %v356
    %v358 = vpop.f32.mrb[0].mxu0
    %v359 = vpop.f32.mrb[0].mxu0
    %v360 = vadd.f32 %v265, %v359
    %v361 = vpop.f32.mrb[0].mxu0
    %362 = vdwg.mxu0
    %v363 = vmul.f32 %v349, 0.5
    %v364 = vmul.f32 %v352, 0.5
    %v365 = vmul.f32 %v357, 0.5
    %v366 = vmul.f32 %v360, 0.5
    %v367 = vadd.f32 %v363, %v79
    %v368 = vadd.f32 %v364, %v80
    %v369 = vadd.f32 %v365, %v84
    %v370 = vadd.f32 %v366, %v86
    %373 = vrot.lane.b32.xlu0 %v369, 32
    %v374 = vpop.permute.xlu0 %373
    %375 = vrot.lane.b32.xlu0 %v370, 32
    %v376 = vpop.permute.xlu0 %375
    %v379 = vsel %vm89, %v367, %v374
    %v380 = vsel %vm89, %v368, %v376
    %vm381 = vcmask 523264
    %v382 = vsel %vm381, %v379, 0.0
    %383 = vadd.xlane.f32.xlu0 %v382
    %v384 = vpop.xlane.xlu0 %383
    %v385 = vsel %vm381, %v380, 0.0
    %386 = vadd.xlane.f32.xlu0 %v385
    %v387 = vpop.xlane.xlu0 %386
    %v388 = vrcp.pop 64.0
    %v389 = vmul.f32 %v384, %v388
    %v390 = vmul.f32 %v387, %v388
    %v391 = vsub.f32 %v379, %v389
    %v392 = vsub.f32 %v380, %v390
    %v393 = vmul.f32 %v391, %v391
    %v394 = vmul.f32 %v392, %v392
    %v395 = vsel %vm381, %v393, 0.0
    %396 = vadd.xlane.f32.xlu0 %v395
    %v397 = vpop.xlane.xlu0 %396
    %v398 = vsel %vm381, %v394, 0.0
    %399 = vadd.xlane.f32.xlu0 %v398
    %v400 = vpop.xlane.xlu0 %399
    %v401 = vmul.f32 %v397, %v388
    %v402 = vmul.f32 %v400, %v388
    %v403 = vadd.f32 %v401, 1e-05
    %v404 = vadd.f32 %v402, 1e-05
    %v405 = vrsqrt.pop %v403
    %v406 = vrsqrt.pop %v404
    %v407 = vmul.f32 %v391, %v405
    %v408 = vmul.f32 %v392, %v406
    %v409 = vlaneseq
    %v410 = vshrl.u32 %v409, 7
    %v411 = vsub.s32 4, %v410
    %v412 = vrot.slane %v46, %v411
    %v413 = vmul.f32 %v407, %v412
    %v414 = vmul.f32 %v408, %v412
    %v415 = vlaneseq
    %v416 = vshrl.u32 %v415, 7
    %v417 = vsub.s32 5, %v416
    %v418 = vrot.slane %v46, %v417
    %v419 = vadd.f32 %v413, %v418
    %v420 = vadd.f32 %v414, %v418
    %v421 = vpack.c.bf16 %v420, %v419
    %v422 = vld [vmem:[%s5] sm:$0xf]
    %v423 = vld [vmem:[%s5 + $0x4] sm:$0xf]
    %v424 = vld [vmem:[%s5 + $0x8] sm:$0xf]
    %v425 = vld [vmem:[%s5 + $0xc] sm:$0xf]
    %v426 = vld [vmem:[%s5 + $0x10] sm:$0xf]
    %v427 = vld [vmem:[%s5 + $0x14] sm:$0xf]
    %v428 = vld [vmem:[%s5 + $0x18] sm:$0xf]
    %v429 = vld [vmem:[%s5 + $0x1c] sm:$0xf]
    %v438 = vunpack.c.l.b16 %v422
    %v439 = vunpack.c.l.b16 %v423
    %v440 = vunpack.c.l.b16 %v424
    %v441 = vunpack.c.l.b16 %v425
    %v442 = vunpack.c.l.b16 %v426
    %v443 = vunpack.c.l.b16 %v427
    %v444 = vunpack.c.l.b16 %v428
    %v445 = vunpack.c.l.b16 %v429
    %v446 = vpack.c.b16 %v439, %v438
    %v447 = vpack.c.b16 %v441, %v440
    %v448 = vpack.c.b16 %v443, %v442
    %v449 = vpack.c.b16 %v445, %v444
    %v455 = vsel %vm381, %v421, 0
    %457 = vmatprep.subr.bf16.mxu0 0
    %458 = vmatpush1.bf16.msra.mxu0 %v446
    %459 = vmatprep.subr.bf16.mxu0 0
    %460 = vmatpush1.bf16.msra.mxu0 %v447
    %461 = vmatprep.subr.bf16.mxu0 0
    %462 = vmatpush1.bf16.msra.mxu0 %v448
    %463 = vmatprep.subr.bf16.mxu0 0
    %464 = vmatpush1.bf16.msra.mxu0 %v449
    %465 = vmatprep.subr.bf16.mxu0 0
    %466 = vmatpush1.bf16.msra.mxu0 0
    %467 = vmatprep.subr.bf16.mxu0 0
    %468 = vmatpush1.bf16.msra.mxu0 0
    %469 = vmatprep.subr.bf16.mxu0 0
    %470 = vmatpush1.bf16.msra.mxu0 0
    %471 = vmatprep.subr.bf16.mxu0 0
    %472 = vmatpush1.bf16.msra.mxu0 0
    %473 = vmatprep.subr.bf16.mxu0 0
    %474 = vmatpush1.bf16.msra.mxu0 0
    %475 = vmatprep.subr.bf16.mxu0 0
    %476 = vmatpush1.bf16.msra.mxu0 0
    %477 = vmatprep.subr.bf16.mxu0 0
    %478 = vmatpush1.bf16.msra.mxu0 0
    %479 = vmatprep.subr.bf16.mxu0 0
    %480 = vmatpush1.bf16.msra.mxu0 0
    %481 = vmatprep.subr.bf16.mxu0 0
    %482 = vmatpush1.bf16.msra.mxu0 0
    %483 = vmatprep.subr.bf16.mxu0 0
    %484 = vmatpush1.bf16.msra.mxu0 0
    %485 = vmatprep.subr.bf16.mxu0 0
    %486 = vmatpush1.bf16.msra.mxu0 0
    %487 = vmatprep.subr.bf16.mxu0 0
    %488 = vmatpush1.bf16.msra.mxu0 0
    %489 = vmatprep.mubr.bf16.mxu0 0
    %490 = vmatmul.mubr.bf16.gmra.mrb[0].mxu0 %v455
    %v491 = vpop.f32.mrb[0].mxu0
    %v492 = vadd.f32 0.0, %v491
    %v493 = vpop.f32.mrb[0].mxu0
    %v494 = vpop.f32.mrb[0].mxu0
    %v495 = vadd.f32 0.0, %v494
    %v496 = vpop.f32.mrb[0].mxu0
    %497 = vdwg.mxu0
    %v498 = vpack.c.bf16 %v495, %v492
    %v501 = vunpack.c.l.b16 %v77
    %v502 = vunpack.c.l.b16 %v78
    %v503 = vpack.c.b16 %v502, %v501
    %505 = vrot.lane.b32.xlu0 %v498, 96
    %v506 = vpop.permute.xlu0 %505
    %v507 = vunpack.c.h.b16 %v77
    %v508 = vunpack.c.h.b16 %v78
    %v509 = vpack.c.b16 %v508, %v507
    %511 = vrot.lane.b32.xlu0 %v498, 64
    %v512 = vpop.permute.xlu0 %511
    %v514 = vld [vmem:[%s1] sm:$0xff]
    %v515 = vld [vmem:[%s1 + $0x8] sm:$0xff]
    %v516 = vlaneseq
    %v517 = vshrl.u32 %v516, 7
    %v518 = vsub.s32 4, %v517
    %v519 = vrot.slane %v48, %v518
    %v520 = vmul.f32 %v492, %v519
    %v521 = vmul.f32 %v495, %v519
    %v522 = vpack.c.bf16 %v521, %v520
    %v524 = vsel %vm89, %v522, 0
    %v527 = vsel %vm89, %v503, 0
    %v530 = vsel %vm89, %v506, 0
    %532 = vmatprep.subr.bf16.mxu0 0
    %533 = vmatpush1.bf16.xpose.msra.mxu0 %v527
    %534 = vmatprep.subr.bf16.mxu0 0
    %535 = vmatpush1.bf16.xpose.msra.mxu0 %v530
    %536 = vmatprep.subr.bf16.mxu0 0
    %537 = vmatpush1.bf16.xpose.msra.mxu0 0
    %538 = vmatprep.subr.bf16.mxu0 0
    %539 = vmatpush1.bf16.xpose.msra.mxu0 0
    %540 = vmatprep.subr.bf16.mxu0 0
    %541 = vmatpush1.bf16.xpose.msra.mxu0 0
    %542 = vmatprep.subr.bf16.mxu0 0
    %543 = vmatpush1.bf16.xpose.msra.mxu0 0
    %544 = vmatprep.subr.bf16.mxu0 0
    %545 = vmatpush1.bf16.xpose.msra.mxu0 0
    %546 = vmatprep.subr.bf16.mxu0 0
    %547 = vmatpush1.bf16.xpose.msra.mxu0 0
    %548 = vmatprep.subr.bf16.mxu0 0
    %549 = vmatpush1.bf16.xpose.msra.mxu0 0
    %550 = vmatprep.subr.bf16.mxu0 0
    %551 = vmatpush1.bf16.xpose.msra.mxu0 0
    %552 = vmatprep.subr.bf16.mxu0 0
    %553 = vmatpush1.bf16.xpose.msra.mxu0 0
    %554 = vmatprep.subr.bf16.mxu0 0
    %555 = vmatpush1.bf16.xpose.msra.mxu0 0
    %556 = vmatprep.subr.bf16.mxu0 0
    %557 = vmatpush1.bf16.xpose.msra.mxu0 0
    %558 = vmatprep.subr.bf16.mxu0 0
    %559 = vmatpush1.bf16.xpose.msra.mxu0 0
    %560 = vmatprep.subr.bf16.mxu0 0
    %561 = vmatpush1.bf16.xpose.msra.mxu0 0
    %562 = vmatprep.subr.bf16.mxu0 0
    %563 = vmatpush1.bf16.xpose.msra.mxu0 0
    %564 = vmatprep.mubr.bf16.mxu0 0
    %565 = vmatmul.mubr.bf16.gmra.mrb[0].mxu0 %v524
    %v566 = vpop.f32.mrb[0].mxu0
    %v567 = vadd.f32 %v514, %v566
    %v568 = vpop.f32.mrb[0].mxu0
    %v569 = vpop.f32.mrb[0].mxu0
    %v570 = vadd.f32 %v515, %v569
    %v571 = vpop.f32.mrb[0].mxu0
    %572 = vdwg.mxu0
    %v573 = vsel %vm89, %v567, -inf
    %574 = vmax.xlane.f32.xlu0 %v573
    %v575 = vpop.xlane.xlu0 %574
    %v576 = vsel %vm89, %v570, -inf
    %577 = vmax.xlane.f32.xlu0 %v576
    %v578 = vpop.xlane.xlu0 %577
    %v579 = vsub.f32 %v567, %v575
    %v580 = vsub.f32 %v570, %v578
    %v581 = vmul.f32 %v579, 1.442695
    %v582 = vpow.pop %v581
    %v583 = vmul.f32 %v580, 1.442695
    %v584 = vpow.pop %v583
    %v585 = vsel %vm89, %v582, 0.0
    %586 = vadd.xlane.f32.xlu0 %v585
    %v587 = vpop.xlane.xlu0 %586
    %v588 = vsel %vm89, %v584, 0.0
    %589 = vadd.xlane.f32.xlu0 %v588
    %v590 = vpop.xlane.xlu0 %589
    %v591 = vrcp.pop %v587
    %v592 = vrcp.pop %v590
    %v593 = vmul.f32 %v582, %v591
    %v594 = vmul.f32 %v584, %v592
    %v595 = vlaneseq
    %v596 = vshrl.u32 %v595, 7
    %v597 = vsub.s32 5, %v596
    %v598 = vrot.slane %v48, %v597
    %v599 = vmul.f32 %v492, %v598
    %v600 = vmul.f32 %v495, %v598
    %v601 = vpack.c.bf16 %v600, %v599
    %v603 = vsel %vm89, %v601, 0
    %605 = vmatprep.subr.bf16.mxu0 0
    %606 = vmatpush1.bf16.xpose.msra.mxu0 %v527
    %607 = vmatprep.subr.bf16.mxu0 0
    %608 = vmatpush1.bf16.xpose.msra.mxu0 %v530
    %609 = vmatprep.subr.bf16.mxu0 0
    %610 = vmatpush1.bf16.xpose.msra.mxu0 0
    %611 = vmatprep.subr.bf16.mxu0 0
    %612 = vmatpush1.bf16.xpose.msra.mxu0 0
    %613 = vmatprep.subr.bf16.mxu0 0
    %614 = vmatpush1.bf16.xpose.msra.mxu0 0
    %615 = vmatprep.subr.bf16.mxu0 0
    %616 = vmatpush1.bf16.xpose.msra.mxu0 0
    %617 = vmatprep.subr.bf16.mxu0 0
    %618 = vmatpush1.bf16.xpose.msra.mxu0 0
    %619 = vmatprep.subr.bf16.mxu0 0
    %620 = vmatpush1.bf16.xpose.msra.mxu0 0
    %621 = vmatprep.subr.bf16.mxu0 0
    %622 = vmatpush1.bf16.xpose.msra.mxu0 0
    %623 = vmatprep.subr.bf16.mxu0 0
    %624 = vmatpush1.bf16.xpose.msra.mxu0 0
    %625 = vmatprep.subr.bf16.mxu0 0
    %626 = vmatpush1.bf16.xpose.msra.mxu0 0
    %627 = vmatprep.subr.bf16.mxu0 0
    %628 = vmatpush1.bf16.xpose.msra.mxu0 0
    %629 = vmatprep.subr.bf16.mxu0 0
    %630 = vmatpush1.bf16.xpose.msra.mxu0 0
    %631 = vmatprep.subr.bf16.mxu0 0
    %632 = vmatpush1.bf16.xpose.msra.mxu0 0
    %633 = vmatprep.subr.bf16.mxu0 0
    %634 = vmatpush1.bf16.xpose.msra.mxu0 0
    %635 = vmatprep.subr.bf16.mxu0 0
    %636 = vmatpush1.bf16.xpose.msra.mxu0 0
    %637 = vmatprep.mubr.bf16.mxu0 0
    %638 = vmatmul.mubr.bf16.gmra.mrb[0].mxu0 %v603
    %v639 = vpop.f32.mrb[0].mxu0
    %v640 = vadd.f32 %v514, %v639
    %v641 = vpop.f32.mrb[0].mxu0
    %v642 = vpop.f32.mrb[0].mxu0
    %v643 = vadd.f32 %v515, %v642
    %v644 = vpop.f32.mrb[0].mxu0
    %645 = vdwg.mxu0
    %v646 = vsel %vm89, %v640, -inf
    %647 = vmax.xlane.f32.xlu0 %v646
    %v648 = vpop.xlane.xlu0 %647
    %v649 = vsel %vm89, %v643, -inf
    %650 = vmax.xlane.f32.xlu0 %v649
    %v651 = vpop.xlane.xlu0 %650
    %v652 = vsub.f32 %v640, %v648
    %v653 = vsub.f32 %v643, %v651
    %v654 = vmul.f32 %v652, 1.442695
    %v655 = vpow.pop %v654
    %v656 = vmul.f32 %v653, 1.442695
    %v657 = vpow.pop %v656
    %v658 = vsel %vm89, %v655, 0.0
    %659 = vadd.xlane.f32.xlu0 %v658
    %v660 = vpop.xlane.xlu0 %659
    %v661 = vsel %vm89, %v657, 0.0
    %662 = vadd.xlane.f32.xlu0 %v661
    %v663 = vpop.xlane.xlu0 %662
    %v664 = vrcp.pop %v660
    %v665 = vrcp.pop %v663
    %v666 = vmul.f32 %v655, %v664
    %v667 = vmul.f32 %v657, %v665
    %v668 = vlaneseq
    %v669 = vshrl.u32 %v668, 7
    %v670 = vsub.s32 6, %v669
    %v671 = vrot.slane %v48, %v670
    %v672 = vmul.f32 %v492, %v671
    %v673 = vmul.f32 %v495, %v671
    %v674 = vpack.c.bf16 %v673, %v672
    %v676 = vsel %vm89, %v674, 0
    %678 = vmatprep.subr.bf16.mxu0 0
    %679 = vmatpush1.bf16.xpose.msra.mxu0 %v527
    %680 = vmatprep.subr.bf16.mxu0 0
    %681 = vmatpush1.bf16.xpose.msra.mxu0 %v530
    %682 = vmatprep.subr.bf16.mxu0 0
    %683 = vmatpush1.bf16.xpose.msra.mxu0 0
    %684 = vmatprep.subr.bf16.mxu0 0
    %685 = vmatpush1.bf16.xpose.msra.mxu0 0
    %686 = vmatprep.subr.bf16.mxu0 0
    %687 = vmatpush1.bf16.xpose.msra.mxu0 0
    %688 = vmatprep.subr.bf16.mxu0 0
    %689 = vmatpush1.bf16.xpose.msra.mxu0 0
    %690 = vmatprep.subr.bf16.mxu0 0
    %691 = vmatpush1.bf16.xpose.msra.mxu0 0
    %692 = vmatprep.subr.bf16.mxu0 0
    %693 = vmatpush1.bf16.xpose.msra.mxu0 0
    %694 = vmatprep.subr.bf16.mxu0 0
    %695 = vmatpush1.bf16.xpose.msra.mxu0 0
    %696 = vmatprep.subr.bf16.mxu0 0
    %697 = vmatpush1.bf16.xpose.msra.mxu0 0
    %698 = vmatprep.subr.bf16.mxu0 0
    %699 = vmatpush1.bf16.xpose.msra.mxu0 0
    %700 = vmatprep.subr.bf16.mxu0 0
    %701 = vmatpush1.bf16.xpose.msra.mxu0 0
    %702 = vmatprep.subr.bf16.mxu0 0
    %703 = vmatpush1.bf16.xpose.msra.mxu0 0
    %704 = vmatprep.subr.bf16.mxu0 0
    %705 = vmatpush1.bf16.xpose.msra.mxu0 0
    %706 = vmatprep.subr.bf16.mxu0 0
    %707 = vmatpush1.bf16.xpose.msra.mxu0 0
    %708 = vmatprep.subr.bf16.mxu0 0
    %709 = vmatpush1.bf16.xpose.msra.mxu0 0
    %710 = vmatprep.mubr.bf16.mxu0 0
    %711 = vmatmul.mubr.bf16.gmra.mrb[0].mxu0 %v676
    %v712 = vpop.f32.mrb[0].mxu0
    %v713 = vadd.f32 %v514, %v712
    %v714 = vpop.f32.mrb[0].mxu0
    %v715 = vpop.f32.mrb[0].mxu0
    %v716 = vadd.f32 %v515, %v715
    %v717 = vpop.f32.mrb[0].mxu0
    %718 = vdwg.mxu0
    %v719 = vsel %vm89, %v713, -inf
    %720 = vmax.xlane.f32.xlu0 %v719
    %v721 = vpop.xlane.xlu0 %720
    %v722 = vsel %vm89, %v716, -inf
    %723 = vmax.xlane.f32.xlu0 %v722
    %v724 = vpop.xlane.xlu0 %723
    %v725 = vsub.f32 %v713, %v721
    %v726 = vsub.f32 %v716, %v724
    %v727 = vmul.f32 %v725, 1.442695
    %v728 = vpow.pop %v727
    %v729 = vmul.f32 %v726, 1.442695
    %v730 = vpow.pop %v729
    %v731 = vsel %vm89, %v728, 0.0
    %732 = vadd.xlane.f32.xlu0 %v731
    %v733 = vpop.xlane.xlu0 %732
    %v734 = vsel %vm89, %v730, 0.0
    %735 = vadd.xlane.f32.xlu0 %v734
    %v736 = vpop.xlane.xlu0 %735
    %v737 = vrcp.pop %v733
    %v738 = vrcp.pop %v736
    %v739 = vmul.f32 %v728, %v737
    %v740 = vmul.f32 %v730, %v738
    %v741 = vlaneseq
    %v742 = vshrl.u32 %v741, 7
    %v743 = vsub.s32 7, %v742
    %v744 = vrot.slane %v48, %v743
    %v745 = vmul.f32 %v492, %v744
    %v746 = vmul.f32 %v495, %v744
    %v747 = vpack.c.bf16 %v746, %v745
    %v749 = vsel %vm89, %v747, 0
    %751 = vmatprep.subr.bf16.mxu0 0
    %752 = vmatpush1.bf16.xpose.msra.mxu0 %v527
    %753 = vmatprep.subr.bf16.mxu0 0
    %754 = vmatpush1.bf16.xpose.msra.mxu0 %v530
    %755 = vmatprep.subr.bf16.mxu0 0
    %756 = vmatpush1.bf16.xpose.msra.mxu0 0
    %757 = vmatprep.subr.bf16.mxu0 0
    %758 = vmatpush1.bf16.xpose.msra.mxu0 0
    %759 = vmatprep.subr.bf16.mxu0 0
    %760 = vmatpush1.bf16.xpose.msra.mxu0 0
    %761 = vmatprep.subr.bf16.mxu0 0
    %762 = vmatpush1.bf16.xpose.msra.mxu0 0
    %763 = vmatprep.subr.bf16.mxu0 0
    %764 = vmatpush1.bf16.xpose.msra.mxu0 0
    %765 = vmatprep.subr.bf16.mxu0 0
    %766 = vmatpush1.bf16.xpose.msra.mxu0 0
    %767 = vmatprep.subr.bf16.mxu0 0
    %768 = vmatpush1.bf16.xpose.msra.mxu0 0
    %769 = vmatprep.subr.bf16.mxu0 0
    %770 = vmatpush1.bf16.xpose.msra.mxu0 0
    %771 = vmatprep.subr.bf16.mxu0 0
    %772 = vmatpush1.bf16.xpose.msra.mxu0 0
    %773 = vmatprep.subr.bf16.mxu0 0
    %774 = vmatpush1.bf16.xpose.msra.mxu0 0
    %775 = vmatprep.subr.bf16.mxu0 0
    %776 = vmatpush1.bf16.xpose.msra.mxu0 0
    %777 = vmatprep.subr.bf16.mxu0 0
    %778 = vmatpush1.bf16.xpose.msra.mxu0 0
    %779 = vmatprep.subr.bf16.mxu0 0
    %780 = vmatpush1.bf16.xpose.msra.mxu0 0
    %781 = vmatprep.subr.bf16.mxu0 0
    %782 = vmatpush1.bf16.xpose.msra.mxu0 0
    %783 = vmatprep.mubr.bf16.mxu0 0
    %784 = vmatmul.mubr.bf16.gmra.mrb[0].mxu0 %v749
    %v785 = vpop.f32.mrb[0].mxu0
    %v786 = vadd.f32 %v514, %v785
    %v787 = vpop.f32.mrb[0].mxu0
    %v788 = vpop.f32.mrb[0].mxu0
    %v789 = vadd.f32 %v515, %v788
    %v790 = vpop.f32.mrb[0].mxu0
    %791 = vdwg.mxu0
    %v792 = vsel %vm89, %v786, -inf
    %793 = vmax.xlane.f32.xlu0 %v792
    %v794 = vpop.xlane.xlu0 %793
    %v795 = vsel %vm89, %v789, -inf
    %796 = vmax.xlane.f32.xlu0 %v795
    %v797 = vpop.xlane.xlu0 %796
    %v798 = vsub.f32 %v786, %v794
    %v799 = vsub.f32 %v789, %v797
    %v800 = vmul.f32 %v798, 1.442695
    %v801 = vpow.pop %v800
    %v802 = vmul.f32 %v799, 1.442695
    %v803 = vpow.pop %v802
    %v804 = vsel %vm89, %v801, 0.0
    %805 = vadd.xlane.f32.xlu0 %v804
    %v806 = vpop.xlane.xlu0 %805
    %v807 = vsel %vm89, %v803, 0.0
    %808 = vadd.xlane.f32.xlu0 %v807
    %v809 = vpop.xlane.xlu0 %808
    %v810 = vrcp.pop %v806
    %v811 = vrcp.pop %v809
    %v812 = vmul.f32 %v801, %v810
    %v813 = vmul.f32 %v803, %v811
    %s814 = sld [smem:[#allocation2]]
    %v815 = vstv %s814
    %v816 = vmul.f32 %v593, %v815
    %v817 = vmul.f32 %v594, %v815
    %s818 = sld [smem:[#allocation2 + $0x80]]
    %v819 = vstv %s818
    %v820 = vmul.f32 %v666, %v819
    %v821 = vmul.f32 %v667, %v819
    %v822 = vadd.f32 %v816, %v820
    %v823 = vadd.f32 %v817, %v821
    %s824 = sld [smem:[#allocation2 + $0x100]]
    %v825 = vstv %s824
    %v826 = vmul.f32 %v739, %v825
    %v827 = vmul.f32 %v740, %v825
    %v828 = vadd.f32 %v822, %v826
    %v829 = vadd.f32 %v823, %v827
    %s830 = sld [smem:[#allocation2 + $0x180]]
    %v831 = vstv %s830
    %v832 = vmul.f32 %v812, %v831
    %v833 = vmul.f32 %v813, %v831
    %v834 = vadd.f32 %v828, %v832
    %v835 = vadd.f32 %v829, %v833
    %v836 = vpack.c.bf16 %v835, %v834
    %v838 = vsel %vm89, %v836, 0
    %840 = vmatprep.subr.bf16.mxu0 0
    %841 = vmatpush1.bf16.msra.mxu0 %v509
    %842 = vmatprep.subr.bf16.mxu0 0
    %843 = vmatpush1.bf16.msra.mxu0 %v512
    %844 = vmatprep.subr.bf16.mxu0 0
    %845 = vmatpush1.bf16.msra.mxu0 0
    %846 = vmatprep.subr.bf16.mxu0 0
    %847 = vmatpush1.bf16.msra.mxu0 0
    %848 = vmatprep.subr.bf16.mxu0 0
    %849 = vmatpush1.bf16.msra.mxu0 0
    %850 = vmatprep.subr.bf16.mxu0 0
    %851 = vmatpush1.bf16.msra.mxu0 0
    %852 = vmatprep.subr.bf16.mxu0 0
    %853 = vmatpush1.bf16.msra.mxu0 0
    %854 = vmatprep.subr.bf16.mxu0 0
    %855 = vmatpush1.bf16.msra.mxu0 0
    %856 = vmatprep.subr.bf16.mxu0 0
    %857 = vmatpush1.bf16.msra.mxu0 0
    %858 = vmatprep.subr.bf16.mxu0 0
    %859 = vmatpush1.bf16.msra.mxu0 0
    %860 = vmatprep.subr.bf16.mxu0 0
    %861 = vmatpush1.bf16.msra.mxu0 0
    %862 = vmatprep.subr.bf16.mxu0 0
    %863 = vmatpush1.bf16.msra.mxu0 0
    %864 = vmatprep.subr.bf16.mxu0 0
    %865 = vmatpush1.bf16.msra.mxu0 0
    %866 = vmatprep.subr.bf16.mxu0 0
    %867 = vmatpush1.bf16.msra.mxu0 0
    %868 = vmatprep.subr.bf16.mxu0 0
    %869 = vmatpush1.bf16.msra.mxu0 0
    %870 = vmatprep.subr.bf16.mxu0 0
    %871 = vmatpush1.bf16.msra.mxu0 0
    %872 = vmatprep.mubr.bf16.mxu0 0
    %873 = vmatmul.mubr.bf16.gmra.mrb[0].mxu0 %v838
    %v874 = vpop.f32.mrb[0].mxu0
    %v875 = vadd.f32 0.0, %v874
    %v876 = vpop.f32.mrb[0].mxu0
    %v877 = vpop.f32.mrb[0].mxu0
    %v878 = vadd.f32 0.0, %v877
    %v879 = vpop.f32.mrb[0].mxu0
    %880 = vdwg.mxu0
    %s881 = sld [smem:[#allocation2 + $0x1]]
    %v882 = vstv %s881
    %v883 = vmul.f32 %v593, %v882
    %v884 = vmul.f32 %v594, %v882
    %s885 = sld [smem:[#allocation2 + $0x81]]
    %v886 = vstv %s885
    %v887 = vmul.f32 %v666, %v886
    %v888 = vmul.f32 %v667, %v886
    %v889 = vadd.f32 %v883, %v887
    %v890 = vadd.f32 %v884, %v888
    %s891 = sld [smem:[#allocation2 + $0x101]]
    %v892 = vstv %s891
    %v893 = vmul.f32 %v739, %v892
    %v894 = vmul.f32 %v740, %v892
    %v895 = vadd.f32 %v889, %v893
    %v896 = vadd.f32 %v890, %v894
    %s897 = sld [smem:[#allocation2 + $0x181]]
    %v898 = vstv %s897
    %v899 = vmul.f32 %v812, %v898
    %v900 = vmul.f32 %v813, %v898
    %v901 = vadd.f32 %v895, %v899
    %v902 = vadd.f32 %v896, %v900
    %v903 = vpack.c.bf16 %v902, %v901
    %904 = vrot.lane.b32.xlu0 %v509, 120
    %v905 = vpop.permute.xlu0 %904
    %906 = vrot.lane.b32.xlu0 %v512, 120
    %v907 = vpop.permute.xlu0 %906
    %v911 = vsel %vm89, %v903, 0
    %913 = vmatprep.subr.bf16.mxu0 0
    %914 = vmatpush1.bf16.msra.mxu0 %v905
    %915 = vmatprep.subr.bf16.mxu0 0
    %916 = vmatpush1.bf16.msra.mxu0 %v907
    %917 = vmatprep.subr.bf16.mxu0 0
    %918 = vmatpush1.bf16.msra.mxu0 0
    %919 = vmatprep.subr.bf16.mxu0 0
    %920 = vmatpush1.bf16.msra.mxu0 0
    %921 = vmatprep.subr.bf16.mxu0 0
    %922 = vmatpush1.bf16.msra.mxu0 0
    %923 = vmatprep.subr.bf16.mxu0 0
    %924 = vmatpush1.bf16.msra.mxu0 0
    %925 = vmatprep.subr.bf16.mxu0 0
    %926 = vmatpush1.bf16.msra.mxu0 0
    %927 = vmatprep.subr.bf16.mxu0 0
    %928 = vmatpush1.bf16.msra.mxu0 0
    %929 = vmatprep.subr.bf16.mxu0 0
    %930 = vmatpush1.bf16.msra.mxu0 0
    %931 = vmatprep.subr.bf16.mxu0 0
    %932 = vmatpush1.bf16.msra.mxu0 0
    %933 = vmatprep.subr.bf16.mxu0 0
    %934 = vmatpush1.bf16.msra.mxu0 0
    %935 = vmatprep.subr.bf16.mxu0 0
    %936 = vmatpush1.bf16.msra.mxu0 0
    %937 = vmatprep.subr.bf16.mxu0 0
    %938 = vmatpush1.bf16.msra.mxu0 0
    %939 = vmatprep.subr.bf16.mxu0 0
    %940 = vmatpush1.bf16.msra.mxu0 0
    %941 = vmatprep.subr.bf16.mxu0 0
    %942 = vmatpush1.bf16.msra.mxu0 0
    %943 = vmatprep.subr.bf16.mxu0 0
    %944 = vmatpush1.bf16.msra.mxu0 0
    %945 = vmatprep.mubr.bf16.mxu0 0
    %946 = vmatmul.mubr.bf16.gmra.mrb[0].mxu0 %v911
    %v947 = vpop.f32.mrb[0].mxu0
    %v948 = vadd.f32 0.0, %v947
    %v949 = vpop.f32.mrb[0].mxu0
    %v950 = vpop.f32.mrb[0].mxu0
    %v951 = vadd.f32 0.0, %v950
    %v952 = vpop.f32.mrb[0].mxu0
    %953 = vdwg.mxu0
    %s954 = sld [smem:[#allocation2 + $0x2]]
    %v955 = vstv %s954
    %v956 = vmul.f32 %v593, %v955
    %v957 = vmul.f32 %v594, %v955
    %s958 = sld [smem:[#allocation2 + $0x82]]
    %v959 = vstv %s958
    %v960 = vmul.f32 %v666, %v959
    %v961 = vmul.f32 %v667, %v959
    %v962 = vadd.f32 %v956, %v960
    %v963 = vadd.f32 %v957, %v961
    %s964 = sld [smem:[#allocation2 + $0x102]]
    %v965 = vstv %s964
    %v966 = vmul.f32 %v739, %v965
    %v967 = vmul.f32 %v740, %v965
    %v968 = vadd.f32 %v962, %v966
    %v969 = vadd.f32 %v963, %v967
    %s970 = sld [smem:[#allocation2 + $0x182]]
    %v971 = vstv %s970
    %v972 = vmul.f32 %v812, %v971
    %v973 = vmul.f32 %v813, %v971
    %v974 = vadd.f32 %v968, %v972
    %v975 = vadd.f32 %v969, %v973
    %v976 = vpack.c.bf16 %v975, %v974
    %977 = vrot.lane.b32.xlu0 %v509, 112
    %v978 = vpop.permute.xlu0 %977
    %979 = vrot.lane.b32.xlu0 %v512, 112
    %v980 = vpop.permute.xlu0 %979
    %v984 = vsel %vm89, %v976, 0
    %986 = vmatprep.subr.bf16.mxu0 0
    %987 = vmatpush1.bf16.msra.mxu0 %v978
    %988 = vmatprep.subr.bf16.mxu0 0
    %989 = vmatpush1.bf16.msra.mxu0 %v980
    %990 = vmatprep.subr.bf16.mxu0 0
    %991 = vmatpush1.bf16.msra.mxu0 0
    %992 = vmatprep.subr.bf16.mxu0 0
    %993 = vmatpush1.bf16.msra.mxu0 0
    %994 = vmatprep.subr.bf16.mxu0 0
    %995 = vmatpush1.bf16.msra.mxu0 0
    %996 = vmatprep.subr.bf16.mxu0 0
    %997 = vmatpush1.bf16.msra.mxu0 0
    %998 = vmatprep.subr.bf16.mxu0 0
    %999 = vmatpush1.bf16.msra.mxu0 0
    %1000 = vmatprep.subr.bf16.mxu0 0
    %1001 = vmatpush1.bf16.msra.mxu0 0
    %1002 = vmatprep.subr.bf16.mxu0 0
    %1003 = vmatpush1.bf16.msra.mxu0 0
    %1004 = vmatprep.subr.bf16.mxu0 0
    %1005 = vmatpush1.bf16.msra.mxu0 0
    %1006 = vmatprep.subr.bf16.mxu0 0
    %1007 = vmatpush1.bf16.msra.mxu0 0
    %1008 = vmatprep.subr.bf16.mxu0 0
    %1009 = vmatpush1.bf16.msra.mxu0 0
    %1010 = vmatprep.subr.bf16.mxu0 0
    %1011 = vmatpush1.bf16.msra.mxu0 0
    %1012 = vmatprep.subr.bf16.mxu0 0
    %1013 = vmatpush1.bf16.msra.mxu0 0
    %1014 = vmatprep.subr.bf16.mxu0 0
    %1015 = vmatpush1.bf16.msra.mxu0 0
    %1016 = vmatprep.subr.bf16.mxu0 0
    %1017 = vmatpush1.bf16.msra.mxu0 0
    %1018 = vmatprep.mubr.bf16.mxu0 0
    %1019 = vmatmul.mubr.bf16.gmra.mrb[0].mxu0 %v984
    %v1020 = vpop.f32.mrb[0].mxu0
    %v1021 = vadd.f32 0.0, %v1020
    %v1022 = vpop.f32.mrb[0].mxu0
    %v1023 = vpop.f32.mrb[0].mxu0
    %v1024 = vadd.f32 0.0, %v1023
    %v1025 = vpop.f32.mrb[0].mxu0
    %1026 = vdwg.mxu0
    %s1027 = sld [smem:[#allocation2 + $0x3]]
    %v1028 = vstv %s1027
    %v1029 = vmul.f32 %v593, %v1028
    %v1030 = vmul.f32 %v594, %v1028
    %s1031 = sld [smem:[#allocation2 + $0x83]]
    %v1032 = vstv %s1031
    %v1033 = vmul.f32 %v666, %v1032
    %v1034 = vmul.f32 %v667, %v1032
    %v1035 = vadd.f32 %v1029, %v1033
    %v1036 = vadd.f32 %v1030, %v1034
    %s1037 = sld [smem:[#allocation2 + $0x103]]
    %v1038 = vstv %s1037
    %v1039 = vmul.f32 %v739, %v1038
    %v1040 = vmul.f32 %v740, %v1038
    %v1041 = vadd.f32 %v1035, %v1039
    %v1042 = vadd.f32 %v1036, %v1040
    %s1043 = sld [smem:[#allocation2 + $0x183]]
    %v1044 = vstv %s1043
    %v1045 = vmul.f32 %v812, %v1044
    %v1046 = vmul.f32 %v813, %v1044
    %v1047 = vadd.f32 %v1041, %v1045
    %v1048 = vadd.f32 %v1042, %v1046
    %v1049 = vpack.c.bf16 %v1048, %v1047
    %1050 = vrot.lane.b32.xlu0 %v509, 104
    %v1051 = vpop.permute.xlu0 %1050
    %1052 = vrot.lane.b32.xlu0 %v512, 104
    %v1053 = vpop.permute.xlu0 %1052
    %v1057 = vsel %vm89, %v1049, 0
    %1059 = vmatprep.subr.bf16.mxu0 0
    %1060 = vmatpush1.bf16.msra.mxu0 %v1051
    %1061 = vmatprep.subr.bf16.mxu0 0
    %1062 = vmatpush1.bf16.msra.mxu0 %v1053
    %1063 = vmatprep.subr.bf16.mxu0 0
    %1064 = vmatpush1.bf16.msra.mxu0 0
    %1065 = vmatprep.subr.bf16.mxu0 0
    %1066 = vmatpush1.bf16.msra.mxu0 0
    %1067 = vmatprep.subr.bf16.mxu0 0
    %1068 = vmatpush1.bf16.msra.mxu0 0
    %1069 = vmatprep.subr.bf16.mxu0 0
    %1070 = vmatpush1.bf16.msra.mxu0 0
    %1071 = vmatprep.subr.bf16.mxu0 0
    %1072 = vmatpush1.bf16.msra.mxu0 0
    %1073 = vmatprep.subr.bf16.mxu0 0
    %1074 = vmatpush1.bf16.msra.mxu0 0
    %1075 = vmatprep.subr.bf16.mxu0 0
    %1076 = vmatpush1.bf16.msra.mxu0 0
    %1077 = vmatprep.subr.bf16.mxu0 0
    %1078 = vmatpush1.bf16.msra.mxu0 0
    %1079 = vmatprep.subr.bf16.mxu0 0
    %1080 = vmatpush1.bf16.msra.mxu0 0
    %1081 = vmatprep.subr.bf16.mxu0 0
    %1082 = vmatpush1.bf16.msra.mxu0 0
    %1083 = vmatprep.subr.bf16.mxu0 0
    %1084 = vmatpush1.bf16.msra.mxu0 0
    %1085 = vmatprep.subr.bf16.mxu0 0
    %1086 = vmatpush1.bf16.msra.mxu0 0
    %1087 = vmatprep.subr.bf16.mxu0 0
    %1088 = vmatpush1.bf16.msra.mxu0 0
    %1089 = vmatprep.subr.bf16.mxu0 0
    %1090 = vmatpush1.bf16.msra.mxu0 0
    %1091 = vmatprep.mubr.bf16.mxu0 0
    %1092 = vmatmul.mubr.bf16.gmra.mrb[0].mxu0 %v1057
    %v1093 = vpop.f32.mrb[0].mxu0
    %v1094 = vadd.f32 0.0, %v1093
    %v1095 = vpop.f32.mrb[0].mxu0
    %v1096 = vpop.f32.mrb[0].mxu0
    %v1097 = vadd.f32 0.0, %v1096
    %v1098 = vpop.f32.mrb[0].mxu0
    %1099 = vdwg.mxu0
    %1102 = vrot.lane.b32.xlu0 %v948, 8
    %v1103 = vpop.permute.xlu0 %1102
    %1104 = vrot.lane.b32.xlu0 %v951, 8
    %v1105 = vpop.permute.xlu0 %1104
    %1110 = vrot.lane.b32.xlu0 %v1021, 16
    %v1111 = vpop.permute.xlu0 %1110
    %1112 = vrot.lane.b32.xlu0 %v1024, 16
    %v1113 = vpop.permute.xlu0 %1112
    %1118 = vrot.lane.b32.xlu0 %v1094, 24
    %v1119 = vpop.permute.xlu0 %1118
    %1120 = vrot.lane.b32.xlu0 %v1097, 24
    %v1121 = vpop.permute.xlu0 %1120
    %vm1124 = vcmask 64512
    %v1125 = vsel %vm1124, %v875, %v1103
    %v1126 = vsel %vm1124, %v878, %v1105
    %vm1127 = vcmask 130048
    %v1128 = vsel %vm1127, %v1125, %v1111
    %v1129 = vsel %vm1127, %v1126, %v1113
    %vm1130 = vcmask 195584
    %v1131 = vsel %vm1130, %v1128, %v1119
    %v1132 = vsel %vm1130, %v1129, %v1121
    %v1133 = vpack.c.bf16 %v1132, %v1131
    %v1134 = vlaneseq
    %v1135 = vshrl.u32 %v1134, 7
    %v1136 = vsub.s32 6, %v1135
    %v1137 = vrot.slane %v46, %v1136
    %v1142 = vunpack.c.l.b16 %v51
    %v1143 = vunpack.c.l.b16 %v54
    %v1144 = vunpack.c.l.b16 %v57
    %v1145 = vunpack.c.l.b16 %v60
    %v1146 = vpack.c.b16 %v1143, %v1142
    %v1147 = vpack.c.b16 %v1145, %v1144
    %v1151 = vsel %vm89, %v1133, 0
    %1153 = vmatprep.subr.bf16.mxu0 0
    %1154 = vmatpush1.bf16.msra.mxu0 %v1146
    %1155 = vmatprep.subr.bf16.mxu0 0
    %1156 = vmatpush1.bf16.msra.mxu0 %v1147
    %1157 = vmatprep.subr.bf16.mxu0 0
    %1158 = vmatpush1.bf16.msra.mxu0 0
    %1159 = vmatprep.subr.bf16.mxu0 0
    %1160 = vmatpush1.bf16.msra.mxu0 0
    %1161 = vmatprep.subr.bf16.mxu0 0
    %1162 = vmatpush1.bf16.msra.mxu0 0
    %1163 = vmatprep.subr.bf16.mxu0 0
    %1164 = vmatpush1.bf16.msra.mxu0 0
    %1165 = vmatprep.subr.bf16.mxu0 0
    %1166 = vmatpush1.bf16.msra.mxu0 0
    %1167 = vmatprep.subr.bf16.mxu0 0
    %1168 = vmatpush1.bf16.msra.mxu0 0
    %1169 = vmatprep.subr.bf16.mxu0 0
    %1170 = vmatpush1.bf16.msra.mxu0 0
    %1171 = vmatprep.subr.bf16.mxu0 0
    %1172 = vmatpush1.bf16.msra.mxu0 0
    %1173 = vmatprep.subr.bf16.mxu0 0
    %1174 = vmatpush1.bf16.msra.mxu0 0
    %1175 = vmatprep.subr.bf16.mxu0 0
    %1176 = vmatpush1.bf16.msra.mxu0 0
    %1177 = vmatprep.subr.bf16.mxu0 0
    %1178 = vmatpush1.bf16.msra.mxu0 0
    %1179 = vmatprep.subr.bf16.mxu0 0
    %1180 = vmatpush1.bf16.msra.mxu0 0
    %1181 = vmatprep.subr.bf16.mxu0 0
    %1182 = vmatpush1.bf16.msra.mxu0 0
    %1183 = vmatprep.subr.bf16.mxu0 0
    %1184 = vmatpush1.bf16.msra.mxu0 0
    %1185 = vmatprep.mubr.bf16.mxu0 0
    %1186 = vmatmul.mubr.bf16.gmra.mrb[0].mxu0 %v1151
    %v1187 = vpop.f32.mrb[0].mxu0
    %v1188 = vadd.f32 %v1137, %v1187
    %v1189 = vpop.f32.mrb[0].mxu0
    %v1190 = vpop.f32.mrb[0].mxu0
    %v1191 = vadd.f32 %v1137, %v1190
    %v1192 = vpop.f32.mrb[0].mxu0
    %1193 = vdwg.mxu0
    %v1194 = vadd.f32 %v379, %v1188
    %v1195 = vadd.f32 %v380, %v1191
    %1198 = vrot.lane.b32.xlu0 %v1194, 96
    %v1199 = vpop.permute.xlu0 %1198
    %1200 = vrot.lane.b32.xlu0 %v1195, 96
    %v1201 = vpop.permute.xlu0 %1200
    %v1204 = vsel %vm89, %v1194, 0.0
    %1205 = vadd.xlane.f32.xlu0 %v1204
    %v1206 = vpop.xlane.xlu0 %1205
    %v1207 = vsel %vm89, %v1195, 0.0
    %1208 = vadd.xlane.f32.xlu0 %v1207
    %v1209 = vpop.xlane.xlu0 %1208
    %v1210 = vsel %vm89, %v1199, 0.0
    %1211 = vadd.xlane.f32.xlu0 %v1210
    %v1212 = vpop.xlane.xlu0 %1211
    %v1213 = vsel %vm89, %v1201, 0.0
    %1214 = vadd.xlane.f32.xlu0 %v1213
    %v1215 = vpop.xlane.xlu0 %1214
    %v1216 = vmul.f32 %v1206, %v102
    %v1217 = vmul.f32 %v1209, %v102
    %v1218 = vmul.f32 %v1212, %v102
    %v1219 = vmul.f32 %v1215, %v102
    %v1220 = vsub.f32 %v1194, %v1216
    %v1221 = vsub.f32 %v1195, %v1217
    %v1222 = vsub.f32 %v1199, %v1218
    %v1223 = vsub.f32 %v1201, %v1219
    %v1224 = vmul.f32 %v1220, %v1220
    %v1225 = vmul.f32 %v1221, %v1221
    %v1226 = vmul.f32 %v1222, %v1222
    %v1227 = vmul.f32 %v1223, %v1223
    %v1228 = vsel %vm89, %v1224, 0.0
    %1229 = vadd.xlane.f32.xlu0 %v1228
    %v1230 = vpop.xlane.xlu0 %1229
    %v1231 = vsel %vm89, %v1225, 0.0
    %1232 = vadd.xlane.f32.xlu0 %v1231
    %v1233 = vpop.xlane.xlu0 %1232
    %v1234 = vsel %vm89, %v1226, 0.0
    %1235 = vadd.xlane.f32.xlu0 %v1234
    %v1236 = vpop.xlane.xlu0 %1235
    %v1237 = vsel %vm89, %v1227, 0.0
    %1238 = vadd.xlane.f32.xlu0 %v1237
    %v1239 = vpop.xlane.xlu0 %1238
    %v1240 = vmul.f32 %v1230, %v102
    %v1241 = vmul.f32 %v1233, %v102
    %v1242 = vmul.f32 %v1236, %v102
    %v1243 = vmul.f32 %v1239, %v102
    %v1244 = vadd.f32 %v1240, 1e-05
    %v1245 = vadd.f32 %v1241, 1e-05
    %v1246 = vadd.f32 %v1242, 1e-05
    %v1247 = vadd.f32 %v1243, 1e-05
    %v1248 = vrsqrt.pop %v1244
    %v1249 = vrsqrt.pop %v1245
    %v1250 = vrsqrt.pop %v1246
    %v1251 = vrsqrt.pop %v1247
    %v1252 = vmul.f32 %v1220, %v1248
    %v1253 = vmul.f32 %v1221, %v1249
    %v1254 = vmul.f32 %v1222, %v1250
    %v1255 = vmul.f32 %v1223, %v1251
    %v1256 = vlaneseq
    %v1257 = vshrl.u32 %v1256, 7
    %v1258 = vsub.s32 7, %v1257
    %v1259 = vrot.slane %v46, %v1258
    %v1260 = vmul.f32 %v1252, %v1259
    %v1261 = vmul.f32 %v1253, %v1259
    %v1262 = vmul.f32 %v1254, %v1259
    %v1263 = vmul.f32 %v1255, %v1259
    %v1264 = vlaneseq
    %v1265 = vshrl.u32 %v1264, 7
    %v1266 = vsub.s32 0, %v1265
    %v1267 = vrot.slane %v47, %v1266
    %v1268 = vadd.f32 %v1260, %v1267
    %v1269 = vadd.f32 %v1261, %v1267
    %v1270 = vadd.f32 %v1262, %v1267
    %v1271 = vadd.f32 %v1263, %v1267
    %v1272 = vpack.c.bf16 %v1269, %v1268
    %v1273 = vpack.c.bf16 %v1271, %v1270
    %v1274 = vlaneseq
    %v1275 = vshrl.u32 %v1274, 7
    %v1276 = vsub.s32 1, %v1275
    %v1277 = vrot.slane %v47, %v1276
    %v1282 = vunpack.c.l.b16 %v50
    %v1283 = vunpack.c.l.b16 %v53
    %v1284 = vunpack.c.l.b16 %v56
    %v1285 = vunpack.c.l.b16 %v59
    %v1286 = vpack.c.b16 %v1283, %v1282
    %v1287 = vpack.c.b16 %v1285, %v1284
    %v1291 = vsel %vm89, %v1272, 0
    %v1294 = vsel %vm89, %v1273, 0
    %1296 = vmatprep.subr.bf16.mxu0 0
    %1297 = vmatpush1.bf16.msra.mxu0 %v1286
    %1298 = vmatprep.subr.bf16.mxu0 0
    %1299 = vmatpush1.bf16.msra.mxu0 %v1287
    %1300 = vmatprep.subr.bf16.mxu0 0
    %1301 = vmatpush1.bf16.msra.mxu0 0
    %1302 = vmatprep.subr.bf16.mxu0 0
    %1303 = vmatpush1.bf16.msra.mxu0 0
    %1304 = vmatprep.subr.bf16.mxu0 0
    %1305 = vmatpush1.bf16.msra.mxu0 0
    %1306 = vmatprep.subr.bf16.mxu0 0
    %1307 = vmatpush1.bf16.msra.mxu0 0
    %1308 = vmatprep.subr.bf16.mxu0 0
    %1309 = vmatpush1.bf16.msra.mxu0 0
    %1310 = vmatprep.subr.bf16.mxu0 0
    %1311 = vmatpush1.bf16.msra.mxu0 0
    %1312 = vmatprep.subr.bf16.mxu0 0
    %1313 = vmatpush1.bf16.msra.mxu0 0
    %1314 = vmatprep.subr.bf16.mxu0 0
    %1315 = vmatpush1.bf16.msra.mxu0 0
    %1316 = vmatprep.subr.bf16.mxu0 0
    %1317 = vmatpush1.bf16.msra.mxu0 0
    %1318 = vmatprep.subr.bf16.mxu0 0
    %1319 = vmatpush1.bf16.msra.mxu0 0
    %1320 = vmatprep.subr.bf16.mxu0 0
    %1321 = vmatpush1.bf16.msra.mxu0 0
    %1322 = vmatprep.subr.bf16.mxu0 0
    %1323 = vmatpush1.bf16.msra.mxu0 0
    %1324 = vmatprep.subr.bf16.mxu0 0
    %1325 = vmatpush1.bf16.msra.mxu0 0
    %1326 = vmatprep.subr.bf16.mxu0 0
    %1327 = vmatpush1.bf16.msra.mxu0 0
    %1328 = vmatprep.mubr.bf16.mxu0 0
    %1329 = vmatmul.mubr.bf16.gmra.mrb[0].mxu0 %v1291
    %v1330 = vpop.f32.mrb[0].mxu0
    %v1331 = vadd.f32 %v1277, %v1330
    %v1332 = vpop.f32.mrb[0].mxu0
    %v1333 = vpop.f32.mrb[0].mxu0
    %v1334 = vadd.f32 %v1277, %v1333
    %v1335 = vpop.f32.mrb[0].mxu0
    %1336 = vmatprep.mubr.bf16.mxu0 0
    %1337 = vmatmul.mubr.bf16.gmra.mrb[0].mxu0 %v1294
    %v1338 = vpop.f32.mrb[0].mxu0
    %v1339 = vadd.f32 %v1277, %v1338
    %v1340 = vpop.f32.mrb[0].mxu0
    %v1341 = vpop.f32.mrb[0].mxu0
    %v1342 = vadd.f32 %v1277, %v1341
    %v1343 = vpop.f32.mrb[0].mxu0
    %1344 = vdwg.mxu0
    %v1345 = vxor.u32 %v1331, 2147483648
    %v1346 = vxor.u32 %v1334, 2147483648
    %v1347 = vxor.u32 %v1339, 2147483648
    %v1348 = vxor.u32 %v1342, 2147483648
    %v1349 = vmul.f32 %v1345, 1.442695
    %v1350 = vpow.pop %v1349
    %v1351 = vmul.f32 %v1346, 1.442695
    %v1352 = vpow.pop %v1351
    %v1353 = vmul.f32 %v1347, 1.442695
    %v1354 = vpow.pop %v1353
    %v1355 = vmul.f32 %v1348, 1.442695
    %v1356 = vpow.pop %v1355
    %v1357 = vadd.f32 %v1350, 1.0
    %v1358 = vadd.f32 %v1352, 1.0
    %v1359 = vadd.f32 %v1354, 1.0
    %v1360 = vadd.f32 %v1356, 1.0
    %v1361 = vrcp.pop %v1357
    %v1362 = vmul.f32 1.0, %v1361
    %v1363 = vrcp.pop %v1358
    %v1364 = vmul.f32 1.0, %v1363
    %v1365 = vrcp.pop %v1359
    %v1366 = vmul.f32 1.0, %v1365
    %v1367 = vrcp.pop %v1360
    %v1368 = vmul.f32 1.0, %v1367
    %1373 = vrot.lane.b32.xlu0 %v1362, 96
    %v1374 = vpop.permute.xlu0 %1373
    %1375 = vrot.lane.b32.xlu0 %v1364, 96
    %v1376 = vpop.permute.xlu0 %1375
    %1377 = vrot.lane.b32.xlu0 %v1366, 96
    %v1378 = vpop.permute.xlu0 %1377
    %1379 = vrot.lane.b32.xlu0 %v1368, 96
    %v1380 = vpop.permute.xlu0 %1379
    %v1385 = vmul.f32 %v1331, %v1374
    %v1386 = vmul.f32 %v1334, %v1376
    %v1387 = vmul.f32 %v1339, %v1378
    %v1388 = vmul.f32 %v1342, %v1380
    %v1389 = vld [vmem:[%s7] sm:$0xff]
    %v1390 = vld [vmem:[%s7 + $0x8] sm:$0xff]
    %v1391 = vld [vmem:[%s7 + $0x10] sm:$0xff]
    %v1392 = vld [vmem:[%s7 + $0x18] sm:$0x7f]
    %v1393 = vlaneseq
    %v1394 = vshrl.u32 %v1393, 7
    %v1395 = vadd.s32 %v1394, 8
    %vm1396 = vcmp.lt.s32.totalorder %v1394, 0
    %v1397 = vsub.s32 0, %v1394
    %v1398 = vsel %vm1396, %v1397, %v1394
    %v1399 = vshrl.u32 %v1398, 3
    %v1400 = vand.u32 %v1398, 7
    %v1401 = vsub.s32 0, %v1400
    %v1402 = vsel %vm1396, %v1401, %v1400
    %vm1403 = vcmp.lt.s32.totalorder %v1395, 0
    %v1404 = vsub.s32 0, %v1395
    %v1405 = vsel %vm1403, %v1404, %v1395
    %v1406 = vshrl.u32 %v1405, 3
    %v1407 = vand.u32 %v1405, 7
    %v1408 = vsub.s32 0, %v1407
    %v1409 = vsel %vm1403, %v1408, %v1407
    %vm1410 = vcmp.ne.s32.totalorder %v1402, 0
    %vm1411 = vcmp.ne.s32.totalorder %v1409, 0
    %vm1412 = vcmp.lt.s32.totalorder %v1402, 0
    %vm1413 = vcmp.lt.s32.totalorder %v1409, 0
    %vm1414 = vmand %vm1412, %vm1410
    %vm1415 = vmand %vm1413, %vm1411
    %v1416 = vadd.s32 %v1402, 8
    %v1417 = vadd.s32 %v1409, 8
    %v1418 = vsel %vm1414, %v1416, %v1402
    %v1419 = vsel %vm1415, %v1417, %v1409
    %v1420 = vlaneseq
    %v1421 = vshrl.u32 %v1420, 7
    %v1422 = vsub.s32 2, %v1421
    %v1423 = vrot.slane %v47, %v1422
    %v1424 = vadd.f32 %v1423, 0.0
    %v1425 = vrot.slane %v1385, 1
    %v1426 = vrot.slane %v1386, 1
    %vm1427 = vcmp.lt.s32.totalorder %v1394, 7
    %v1428 = vsel %vm1427, %v1425, %v1426
    %v1429 = vsel %vm1427, %v1426, %v1425
    %vm1430 = vcmp.ge.s32.totalorder %v1418, 7
    %vm1431 = vcmp.ge.s32.totalorder %v1419, 7
    %vm1432 = vcmp.lt.s32.totalorder %v1418, 8
    %vm1433 = vcmp.lt.s32.totalorder %v1419, 8
    %vm1434 = vmand %vm1430, %vm1432
    %vm1435 = vmand %vm1431, %vm1433
    %v1436 = vlaneseq
    %v1437 = vshrl.u32 %v1436, 7
    %v1438 = vsub.s32 1, %v1437
    %v1439 = vrot.slane %v1389, %v1438
    %v1440 = vmul.f32 %v1429, %v1439
    %v1441 = vmul.f32 %v1428, %v1439
    %v1442 = vsel %vm1434, %v1440, 0.0
    %v1443 = vsel %vm1435, %v1441, 0.0
    %v1444 = vadd.f32 %v1424, %v1442
    %v1445 = vadd.f32 %v1424, %v1443
    %v1446 = vrot.slane %v1387, 1
    %v1447 = vrot.slane %v1388, 1
    %v1448 = vsel %vm1427, %v1446, %v1447
    %v1449 = vsel %vm1427, %v1447, %v1446
    %v1450 = vlaneseq
    %v1451 = vshrl.u32 %v1450, 7
    %v1452 = vsub.s32 2, %v1451
    %v1453 = vrot.slane %v1389, %v1452
    %v1454 = vmul.f32 %v1449, %v1453
    %v1455 = vmul.f32 %v1448, %v1453
    %v1456 = vsel %vm1434, %v1454, 0.0
    %v1457 = vsel %vm1435, %v1455, 0.0
    %v1458 = vadd.f32 %v1444, %v1456
    %v1459 = vadd.f32 %v1445, %v1457
    %v1460 = vrot.slane %v1385, 2
    %v1461 = vrot.slane %v1386, 2
    %vm1462 = vcmp.lt.s32.totalorder %v1394, 6
    %v1463 = vsel %vm1462, %v1460, %v1461
    %v1464 = vsel %vm1462, %v1461, %v1460
    %vm1465 = vcmp.ge.s32.totalorder %v1418, 6
    %vm1466 = vcmp.ge.s32.totalorder %v1419, 6
    %vm1467 = vmand %vm1465, %vm1432
    %vm1468 = vmand %vm1466, %vm1433
    %v1469 = vlaneseq
    %v1470 = vshrl.u32 %v1469, 7
    %v1471 = vsub.s32 3, %v1470
    %v1472 = vrot.slane %v1389, %v1471
    %v1473 = vmul.f32 %v1464, %v1472
    %v1474 = vmul.f32 %v1463, %v1472
    %v1475 = vsel %vm1467, %v1473, 0.0
    %v1476 = vsel %vm1468, %v1474, 0.0
    %v1477 = vadd.f32 %v1458, %v1475
    %v1478 = vadd.f32 %v1459, %v1476
    %v1479 = vrot.slane %v1387, 2
    %v1480 = vrot.slane %v1388, 2
    %v1481 = vsel %vm1462, %v1479, %v1480
    %v1482 = vsel %vm1462, %v1480, %v1479
    %v1483 = vlaneseq
    %v1484 = vshrl.u32 %v1483, 7
    %v1485 = vsub.s32 4, %v1484
    %v1486 = vrot.slane %v1389, %v1485
    %v1487 = vmul.f32 %v1482, %v1486
    %v1488 = vmul.f32 %v1481, %v1486
    %v1489 = vsel %vm1467, %v1487, 0.0
    %v1490 = vsel %vm1468, %v1488, 0.0
    %v1491 = vadd.f32 %v1477, %v1489
    %v1492 = vadd.f32 %v1478, %v1490
    %v1493 = vrot.slane %v1385, 3
    %v1494 = vrot.slane %v1386, 3
    %vm1495 = vcmp.lt.s32.totalorder %v1394, 5
    %v1496 = vsel %vm1495, %v1493, %v1494
    %v1497 = vsel %vm1495, %v1494, %v1493
    %vm1498 = vcmp.ge.s32.totalorder %v1418, 5
    %vm1499 = vcmp.ge.s32.totalorder %v1419, 5
    %vm1500 = vmand %vm1498, %vm1432
    %vm1501 = vmand %vm1499, %vm1433
    %v1502 = vlaneseq
    %v1503 = vshrl.u32 %v1502, 7
    %v1504 = vsub.s32 5, %v1503
    %v1505 = vrot.slane %v1389, %v1504
    %v1506 = vmul.f32 %v1497, %v1505
    %v1507 = vmul.f32 %v1496, %v1505
    %v1508 = vsel %vm1500, %v1506, 0.0
    %v1509 = vsel %vm1501, %v1507, 0.0
    %v1510 = vadd.f32 %v1491, %v1508
    %v1511 = vadd.f32 %v1492, %v1509
    %v1512 = vrot.slane %v1387, 3
    %v1513 = vrot.slane %v1388, 3
    %v1514 = vsel %vm1495, %v1512, %v1513
    %v1515 = vsel %vm1495, %v1513, %v1512
    %v1516 = vlaneseq
    %v1517 = vshrl.u32 %v1516, 7
    %v1518 = vsub.s32 6, %v1517
    %v1519 = vrot.slane %v1389, %v1518
    %v1520 = vmul.f32 %v1515, %v1519
    %v1521 = vmul.f32 %v1514, %v1519
    %v1522 = vsel %vm1500, %v1520, 0.0
    %v1523 = vsel %vm1501, %v1521, 0.0
    %v1524 = vadd.f32 %v1510, %v1522
    %v1525 = vadd.f32 %v1511, %v1523
    %v1526 = vrot.slane %v1385, 4
    %v1527 = vrot.slane %v1386, 4
    %vm1528 = vcmp.lt.s32.totalorder %v1394, 4
    %v1529 = vsel %vm1528, %v1526, %v1527
    %v1530 = vsel %vm1528, %v1527, %v1526
    %vm1531 = vcmp.ge.s32.totalorder %v1418, 4
    %vm1532 = vcmp.ge.s32.totalorder %v1419, 4
    %vm1533 = vmand %vm1531, %vm1432
    %vm1534 = vmand %vm1532, %vm1433
    %v1535 = vlaneseq
    %v1536 = vshrl.u32 %v1535, 7
    %v1537 = vsub.s32 7, %v1536
    %v1538 = vrot.slane %v1389, %v1537
    %v1539 = vmul.f32 %v1530, %v1538
    %v1540 = vmul.f32 %v1529, %v1538
    %v1541 = vsel %vm1533, %v1539, 0.0
    %v1542 = vsel %vm1534, %v1540, 0.0
    %v1543 = vadd.f32 %v1524, %v1541
    %v1544 = vadd.f32 %v1525, %v1542
    %v1545 = vrot.slane %v1387, 4
    %v1546 = vrot.slane %v1388, 4
    %v1547 = vsel %vm1528, %v1545, %v1546
    %v1548 = vsel %vm1528, %v1546, %v1545
    %v1549 = vlaneseq
    %v1550 = vshrl.u32 %v1549, 7
    %v1551 = vsub.s32 0, %v1550
    %v1552 = vrot.slane %v1390, %v1551
    %v1553 = vmul.f32 %v1548, %v1552
    %v1554 = vmul.f32 %v1547, %v1552
    %v1555 = vsel %vm1533, %v1553, 0.0
    %v1556 = vsel %vm1534, %v1554, 0.0
    %v1557 = vadd.f32 %v1543, %v1555
    %v1558 = vadd.f32 %v1544, %v1556
    %v1559 = vrot.slane %v1385, 5
    %v1560 = vrot.slane %v1386, 5
    %vm1561 = vcmp.lt.s32.totalorder %v1394, 3
    %v1562 = vsel %vm1561, %v1559, %v1560
    %v1563 = vsel %vm1561, %v1560, %v1559
    %vm1564 = vcmp.ge.s32.totalorder %v1418, 3
    %vm1565 = vcmp.ge.s32.totalorder %v1419, 3
    %vm1566 = vmand %vm1564, %vm1432
    %vm1567 = vmand %vm1565, %vm1433
    %v1568 = vlaneseq
    %v1569 = vshrl.u32 %v1568, 7
    %v1570 = vsub.s32 1, %v1569
    %v1571 = vrot.slane %v1390, %v1570
    %v1572 = vmul.f32 %v1563, %v1571
    %v1573 = vmul.f32 %v1562, %v1571
    %v1574 = vsel %vm1566, %v1572, 0.0
    %v1575 = vsel %vm1567, %v1573, 0.0
    %v1576 = vadd.f32 %v1557, %v1574
    %v1577 = vadd.f32 %v1558, %v1575
    %v1578 = vrot.slane %v1387, 5
    %v1579 = vrot.slane %v1388, 5
    %v1580 = vsel %vm1561, %v1578, %v1579
    %v1581 = vsel %vm1561, %v1579, %v1578
    %v1582 = vlaneseq
    %v1583 = vshrl.u32 %v1582, 7
    %v1584 = vsub.s32 2, %v1583
    %v1585 = vrot.slane %v1390, %v1584
    %v1586 = vmul.f32 %v1581, %v1585
    %v1587 = vmul.f32 %v1580, %v1585
    %v1588 = vsel %vm1566, %v1586, 0.0
    %v1589 = vsel %vm1567, %v1587, 0.0
    %v1590 = vadd.f32 %v1576, %v1588
    %v1591 = vadd.f32 %v1577, %v1589
    %v1592 = vrot.slane %v1385, 6
    %v1593 = vrot.slane %v1386, 6
    %vm1594 = vcmp.lt.s32.totalorder %v1394, 2
    %v1595 = vsel %vm1594, %v1592, %v1593
    %v1596 = vsel %vm1594, %v1593, %v1592
    %vm1597 = vcmp.ge.s32.totalorder %v1418, 2
    %vm1598 = vcmp.ge.s32.totalorder %v1419, 2
    %vm1599 = vmand %vm1597, %vm1432
    %vm1600 = vmand %vm1598, %vm1433
    %v1601 = vlaneseq
    %v1602 = vshrl.u32 %v1601, 7
    %v1603 = vsub.s32 3, %v1602
    %v1604 = vrot.slane %v1390, %v1603
    %v1605 = vmul.f32 %v1596, %v1604
    %v1606 = vmul.f32 %v1595, %v1604
    %v1607 = vsel %vm1599, %v1605, 0.0
    %v1608 = vsel %vm1600, %v1606, 0.0
    %v1609 = vadd.f32 %v1590, %v1607
    %v1610 = vadd.f32 %v1591, %v1608
    %v1611 = vrot.slane %v1387, 6
    %v1612 = vrot.slane %v1388, 6
    %v1613 = vsel %vm1594, %v1611, %v1612
    %v1614 = vsel %vm1594, %v1612, %v1611
    %v1615 = vlaneseq
    %v1616 = vshrl.u32 %v1615, 7
    %v1617 = vsub.s32 4, %v1616
    %v1618 = vrot.slane %v1390, %v1617
    %v1619 = vmul.f32 %v1614, %v1618
    %v1620 = vmul.f32 %v1613, %v1618
    %v1621 = vsel %vm1599, %v1619, 0.0
    %v1622 = vsel %vm1600, %v1620, 0.0
    %v1623 = vadd.f32 %v1609, %v1621
    %v1624 = vadd.f32 %v1610, %v1622
    %v1625 = vrot.slane %v1385, 7
    %v1626 = vrot.slane %v1386, 7
    %vm1627 = vcmp.lt.s32.totalorder %v1394, 1
    %v1628 = vsel %vm1627, %v1625, %v1626
    %v1629 = vsel %vm1627, %v1626, %v1625
    %vm1630 = vcmp.ge.s32.totalorder %v1418, 1
    %vm1631 = vcmp.ge.s32.totalorder %v1419, 1
    %vm1632 = vmand %vm1630, %vm1432
    %vm1633 = vmand %vm1631, %vm1433
    %v1634 = vlaneseq
    %v1635 = vshrl.u32 %v1634, 7
    %v1636 = vsub.s32 5, %v1635
    %v1637 = vrot.slane %v1390, %v1636
    %v1638 = vmul.f32 %v1629, %v1637
    %v1639 = vmul.f32 %v1628, %v1637
    %v1640 = vsel %vm1632, %v1638, 0.0
    %v1641 = vsel %vm1633, %v1639, 0.0
    %v1642 = vadd.f32 %v1623, %v1640
    %v1643 = vadd.f32 %v1624, %v1641
    %v1644 = vrot.slane %v1387, 7
    %v1645 = vrot.slane %v1388, 7
    %v1646 = vsel %vm1627, %v1644, %v1645
    %v1647 = vsel %vm1627, %v1645, %v1644
    %v1648 = vlaneseq
    %v1649 = vshrl.u32 %v1648, 7
    %v1650 = vsub.s32 6, %v1649
    %v1651 = vrot.slane %v1390, %v1650
    %v1652 = vmul.f32 %v1647, %v1651
    %v1653 = vmul.f32 %v1646, %v1651
    %v1654 = vsel %vm1632, %v1652, 0.0
    %v1655 = vsel %vm1633, %v1653, 0.0
    %v1656 = vadd.f32 %v1642, %v1654
    %v1657 = vadd.f32 %v1643, %v1655
    %vm1658 = vcmp.ge.s32.totalorder %v1418, 0
    %vm1659 = vcmp.ge.s32.totalorder %v1419, 0
    %vm1660 = vmand %vm1658, %vm1432
    %vm1661 = vmand %vm1659, %vm1433
    %v1662 = vlaneseq
    %v1663 = vshrl.u32 %v1662, 7
    %v1664 = vsub.s32 7, %v1663
    %v1665 = vrot.slane %v1390, %v1664
    %v1666 = vmul.f32 %v1385, %v1665
    %v1667 = vmul.f32 %v1386, %v1665
    %v1668 = vsel %vm1660, %v1666, 0.0
    %v1669 = vsel %vm1661, %v1667, 0.0
    %v1670 = vadd.f32 %v1656, %v1668
    %v1671 = vadd.f32 %v1657, %v1669
    %v1672 = vlaneseq
    %v1673 = vshrl.u32 %v1672, 7
    %v1674 = vsub.s32 0, %v1673
    %v1675 = vrot.slane %v1391, %v1674
    %v1676 = vmul.f32 %v1387, %v1675
    %v1677 = vmul.f32 %v1388, %v1675
    %v1678 = vsel %vm1660, %v1676, 0.0
    %v1679 = vsel %vm1661, %v1677, 0.0
    %v1680 = vadd.f32 %v1670, %v1678
    %v1681 = vadd.f32 %v1671, %v1679
    %vm1682 = vcmp.lt.s32.totalorder %v1418, 7
    %vm1683 = vcmp.lt.s32.totalorder %v1419, 7
    %vm1684 = vmand %vm1658, %vm1682
    %vm1685 = vmand %vm1659, %vm1683
    %v1686 = vlaneseq
    %v1687 = vshrl.u32 %v1686, 7
    %v1688 = vsub.s32 1, %v1687
    %v1689 = vrot.slane %v1391, %v1688
    %v1690 = vmul.f32 %v1428, %v1689
    %v1691 = vmul.f32 %v1429, %v1689
    %v1692 = vsel %vm1684, %v1690, 0.0
    %v1693 = vsel %vm1685, %v1691, 0.0
    %v1694 = vadd.f32 %v1680, %v1692
    %v1695 = vadd.f32 %v1681, %v1693
    %v1696 = vlaneseq
    %v1697 = vshrl.u32 %v1696, 7
    %v1698 = vsub.s32 2, %v1697
    %v1699 = vrot.slane %v1391, %v1698
    %v1700 = vmul.f32 %v1448, %v1699
    %v1701 = vmul.f32 %v1449, %v1699
    %v1702 = vsel %vm1684, %v1700, 0.0
    %v1703 = vsel %vm1685, %v1701, 0.0
    %v1704 = vadd.f32 %v1694, %v1702
    %v1705 = vadd.f32 %v1695, %v1703
    %vm1706 = vcmp.lt.s32.totalorder %v1418, 6
    %vm1707 = vcmp.lt.s32.totalorder %v1419, 6
    %vm1708 = vmand %vm1658, %vm1706
    %vm1709 = vmand %vm1659, %vm1707
    %v1710 = vlaneseq
    %v1711 = vshrl.u32 %v1710, 7
    %v1712 = vsub.s32 3, %v1711
    %v1713 = vrot.slane %v1391, %v1712
    %v1714 = vmul.f32 %v1463, %v1713
    %v1715 = vmul.f32 %v1464, %v1713
    %v1716 = vsel %vm1708, %v1714, 0.0
    %v1717 = vsel %vm1709, %v1715, 0.0
    %v1718 = vadd.f32 %v1704, %v1716
    %v1719 = vadd.f32 %v1705, %v1717
    %v1720 = vlaneseq
    %v1721 = vshrl.u32 %v1720, 7
    %v1722 = vsub.s32 4, %v1721
    %v1723 = vrot.slane %v1391, %v1722
    %v1724 = vmul.f32 %v1481, %v1723
    %v1725 = vmul.f32 %v1482, %v1723
    %v1726 = vsel %vm1708, %v1724, 0.0
    %v1727 = vsel %vm1709, %v1725, 0.0
    %v1728 = vadd.f32 %v1718, %v1726
    %v1729 = vadd.f32 %v1719, %v1727
    %vm1730 = vcmp.lt.s32.totalorder %v1418, 5
    %vm1731 = vcmp.lt.s32.totalorder %v1419, 5
    %vm1732 = vmand %vm1658, %vm1730
    %vm1733 = vmand %vm1659, %vm1731
    %v1734 = vlaneseq
    %v1735 = vshrl.u32 %v1734, 7
    %v1736 = vsub.s32 5, %v1735
    %v1737 = vrot.slane %v1391, %v1736
    %v1738 = vmul.f32 %v1496, %v1737
    %v1739 = vmul.f32 %v1497, %v1737
    %v1740 = vsel %vm1732, %v1738, 0.0
    %v1741 = vsel %vm1733, %v1739, 0.0
    %v1742 = vadd.f32 %v1728, %v1740
    %v1743 = vadd.f32 %v1729, %v1741
    %v1744 = vlaneseq
    %v1745 = vshrl.u32 %v1744, 7
    %v1746 = vsub.s32 6, %v1745
    %v1747 = vrot.slane %v1391, %v1746
    %v1748 = vmul.f32 %v1514, %v1747
    %v1749 = vmul.f32 %v1515, %v1747
    %v1750 = vsel %vm1732, %v1748, 0.0
    %v1751 = vsel %vm1733, %v1749, 0.0
    %v1752 = vadd.f32 %v1742, %v1750
    %v1753 = vadd.f32 %v1743, %v1751
    %vm1754 = vcmp.lt.s32.totalorder %v1418, 4
    %vm1755 = vcmp.lt.s32.totalorder %v1419, 4
    %vm1756 = vmand %vm1658, %vm1754
    %vm1757 = vmand %vm1659, %vm1755
    %v1758 = vlaneseq
    %v1759 = vshrl.u32 %v1758, 7
    %v1760 = vsub.s32 7, %v1759
    %v1761 = vrot.slane %v1391, %v1760
    %v1762 = vmul.f32 %v1529, %v1761
    %v1763 = vmul.f32 %v1530, %v1761
    %v1764 = vsel %vm1756, %v1762, 0.0
    %v1765 = vsel %vm1757, %v1763, 0.0
    %v1766 = vadd.f32 %v1752, %v1764
    %v1767 = vadd.f32 %v1753, %v1765
    %v1768 = vlaneseq
    %v1769 = vshrl.u32 %v1768, 7
    %v1770 = vsub.s32 0, %v1769
    %v1771 = vrot.slane %v1392, %v1770
    %v1772 = vmul.f32 %v1547, %v1771
    %v1773 = vmul.f32 %v1548, %v1771
    %v1774 = vsel %vm1756, %v1772, 0.0
    %v1775 = vsel %vm1757, %v1773, 0.0
    %v1776 = vadd.f32 %v1766, %v1774
    %v1777 = vadd.f32 %v1767, %v1775
    %vm1778 = vcmp.lt.s32.totalorder %v1418, 3
    %vm1779 = vcmp.lt.s32.totalorder %v1419, 3
    %vm1780 = vmand %vm1658, %vm1778
    %vm1781 = vmand %vm1659, %vm1779
    %v1782 = vlaneseq
    %v1783 = vshrl.u32 %v1782, 7
    %v1784 = vsub.s32 1, %v1783
    %v1785 = vrot.slane %v1392, %v1784
    %v1786 = vmul.f32 %v1562, %v1785
    %v1787 = vmul.f32 %v1563, %v1785
    %v1788 = vsel %vm1780, %v1786, 0.0
    %v1789 = vsel %vm1781, %v1787, 0.0
    %v1790 = vadd.f32 %v1776, %v1788
    %v1791 = vadd.f32 %v1777, %v1789
    %v1792 = vlaneseq
    %v1793 = vshrl.u32 %v1792, 7
    %v1794 = vsub.s32 2, %v1793
    %v1795 = vrot.slane %v1392, %v1794
    %v1796 = vmul.f32 %v1580, %v1795
    %v1797 = vmul.f32 %v1581, %v1795
    %v1798 = vsel %vm1780, %v1796, 0.0
    %v1799 = vsel %vm1781, %v1797, 0.0
    %v1800 = vadd.f32 %v1790, %v1798
    %v1801 = vadd.f32 %v1791, %v1799
    %vm1802 = vcmp.lt.s32.totalorder %v1418, 2
    %vm1803 = vcmp.lt.s32.totalorder %v1419, 2
    %vm1804 = vmand %vm1658, %vm1802
    %vm1805 = vmand %vm1659, %vm1803
    %v1806 = vlaneseq
    %v1807 = vshrl.u32 %v1806, 7
    %v1808 = vsub.s32 3, %v1807
    %v1809 = vrot.slane %v1392, %v1808
    %v1810 = vmul.f32 %v1595, %v1809
    %v1811 = vmul.f32 %v1596, %v1809
    %v1812 = vsel %vm1804, %v1810, 0.0
    %v1813 = vsel %vm1805, %v1811, 0.0
    %v1814 = vadd.f32 %v1800, %v1812
    %v1815 = vadd.f32 %v1801, %v1813
    %v1816 = vlaneseq
    %v1817 = vshrl.u32 %v1816, 7
    %v1818 = vsub.s32 4, %v1817
    %v1819 = vrot.slane %v1392, %v1818
    %v1820 = vmul.f32 %v1613, %v1819
    %v1821 = vmul.f32 %v1614, %v1819
    %v1822 = vsel %vm1804, %v1820, 0.0
    %v1823 = vsel %vm1805, %v1821, 0.0
    %v1824 = vadd.f32 %v1814, %v1822
    %v1825 = vadd.f32 %v1815, %v1823
    %vm1826 = vcmp.lt.s32.totalorder %v1418, 1
    %vm1827 = vcmp.lt.s32.totalorder %v1419, 1
    %vm1828 = vmand %vm1658, %vm1826
    %vm1829 = vmand %vm1659, %vm1827
    %v1830 = vlaneseq
    %v1831 = vshrl.u32 %v1830, 7
    %v1832 = vsub.s32 5, %v1831
    %v1833 = vrot.slane %v1392, %v1832
    %v1834 = vmul.f32 %v1628, %v1833
    %v1835 = vmul.f32 %v1629, %v1833
    %v1836 = vsel %vm1828, %v1834, 0.0
    %v1837 = vsel %vm1829, %v1835, 0.0
    %v1838 = vadd.f32 %v1824, %v1836
    %v1839 = vadd.f32 %v1825, %v1837
    %v1840 = vlaneseq
    %v1841 = vshrl.u32 %v1840, 7
    %v1842 = vsub.s32 6, %v1841
    %v1843 = vrot.slane %v1392, %v1842
    %v1844 = vmul.f32 %v1646, %v1843
    %v1845 = vmul.f32 %v1647, %v1843
    %v1846 = vsel %vm1828, %v1844, 0.0
    %v1847 = vsel %vm1829, %v1845, 0.0
    %v1848 = vadd.f32 %v1838, %v1846
    %v1849 = vadd.f32 %v1839, %v1847
    %v1850 = vlaneseq
    %v1851 = vshrl.u32 %v1850, 7
    %v1852 = vsub.s32 0, %v1851
    %v1853 = vrot.slane %v1389, %v1852
    %v1854 = vmul.f32 %v1429, %v1853
    %v1855 = vmul.f32 %v1428, %v1853
    %v1856 = vsel %vm1434, %v1854, 0.0
    %v1857 = vsel %vm1435, %v1855, 0.0
    %v1858 = vadd.f32 %v1424, %v1856
    %v1859 = vadd.f32 %v1424, %v1857
    %v1860 = vmul.f32 %v1449, %v1439
    %v1861 = vmul.f32 %v1448, %v1439
    %v1862 = vsel %vm1434, %v1860, 0.0
    %v1863 = vsel %vm1435, %v1861, 0.0
    %v1864 = vadd.f32 %v1858, %v1862
    %v1865 = vadd.f32 %v1859, %v1863
    %v1866 = vmul.f32 %v1464, %v1453
    %v1867 = vmul.f32 %v1463, %v1453
    %v1868 = vsel %vm1467, %v1866, 0.0
    %v1869 = vsel %vm1468, %v1867, 0.0
    %v1870 = vadd.f32 %v1864, %v1868
    %v1871 = vadd.f32 %v1865, %v1869
    %v1872 = vmul.f32 %v1482, %v1472
    %v1873 = vmul.f32 %v1481, %v1472
    %v1874 = vsel %vm1467, %v1872, 0.0
    %v1875 = vsel %vm1468, %v1873, 0.0
    %v1876 = vadd.f32 %v1870, %v1874
    %v1877 = vadd.f32 %v1871, %v1875
    %v1878 = vmul.f32 %v1497, %v1486
    %v1879 = vmul.f32 %v1496, %v1486
    %v1880 = vsel %vm1500, %v1878, 0.0
    %v1881 = vsel %vm1501, %v1879, 0.0
    %v1882 = vadd.f32 %v1876, %v1880
    %v1883 = vadd.f32 %v1877, %v1881
    %v1884 = vmul.f32 %v1515, %v1505
    %v1885 = vmul.f32 %v1514, %v1505
    %v1886 = vsel %vm1500, %v1884, 0.0
    %v1887 = vsel %vm1501, %v1885, 0.0
    %v1888 = vadd.f32 %v1882, %v1886
    %v1889 = vadd.f32 %v1883, %v1887
    %v1890 = vmul.f32 %v1530, %v1519
    %v1891 = vmul.f32 %v1529, %v1519
    %v1892 = vsel %vm1533, %v1890, 0.0
    %v1893 = vsel %vm1534, %v1891, 0.0
    %v1894 = vadd.f32 %v1888, %v1892
    %v1895 = vadd.f32 %v1889, %v1893
    %v1896 = vmul.f32 %v1548, %v1538
    %v1897 = vmul.f32 %v1547, %v1538
    %v1898 = vsel %vm1533, %v1896, 0.0
    %v1899 = vsel %vm1534, %v1897, 0.0
    %v1900 = vadd.f32 %v1894, %v1898
    %v1901 = vadd.f32 %v1895, %v1899
    %v1902 = vmul.f32 %v1563, %v1552
    %v1903 = vmul.f32 %v1562, %v1552
    %v1904 = vsel %vm1566, %v1902, 0.0
    %v1905 = vsel %vm1567, %v1903, 0.0
    %v1906 = vadd.f32 %v1900, %v1904
    %v1907 = vadd.f32 %v1901, %v1905
    %v1908 = vmul.f32 %v1581, %v1571
    %v1909 = vmul.f32 %v1580, %v1571
    %v1910 = vsel %vm1566, %v1908, 0.0
    %v1911 = vsel %vm1567, %v1909, 0.0
    %v1912 = vadd.f32 %v1906, %v1910
    %v1913 = vadd.f32 %v1907, %v1911
    %v1914 = vmul.f32 %v1596, %v1585
    %v1915 = vmul.f32 %v1595, %v1585
    %v1916 = vsel %vm1599, %v1914, 0.0
    %v1917 = vsel %vm1600, %v1915, 0.0
    %v1918 = vadd.f32 %v1912, %v1916
    %v1919 = vadd.f32 %v1913, %v1917
    %v1920 = vmul.f32 %v1614, %v1604
    %v1921 = vmul.f32 %v1613, %v1604
    %v1922 = vsel %vm1599, %v1920, 0.0
    %v1923 = vsel %vm1600, %v1921, 0.0
    %v1924 = vadd.f32 %v1918, %v1922
    %v1925 = vadd.f32 %v1919, %v1923
    %v1926 = vmul.f32 %v1629, %v1618
    %v1927 = vmul.f32 %v1628, %v1618
    %v1928 = vsel %vm1632, %v1926, 0.0
    %v1929 = vsel %vm1633, %v1927, 0.0
    %v1930 = vadd.f32 %v1924, %v1928
    %v1931 = vadd.f32 %v1925, %v1929
    %v1932 = vmul.f32 %v1647, %v1637
    %v1933 = vmul.f32 %v1646, %v1637
    %v1934 = vsel %vm1632, %v1932, 0.0
    %v1935 = vsel %vm1633, %v1933, 0.0
    %v1936 = vadd.f32 %v1930, %v1934
    %v1937 = vadd.f32 %v1931, %v1935
    %v1938 = vmul.f32 %v1385, %v1651
    %v1939 = vmul.f32 %v1386, %v1651
    %v1940 = vsel %vm1660, %v1938, 0.0
    %v1941 = vsel %vm1661, %v1939, 0.0
    %v1942 = vadd.f32 %v1936, %v1940
    %v1943 = vadd.f32 %v1937, %v1941
    %v1944 = vmul.f32 %v1387, %v1665
    %v1945 = vmul.f32 %v1388, %v1665
    %v1946 = vsel %vm1660, %v1944, 0.0
    %v1947 = vsel %vm1661, %v1945, 0.0
    %v1948 = vadd.f32 %v1942, %v1946
    %v1949 = vadd.f32 %v1943, %v1947
    %v1950 = vmul.f32 %v1428, %v1675
    %v1951 = vmul.f32 %v1429, %v1675
    %v1952 = vsel %vm1684, %v1950, 0.0
    %v1953 = vsel %vm1685, %v1951, 0.0
    %v1954 = vadd.f32 %v1948, %v1952
    %v1955 = vadd.f32 %v1949, %v1953
    %v1956 = vmul.f32 %v1448, %v1689
    %v1957 = vmul.f32 %v1449, %v1689
    %v1958 = vsel %vm1684, %v1956, 0.0
    %v1959 = vsel %vm1685, %v1957, 0.0
    %v1960 = vadd.f32 %v1954, %v1958
    %v1961 = vadd.f32 %v1955, %v1959
    %v1962 = vmul.f32 %v1463, %v1699
    %v1963 = vmul.f32 %v1464, %v1699
    %v1964 = vsel %vm1708, %v1962, 0.0
    %v1965 = vsel %vm1709, %v1963, 0.0
    %v1966 = vadd.f32 %v1960, %v1964
    %v1967 = vadd.f32 %v1961, %v1965
    %v1968 = vmul.f32 %v1481, %v1713
    %v1969 = vmul.f32 %v1482, %v1713
    %v1970 = vsel %vm1708, %v1968, 0.0
    %v1971 = vsel %vm1709, %v1969, 0.0
    %v1972 = vadd.f32 %v1966, %v1970
    %v1973 = vadd.f32 %v1967, %v1971
    %v1974 = vmul.f32 %v1496, %v1723
    %v1975 = vmul.f32 %v1497, %v1723
    %v1976 = vsel %vm1732, %v1974, 0.0
    %v1977 = vsel %vm1733, %v1975, 0.0
    %v1978 = vadd.f32 %v1972, %v1976
    %v1979 = vadd.f32 %v1973, %v1977
    %v1980 = vmul.f32 %v1514, %v1737
    %v1981 = vmul.f32 %v1515, %v1737
    %v1982 = vsel %vm1732, %v1980, 0.0
    %v1983 = vsel %vm1733, %v1981, 0.0
    %v1984 = vadd.f32 %v1978, %v1982
    %v1985 = vadd.f32 %v1979, %v1983
    %v1986 = vmul.f32 %v1529, %v1747
    %v1987 = vmul.f32 %v1530, %v1747
    %v1988 = vsel %vm1756, %v1986, 0.0
    %v1989 = vsel %vm1757, %v1987, 0.0
    %v1990 = vadd.f32 %v1984, %v1988
    %v1991 = vadd.f32 %v1985, %v1989
    %v1992 = vmul.f32 %v1547, %v1761
    %v1993 = vmul.f32 %v1548, %v1761
    %v1994 = vsel %vm1756, %v1992, 0.0
    %v1995 = vsel %vm1757, %v1993, 0.0
    %v1996 = vadd.f32 %v1990, %v1994
    %v1997 = vadd.f32 %v1991, %v1995
    %v1998 = vmul.f32 %v1562, %v1771
    %v1999 = vmul.f32 %v1563, %v1771
    %v2000 = vsel %vm1780, %v1998, 0.0
    %v2001 = vsel %vm1781, %v1999, 0.0
    %v2002 = vadd.f32 %v1996, %v2000
    %v2003 = vadd.f32 %v1997, %v2001
    %v2004 = vmul.f32 %v1580, %v1785
    %v2005 = vmul.f32 %v1581, %v1785
    %v2006 = vsel %vm1780, %v2004, 0.0
    %v2007 = vsel %vm1781, %v2005, 0.0
    %v2008 = vadd.f32 %v2002, %v2006
    %v2009 = vadd.f32 %v2003, %v2007
    %v2010 = vmul.f32 %v1595, %v1795
    %v2011 = vmul.f32 %v1596, %v1795
    %v2012 = vsel %vm1804, %v2010, 0.0
    %v2013 = vsel %vm1805, %v2011, 0.0
    %v2014 = vadd.f32 %v2008, %v2012
    %v2015 = vadd.f32 %v2009, %v2013
    %v2016 = vmul.f32 %v1613, %v1809
    %v2017 = vmul.f32 %v1614, %v1809
    %v2018 = vsel %vm1804, %v2016, 0.0
    %v2019 = vsel %vm1805, %v2017, 0.0
    %v2020 = vadd.f32 %v2014, %v2018
    %v2021 = vadd.f32 %v2015, %v2019
    %v2022 = vmul.f32 %v1628, %v1819
    %v2023 = vmul.f32 %v1629, %v1819
    %v2024 = vsel %vm1828, %v2022, 0.0
    %v2025 = vsel %vm1829, %v2023, 0.0
    %v2026 = vadd.f32 %v2020, %v2024
    %v2027 = vadd.f32 %v2021, %v2025
    %v2028 = vmul.f32 %v1646, %v1833
    %v2029 = vmul.f32 %v1647, %v1833
    %v2030 = vsel %vm1828, %v2028, 0.0
    %v2031 = vsel %vm1829, %v2029, 0.0
    %v2032 = vadd.f32 %v2026, %v2030
    %v2033 = vadd.f32 %v2027, %v2031
    %v2034 = vsel %vm89, %v1848, 0.0
    %v2035 = vsel %vm89, %v1849, 0.0
    %v2036 = vadd.f32 %v2034, %v2035
    %v2037 = vsel %vm89, %v2032, 0.0
    %v2038 = vadd.f32 %v2036, %v2037
    %v2039 = vsel %vm89, %v2033, 0.0
    %v2040 = vadd.f32 %v2038, %v2039
    %v2041 = vrot.slane %v2040, 4
    %v2042 = vadd.f32 %v2040, %v2041
    %v2043 = vrot.slane %v2042, 2
    %v2044 = vadd.f32 %v2042, %v2043
    %v2045 = vrot.slane %v2044, 1
    %v2046 = vadd.f32 %v2044, %v2045
    %v2047 = vmul.f32 %v2046, %v102
    %v2048 = vsub.f32 %v1848, %v2047
    %v2049 = vsub.f32 %v1849, %v2047
    %v2050 = vsub.f32 %v2032, %v2047
    %v2051 = vsub.f32 %v2033, %v2047
    %v2052 = vmul.f32 %v2048, %v2048
    %v2053 = vmul.f32 %v2049, %v2049
    %v2054 = vmul.f32 %v2050, %v2050
    %v2055 = vmul.f32 %v2051, %v2051
    %v2056 = vsel %vm89, %v2052, 0.0
    %v2057 = vsel %vm89, %v2053, 0.0
    %v2058 = vadd.f32 %v2056, %v2057
    %v2059 = vsel %vm89, %v2054, 0.0
    %v2060 = vadd.f32 %v2058, %v2059
    %v2061 = vsel %vm89, %v2055, 0.0
    %v2062 = vadd.f32 %v2060, %v2061
    %v2063 = vrot.slane %v2062, 4
    %v2064 = vadd.f32 %v2062, %v2063
    %v2065 = vrot.slane %v2064, 2
    %v2066 = vadd.f32 %v2064, %v2065
    %v2067 = vrot.slane %v2066, 1
    %v2068 = vadd.f32 %v2066, %v2067
    %v2069 = vmul.f32 %v2068, %v102
    %v2070 = vadd.f32 %v2069, 1e-05
    %v2071 = vrsqrt.pop %v2070
    %v2072 = vmul.f32 %v2048, %v2071
    %v2073 = vmul.f32 %v2049, %v2071
    %v2074 = vmul.f32 %v2050, %v2071
    %v2075 = vmul.f32 %v2051, %v2071
    %v2076 = vlaneseq
    %v2077 = vshrl.u32 %v2076, 7
    %v2078 = vsub.s32 3, %v2077
    %v2079 = vrot.slane %v47, %v2078
    %v2080 = vmul.f32 %v2072, %v2079
    %v2081 = vmul.f32 %v2073, %v2079
    %v2082 = vmul.f32 %v2074, %v2079
    %v2083 = vmul.f32 %v2075, %v2079
    %v2084 = vlaneseq
    %v2085 = vshrl.u32 %v2084, 7
    %v2086 = vsub.s32 4, %v2085
    %v2087 = vrot.slane %v47, %v2086
    %v2088 = vadd.f32 %v2080, %v2087
    %v2089 = vadd.f32 %v2081, %v2087
    %v2090 = vadd.f32 %v2082, %v2087
    %v2091 = vadd.f32 %v2083, %v2087
    %v2092 = vxor.u32 %v2088, 2147483648
    %v2093 = vxor.u32 %v2089, 2147483648
    %v2094 = vxor.u32 %v2090, 2147483648
    %v2095 = vxor.u32 %v2091, 2147483648
    %v2096 = vmul.f32 %v2092, 1.442695
    %v2097 = vpow.pop %v2096
    %v2098 = vmul.f32 %v2093, 1.442695
    %v2099 = vpow.pop %v2098
    %v2100 = vmul.f32 %v2094, 1.442695
    %v2101 = vpow.pop %v2100
    %v2102 = vmul.f32 %v2095, 1.442695
    %v2103 = vpow.pop %v2102
    %v2104 = vadd.f32 %v2097, 1.0
    %v2105 = vadd.f32 %v2099, 1.0
    %v2106 = vadd.f32 %v2101, 1.0
    %v2107 = vadd.f32 %v2103, 1.0
    %v2108 = vrcp.pop %v2104
    %v2109 = vmul.f32 1.0, %v2108
    %v2110 = vrcp.pop %v2105
    %v2111 = vmul.f32 1.0, %v2110
    %v2112 = vrcp.pop %v2106
    %v2113 = vmul.f32 1.0, %v2112
    %v2114 = vrcp.pop %v2107
    %v2115 = vmul.f32 1.0, %v2114
    %v2116 = vmul.f32 %v2088, %v2109
    %v2117 = vmul.f32 %v2089, %v2111
    %v2118 = vmul.f32 %v2090, %v2113
    %v2119 = vmul.f32 %v2091, %v2115
    %v2120 = vpack.c.bf16 %v2117, %v2116
    %v2121 = vpack.c.bf16 %v2119, %v2118
    %v2122 = vlaneseq
    %v2123 = vshrl.u32 %v2122, 7
    %v2124 = vsub.s32 5, %v2123
    %v2125 = vrot.slane %v47, %v2124
    %v2126 = vunpack.c.h.b16 %v50
    %v2127 = vunpack.c.h.b16 %v53
    %v2128 = vunpack.c.h.b16 %v56
    %v2129 = vunpack.c.h.b16 %v59
    %v2130 = vpack.c.b16 %v2127, %v2126
    %v2131 = vpack.c.b16 %v2129, %v2128
    %v2135 = vsel %vm89, %v2120, 0
    %v2138 = vsel %vm89, %v2121, 0
    %2140 = vmatprep.subr.bf16.mxu0 0
    %2141 = vmatpush1.bf16.msra.mxu0 %v2130
    %2142 = vmatprep.subr.bf16.mxu0 0
    %2143 = vmatpush1.bf16.msra.mxu0 %v2131
    %2144 = vmatprep.subr.bf16.mxu0 0
    %2145 = vmatpush1.bf16.msra.mxu0 0
    %2146 = vmatprep.subr.bf16.mxu0 0
    %2147 = vmatpush1.bf16.msra.mxu0 0
    %2148 = vmatprep.subr.bf16.mxu0 0
    %2149 = vmatpush1.bf16.msra.mxu0 0
    %2150 = vmatprep.subr.bf16.mxu0 0
    %2151 = vmatpush1.bf16.msra.mxu0 0
    %2152 = vmatprep.subr.bf16.mxu0 0
    %2153 = vmatpush1.bf16.msra.mxu0 0
    %2154 = vmatprep.subr.bf16.mxu0 0
    %2155 = vmatpush1.bf16.msra.mxu0 0
    %2156 = vmatprep.subr.bf16.mxu0 0
    %2157 = vmatpush1.bf16.msra.mxu0 0
    %2158 = vmatprep.subr.bf16.mxu0 0
    %2159 = vmatpush1.bf16.msra.mxu0 0
    %2160 = vmatprep.subr.bf16.mxu0 0
    %2161 = vmatpush1.bf16.msra.mxu0 0
    %2162 = vmatprep.subr.bf16.mxu0 0
    %2163 = vmatpush1.bf16.msra.mxu0 0
    %2164 = vmatprep.subr.bf16.mxu0 0
    %2165 = vmatpush1.bf16.msra.mxu0 0
    %2166 = vmatprep.subr.bf16.mxu0 0
    %2167 = vmatpush1.bf16.msra.mxu0 0
    %2168 = vmatprep.subr.bf16.mxu0 0
    %2169 = vmatpush1.bf16.msra.mxu0 0
    %2170 = vmatprep.subr.bf16.mxu0 0
    %2171 = vmatpush1.bf16.msra.mxu0 0
    %2172 = vmatprep.mubr.bf16.mxu0 0
    %2173 = vmatmul.mubr.bf16.gmra.mrb[0].mxu0 %v2135
    %v2174 = vpop.f32.mrb[0].mxu0
    %v2175 = vadd.f32 %v2125, %v2174
    %v2176 = vpop.f32.mrb[0].mxu0
    %v2177 = vpop.f32.mrb[0].mxu0
    %v2178 = vadd.f32 %v2125, %v2177
    %v2179 = vpop.f32.mrb[0].mxu0
    %2180 = vmatprep.mubr.bf16.mxu0 0
    %2181 = vmatmul.mubr.bf16.gmra.mrb[0].mxu0 %v2138
    %v2182 = vpop.f32.mrb[0].mxu0
    %v2183 = vadd.f32 %v2125, %v2182
    %v2184 = vpop.f32.mrb[0].mxu0
    %v2185 = vpop.f32.mrb[0].mxu0
    %v2186 = vadd.f32 %v2125, %v2185
    %v2187 = vpop.f32.mrb[0].mxu0
    %2188 = vdwg.mxu0
    %2191 = vrot.lane.b32.xlu0 %v2183, 32
    %v2192 = vpop.permute.xlu0 %2191
    %2193 = vrot.lane.b32.xlu0 %v2186, 32
    %v2194 = vpop.permute.xlu0 %2193
    %v2197 = vsel %vm89, %v2175, %v2192
    %v2198 = vsel %vm89, %v2178, %v2194
    %v2199 = vadd.f32 %v1194, %v2197
    %v2200 = vadd.f32 %v1195, %v2198
    %2203 = vrot.lane.b32.xlu0 %v2199, 96
    %v2204 = vpop.permute.xlu0 %2203
    %2205 = vrot.lane.b32.xlu0 %v2200, 96
    %v2206 = vpop.permute.xlu0 %2205
    %v2209 = vsel %vm89, %v2199, 0.0
    %2210 = vadd.xlane.f32.xlu0 %v2209
    %v2211 = vpop.xlane.xlu0 %2210
    %v2212 = vsel %vm89, %v2200, 0.0
    %2213 = vadd.xlane.f32.xlu0 %v2212
    %v2214 = vpop.xlane.xlu0 %2213
    %v2215 = vsel %vm89, %v2204, 0.0
    %2216 = vadd.xlane.f32.xlu0 %v2215
    %v2217 = vpop.xlane.xlu0 %2216
    %v2218 = vsel %vm89, %v2206, 0.0
    %2219 = vadd.xlane.f32.xlu0 %v2218
    %v2220 = vpop.xlane.xlu0 %2219
    %v2221 = vmul.f32 %v2211, %v102
    %v2222 = vmul.f32 %v2214, %v102
    %v2223 = vmul.f32 %v2217, %v102
    %v2224 = vmul.f32 %v2220, %v102
    %v2225 = vsub.f32 %v2199, %v2221
    %v2226 = vsub.f32 %v2200, %v2222
    %v2227 = vsub.f32 %v2204, %v2223
    %v2228 = vsub.f32 %v2206, %v2224
    %v2229 = vmul.f32 %v2225, %v2225
    %v2230 = vmul.f32 %v2226, %v2226
    %v2231 = vmul.f32 %v2227, %v2227
    %v2232 = vmul.f32 %v2228, %v2228
    %v2233 = vsel %vm89, %v2229, 0.0
    %2234 = vadd.xlane.f32.xlu0 %v2233
    %v2235 = vpop.xlane.xlu0 %2234
    %v2236 = vsel %vm89, %v2230, 0.0
    %2237 = vadd.xlane.f32.xlu0 %v2236
    %v2238 = vpop.xlane.xlu0 %2237
    %v2239 = vsel %vm89, %v2231, 0.0
    %2240 = vadd.xlane.f32.xlu0 %v2239
    %v2241 = vpop.xlane.xlu0 %2240
    %v2242 = vsel %vm89, %v2232, 0.0
    %2243 = vadd.xlane.f32.xlu0 %v2242
    %v2244 = vpop.xlane.xlu0 %2243
    %v2245 = vmul.f32 %v2235, %v102
    %v2246 = vmul.f32 %v2238, %v102
    %v2247 = vmul.f32 %v2241, %v102
    %v2248 = vmul.f32 %v2244, %v102
    %v2249 = vadd.f32 %v2245, 1e-05
    %v2250 = vadd.f32 %v2246, 1e-05
    %v2251 = vadd.f32 %v2247, 1e-05
    %v2252 = vadd.f32 %v2248, 1e-05
    %v2253 = vrsqrt.pop %v2249
    %v2254 = vrsqrt.pop %v2250
    %v2255 = vrsqrt.pop %v2251
    %v2256 = vrsqrt.pop %v2252
    %v2257 = vmul.f32 %v2225, %v2253
    %v2258 = vmul.f32 %v2226, %v2254
    %v2259 = vmul.f32 %v2227, %v2255
    %v2260 = vmul.f32 %v2228, %v2256
    %v2261 = vlaneseq
    %v2262 = vshrl.u32 %v2261, 7
    %v2263 = vsub.s32 6, %v2262
    %v2264 = vrot.slane %v47, %v2263
    %v2265 = vmul.f32 %v2257, %v2264
    %v2266 = vmul.f32 %v2258, %v2264
    %v2267 = vmul.f32 %v2259, %v2264
    %v2268 = vmul.f32 %v2260, %v2264
    %v2269 = vlaneseq
    %v2270 = vshrl.u32 %v2269, 7
    %v2271 = vsub.s32 7, %v2270
    %v2272 = vrot.slane %v47, %v2271
    %v2273 = vadd.f32 %v2265, %v2272
    %v2274 = vadd.f32 %v2266, %v2272
    %v2275 = vadd.f32 %v2267, %v2272
    %v2276 = vadd.f32 %v2268, %v2272
    %v2277 = vpack.c.bf16 %v2274, %v2273
    %v2278 = vpack.c.bf16 %v2276, %v2275
    %v2279 = vlaneseq
    %v2280 = vshrl.u32 %v2279, 7
    %v2281 = vsub.s32 0, %v2280
    %v2282 = vrot.slane %v48, %v2281
    %v2283 = vunpack.c.h.b16 %v49
    %v2284 = vunpack.c.h.b16 %v52
    %v2285 = vunpack.c.h.b16 %v55
    %v2286 = vunpack.c.h.b16 %v58
    %v2287 = vpack.c.b16 %v2284, %v2283
    %v2288 = vpack.c.b16 %v2286, %v2285
    %v2292 = vsel %vm89, %v2277, 0
    %v2295 = vsel %vm89, %v2278, 0
    %2297 = vmatprep.subr.bf16.mxu0 0
    %2298 = vmatpush1.bf16.msra.mxu0 %v2287
    %2299 = vmatprep.subr.bf16.mxu0 0
    %2300 = vmatpush1.bf16.msra.mxu0 %v2288
    %2301 = vmatprep.subr.bf16.mxu0 0
    %2302 = vmatpush1.bf16.msra.mxu0 0
    %2303 = vmatprep.subr.bf16.mxu0 0
    %2304 = vmatpush1.bf16.msra.mxu0 0
    %2305 = vmatprep.subr.bf16.mxu0 0
    %2306 = vmatpush1.bf16.msra.mxu0 0
    %2307 = vmatprep.subr.bf16.mxu0 0
    %2308 = vmatpush1.bf16.msra.mxu0 0
    %2309 = vmatprep.subr.bf16.mxu0 0
    %2310 = vmatpush1.bf16.msra.mxu0 0
    %2311 = vmatprep.subr.bf16.mxu0 0
    %2312 = vmatpush1.bf16.msra.mxu0 0
    %2313 = vmatprep.subr.bf16.mxu0 0
    %2314 = vmatpush1.bf16.msra.mxu0 0
    %2315 = vmatprep.subr.bf16.mxu0 0
    %2316 = vmatpush1.bf16.msra.mxu0 0
    %2317 = vmatprep.subr.bf16.mxu0 0
    %2318 = vmatpush1.bf16.msra.mxu0 0
    %2319 = vmatprep.subr.bf16.mxu0 0
    %2320 = vmatpush1.bf16.msra.mxu0 0
    %2321 = vmatprep.subr.bf16.mxu0 0
    %2322 = vmatpush1.bf16.msra.mxu0 0
    %2323 = vmatprep.subr.bf16.mxu0 0
    %2324 = vmatpush1.bf16.msra.mxu0 0
    %2325 = vmatprep.subr.bf16.mxu0 0
    %2326 = vmatpush1.bf16.msra.mxu0 0
    %2327 = vmatprep.subr.bf16.mxu0 0
    %2328 = vmatpush1.bf16.msra.mxu0 0
    %2329 = vmatprep.mubr.bf16.mxu0 0
    %2330 = vmatmul.mubr.bf16.gmra.mrb[0].mxu0 %v2292
    %v2331 = vpop.f32.mrb[0].mxu0
    %v2332 = vadd.f32 %v2282, %v2331
    %v2333 = vpop.f32.mrb[0].mxu0
    %v2334 = vpop.f32.mrb[0].mxu0
    %v2335 = vadd.f32 %v2282, %v2334
    %v2336 = vpop.f32.mrb[0].mxu0
    %2337 = vmatprep.mubr.bf16.mxu0 0
    %2338 = vmatmul.mubr.bf16.gmra.mrb[0].mxu0 %v2295
    %v2339 = vpop.f32.mrb[0].mxu0
    %v2340 = vadd.f32 %v2282, %v2339
    %v2341 = vpop.f32.mrb[0].mxu0
    %v2342 = vpop.f32.mrb[0].mxu0
    %v2343 = vadd.f32 %v2282, %v2342
    %v2344 = vpop.f32.mrb[0].mxu0
    %2345 = vdwg.mxu0
    %v2346 = vxor.u32 %v2332, 2147483648
    %v2347 = vxor.u32 %v2335, 2147483648
    %v2348 = vxor.u32 %v2340, 2147483648
    %v2349 = vxor.u32 %v2343, 2147483648
    %v2350 = vmul.f32 %v2346, 1.442695
    %v2351 = vpow.pop %v2350
    %v2352 = vmul.f32 %v2347, 1.442695
    %v2353 = vpow.pop %v2352
    %v2354 = vmul.f32 %v2348, 1.442695
    %v2355 = vpow.pop %v2354
    %v2356 = vmul.f32 %v2349, 1.442695
    %v2357 = vpow.pop %v2356
    %v2358 = vadd.f32 %v2351, 1.0
    %v2359 = vadd.f32 %v2353, 1.0
    %v2360 = vadd.f32 %v2355, 1.0
    %v2361 = vadd.f32 %v2357, 1.0
    %v2362 = vrcp.pop %v2358
    %v2363 = vmul.f32 1.0, %v2362
    %v2364 = vrcp.pop %v2359
    %v2365 = vmul.f32 1.0, %v2364
    %v2366 = vrcp.pop %v2360
    %v2367 = vmul.f32 1.0, %v2366
    %v2368 = vrcp.pop %v2361
    %v2369 = vmul.f32 1.0, %v2368
    %v2370 = vmul.f32 %v2332, %v2363
    %v2371 = vmul.f32 %v2335, %v2365
    %v2372 = vmul.f32 %v2340, %v2367
    %v2373 = vmul.f32 %v2343, %v2369
    %v2374 = vpack.c.bf16 %v2371, %v2370
    %v2375 = vpack.c.bf16 %v2373, %v2372
    %v2376 = vlaneseq
    %v2377 = vshrl.u32 %v2376, 7
    %v2378 = vsub.s32 1, %v2377
    %v2379 = vrot.slane %v48, %v2378
    %v2380 = vunpack.c.h.b16 %v61
    %v2381 = vunpack.c.h.b16 %v62
    %v2382 = vunpack.c.h.b16 %v63
    %v2383 = vunpack.c.h.b16 %v64
    %v2384 = vunpack.c.h.b16 %v65
    %v2385 = vunpack.c.h.b16 %v66
    %v2386 = vunpack.c.h.b16 %v67
    %v2387 = vunpack.c.h.b16 %v68
    %v2388 = vunpack.c.h.b16 %v69
    %v2389 = vunpack.c.h.b16 %v70
    %v2390 = vunpack.c.h.b16 %v71
    %v2391 = vunpack.c.h.b16 %v72
    %v2392 = vunpack.c.h.b16 %v73
    %v2393 = vunpack.c.h.b16 %v74
    %v2394 = vunpack.c.h.b16 %v75
    %v2395 = vunpack.c.h.b16 %v76
    %v2396 = vpack.c.b16 %v2381, %v2380
    %v2397 = vpack.c.b16 %v2383, %v2382
    %v2398 = vpack.c.b16 %v2385, %v2384
    %v2399 = vpack.c.b16 %v2387, %v2386
    %v2400 = vpack.c.b16 %v2389, %v2388
    %v2401 = vpack.c.b16 %v2391, %v2390
    %v2402 = vpack.c.b16 %v2393, %v2392
    %v2403 = vpack.c.b16 %v2395, %v2394
    %2412 = vmatprep.subr.bf16.mxu0 0
    %2413 = vmatpush1.bf16.msra.mxu0 %v2396
    %2414 = vmatprep.subr.bf16.mxu0 0
    %2415 = vmatpush1.bf16.msra.mxu0 %v2397
    %2416 = vmatprep.subr.bf16.mxu0 0
    %2417 = vmatpush1.bf16.msra.mxu0 %v2398
    %2418 = vmatprep.subr.bf16.mxu0 0
    %2419 = vmatpush1.bf16.msra.mxu0 %v2399
    %2420 = vmatprep.subr.bf16.mxu0 0
    %2421 = vmatpush1.bf16.msra.mxu0 %v2400
    %2422 = vmatprep.subr.bf16.mxu0 0
    %2423 = vmatpush1.bf16.msra.mxu0 %v2401
    %2424 = vmatprep.subr.bf16.mxu0 0
    %2425 = vmatpush1.bf16.msra.mxu0 %v2402
    %2426 = vmatprep.subr.bf16.mxu0 0
    %2427 = vmatpush1.bf16.msra.mxu0 %v2403
    %2428 = vmatprep.subr.bf16.mxu0 0
    %2429 = vmatpush1.bf16.msra.mxu0 0
    %2430 = vmatprep.subr.bf16.mxu0 0
    %2431 = vmatpush1.bf16.msra.mxu0 0
    %2432 = vmatprep.subr.bf16.mxu0 0
    %2433 = vmatpush1.bf16.msra.mxu0 0
    %2434 = vmatprep.subr.bf16.mxu0 0
    %2435 = vmatpush1.bf16.msra.mxu0 0
    %2436 = vmatprep.subr.bf16.mxu0 0
    %2437 = vmatpush1.bf16.msra.mxu0 0
    %2438 = vmatprep.subr.bf16.mxu0 0
    %2439 = vmatpush1.bf16.msra.mxu0 0
    %2440 = vmatprep.subr.bf16.mxu0 0
    %2441 = vmatpush1.bf16.msra.mxu0 0
    %2442 = vmatprep.subr.bf16.mxu0 0
    %2443 = vmatpush1.bf16.msra.mxu0 0
    %2444 = vmatprep.mubr.bf16.mxu0 0
    %2445 = vmatmul.mubr.bf16.gmra.mrb[0].mxu0 %v2374
    %v2446 = vpop.f32.mrb[0].mxu0
    %v2447 = vadd.f32 %v2379, %v2446
    %v2448 = vpop.f32.mrb[0].mxu0
    %v2449 = vpop.f32.mrb[0].mxu0
    %v2450 = vadd.f32 %v2379, %v2449
    %v2451 = vpop.f32.mrb[0].mxu0
    %2452 = vmatprep.mubr.bf16.mxu0 0
    %2453 = vmatmul.mubr.bf16.gmra.mrb[0].mxu0 %v2375
    %v2454 = vpop.f32.mrb[0].mxu0
    %v2455 = vadd.f32 %v2379, %v2454
    %v2456 = vpop.f32.mrb[0].mxu0
    %v2457 = vpop.f32.mrb[0].mxu0
    %v2458 = vadd.f32 %v2379, %v2457
    %v2459 = vpop.f32.mrb[0].mxu0
    %2460 = vdwg.mxu0
    %v2461 = vmul.f32 %v2447, 0.5
    %v2462 = vmul.f32 %v2450, 0.5
    %v2463 = vmul.f32 %v2455, 0.5
    %v2464 = vmul.f32 %v2458, 0.5
    %v2465 = vadd.f32 %v2461, %v2199
    %v2466 = vadd.f32 %v2462, %v2200
    %v2467 = vadd.f32 %v2463, %v2204
    %v2468 = vadd.f32 %v2464, %v2206
    %v2469 = vsel %vm89, %v2465, 0.0
    %2470 = vadd.xlane.f32.xlu0 %v2469
    %v2471 = vpop.xlane.xlu0 %2470
    %v2472 = vsel %vm89, %v2466, 0.0
    %2473 = vadd.xlane.f32.xlu0 %v2472
    %v2474 = vpop.xlane.xlu0 %2473
    %v2475 = vsel %vm89, %v2467, 0.0
    %2476 = vadd.xlane.f32.xlu0 %v2475
    %v2477 = vpop.xlane.xlu0 %2476
    %v2478 = vsel %vm89, %v2468, 0.0
    %2479 = vadd.xlane.f32.xlu0 %v2478
    %v2480 = vpop.xlane.xlu0 %2479
    %v2481 = vmul.f32 %v2471, %v102
    %v2482 = vmul.f32 %v2474, %v102
    %v2483 = vmul.f32 %v2477, %v102
    %v2484 = vmul.f32 %v2480, %v102
    %v2485 = vsub.f32 %v2465, %v2481
    %v2486 = vsub.f32 %v2466, %v2482
    %v2487 = vsub.f32 %v2467, %v2483
    %v2488 = vsub.f32 %v2468, %v2484
    %v2489 = vmul.f32 %v2485, %v2485
    %v2490 = vmul.f32 %v2486, %v2486
    %v2491 = vmul.f32 %v2487, %v2487
    %v2492 = vmul.f32 %v2488, %v2488
    %v2493 = vsel %vm89, %v2489, 0.0
    %2494 = vadd.xlane.f32.xlu0 %v2493
    %v2495 = vpop.xlane.xlu0 %2494
    %v2496 = vsel %vm89, %v2490, 0.0
    %2497 = vadd.xlane.f32.xlu0 %v2496
    %v2498 = vpop.xlane.xlu0 %2497
    %v2499 = vsel %vm89, %v2491, 0.0
    %2500 = vadd.xlane.f32.xlu0 %v2499
    %v2501 = vpop.xlane.xlu0 %2500
    %v2502 = vsel %vm89, %v2492, 0.0
    %2503 = vadd.xlane.f32.xlu0 %v2502
    %v2504 = vpop.xlane.xlu0 %2503
    %v2505 = vmul.f32 %v2495, %v102
    %v2506 = vmul.f32 %v2498, %v102
    %v2507 = vmul.f32 %v2501, %v102
    %v2508 = vmul.f32 %v2504, %v102
    %v2509 = vadd.f32 %v2505, 1e-05
    %v2510 = vadd.f32 %v2506, 1e-05
    %v2511 = vadd.f32 %v2507, 1e-05
    %v2512 = vadd.f32 %v2508, 1e-05
    %v2513 = vrsqrt.pop %v2509
    %v2514 = vrsqrt.pop %v2510
    %v2515 = vrsqrt.pop %v2511
    %v2516 = vrsqrt.pop %v2512
    %v2517 = vmul.f32 %v2485, %v2513
    %v2518 = vmul.f32 %v2486, %v2514
    %v2519 = vmul.f32 %v2487, %v2515
    %v2520 = vmul.f32 %v2488, %v2516
    %v2521 = vlaneseq
    %v2522 = vshrl.u32 %v2521, 7
    %v2523 = vsub.s32 2, %v2522
    %v2524 = vrot.slane %v48, %v2523
    %v2525 = vmul.f32 %v2517, %v2524
    %v2526 = vmul.f32 %v2518, %v2524
    %v2527 = vmul.f32 %v2519, %v2524
    %v2528 = vmul.f32 %v2520, %v2524
    %v2529 = vlaneseq
    %v2530 = vshrl.u32 %v2529, 7
    %v2531 = vsub.s32 3, %v2530
    %v2532 = vrot.slane %v48, %v2531
    %v2533 = vadd.f32 %v2525, %v2532
    %v2534 = vadd.f32 %v2526, %v2532
    %v2535 = vadd.f32 %v2527, %v2532
    %v2536 = vadd.f32 %v2528, %v2532
    %2539 = vrot.lane.b32.xlu0 %v2535, 32
    %v2540 = vpop.permute.xlu0 %2539
    %2541 = vrot.lane.b32.xlu0 %v2536, 32
    %v2542 = vpop.permute.xlu0 %2541
    %v2545 = vsel %vm89, %v2533, %v2540
    %v2546 = vsel %vm89, %v2534, %v2542
    %2547 = vst.msk [vmem:[%s9] sm:$0xff] %vm381, %v2545
    %2548 = vst.msk [vmem:[%s9 + $0x8] sm:$0xff] %vm381, %v2546
    // Predicated region
    $region42: #{grouped_conformer_block.1} parent=1 // pred_check
      _
    $region43: #{grouped_conformer_block.1} parent=1 // pred_check_branch
      %2550 = sbr.rel (0) target = $region45
    $region44: #{grouped_conformer_block.1} parent=1 // pred_region
      _
    $region45: #{grouped_conformer_block.1} parent=1 // pred_fallthru
      _
    // Predicated region
    $region46: #{grouped_conformer_block.1} parent=1 // pred_check
      _
    $region47: #{grouped_conformer_block.1} parent=1 // pred_check_branch
      %2552 = sbr.rel (0) target = $region49
    $region48: #{grouped_conformer_block.1} parent=1 // pred_region
      _
    $region49: #{grouped_conformer_block.1} parent=1 // pred_fallthru
      _
    %2553 = vsyncpa [#allocation3], 1

</llo_original>
